<compile_context>
chip_gen: v7x
topology: tpu7x:2x2x1
jax: 0.10.0
libtpu: 0.0.40
codegen_flags: <defaults>
</compile_context>

<pallas_src>
import functools

import jax
import jax.numpy as jnp
from jax.experimental import pallas as pl
from jax.experimental.pallas import tpu as pltpu


def _round_up(v, m):
    return (v + m - 1) // m * m


def _pad_gate_cols(a, h, hp):
    """Pad the trailing 4*h gate axis to 4*hp, gate-blockwise (i|f|g|o)."""
    if hp == h:
        return a
    lead = a.shape[:-1]
    a4 = a.reshape(lead + (4, h))
    a4 = jnp.pad(a4, [(0, 0)] * len(lead) + [(0, 0), (0, hp - h)])
    return a4.reshape(lead + (4 * hp,))


def _lstm_recur_kernel(xw_ref, u_ref, h0_ref, c0_ref, out_ref, h_sc, c_sc, *,
                       hidden, chunk):
    """One grid step == `chunk` LSTM time steps of one batch tile.

    Blocks are batch-major: xw_ref is (Bt, Tc, 4H) bf16, out_ref is
    (Bt, Tc, H).  The chunk loop is a static Python loop so every per-step
    VMEM access uses static, lane-dense 128-wide views.
    """
    # (Re)load the f32 carry at the first time chunk of every batch tile.
    @pl.when(pl.program_id(1) == 0)
    def _():
        h_sc[...] = h0_ref[...].astype(jnp.float32)
        c_sc[...] = c0_ref[...].astype(jnp.float32)

    H = hidden
    u = u_ref[...]                                   # (H, 4H) bf16, invariant

    def _sigmoid(z):
        # sigmoid(z) == 0.5 * (tanh(0.5 z) + 1): keeps every nonlinearity on
        # the single-EUP tanh path (cheaper than exp + divide).
        return 0.5 * (jnp.tanh(0.5 * z) + 1.0)

    h = h_sc[...]
    c = c_sc[...]
    # Static unroll (chunk <= 8 by default per the review's unroll cap).  For
    # very long sequences raise time_chunk and add an outer dynamic loop.
    for t in range(chunk):
        # x@W + b was precomputed outside; only the small recurrent matmul
        # (bf16 operands, f32 accumulation) sits on the serial path.
        x_t = xw_ref[:, t, :].astype(jnp.float32)    # (Bt, 4H)
        gates = x_t + jnp.dot(h.astype(jnp.bfloat16), u,
                              preferred_element_type=jnp.float32)
        i_g = _sigmoid(gates[:, 0 * H:1 * H])
        f_g = _sigmoid(gates[:, 1 * H:2 * H])
        g_g = jnp.tanh(gates[:, 2 * H:3 * H])
        o_g = _sigmoid(gates[:, 3 * H:4 * H])
        c = f_g * c + i_g * g_g
        h = o_g * jnp.tanh(c)
        out_ref[:, t, :] = h.astype(out_ref.dtype)   # lane-dense 128-wide store

    h_sc[...] = h
    c_sc[...] = c


def encoder_forward(x, seq_length, W, U, b, h0, c0, *, time_chunk=8):
    """Pallas implementation of Encoder.forward.

    Args:
      x:  [B, T_total, D]   (PyTorch layout: batch, time, feature)
      seq_length: static int (num_for_predict); only first seq_length steps used.
      W: [D, 4H], U: [H, 4H], b: [1, 4H]   (gate order i, f, g, o)
      h0, c0: [B, H] initial hidden / cell states.

    Returns:
      outputs: [B, seq_length, H]
      hiddens: [B, 1, seq_length, H]
    """
    B, _, D = x.shape
    H = h0.shape[1]
    out_dtype = x.dtype

    T = int(seq_length)
    Tc = min(time_chunk, T)
    n_tc = pl.cdiv(T, Tc)
    T_pad = n_tc * Tc

    # Lane/sublane-dense padding: H -> multiple of 128, B -> multiple of 8.
    # Padded gate columns get zero weight/bias, padded h/c rows start at zero,
    # so real lanes/rows are unaffected; padding is stripped at the end.
    Hp = _round_up(H, 128)
    Bp = _round_up(B, 8)
    Bt = min(Bp, 8)                      # batch tile (megacore-parallel axis)
    n_bt = Bp // Bt

    # ---- hoisted, time-parallel input projection (one big MXU matmul) ----
    # bf16 operands, f32 accumulation; output stays batch-major ('btg') so no
    # wrapper transpose / extra HBM round trip is generated.
    x_b = x[:, :T, :].astype(jnp.bfloat16)
    W_p = _pad_gate_cols(W, H, Hp).astype(jnp.bfloat16)
    b_p = _pad_gate_cols(b.astype(jnp.float32), H, Hp)
    xw = jnp.einsum('btd,dg->btg', x_b, W_p,
                    preferred_element_type=jnp.float32) + b_p    # (B, T, 4Hp)
    # Store the streamed intermediate in bf16: halves HBM traffic + VMEM bufs.
    xw = xw.astype(jnp.bfloat16)
    xw = jnp.pad(xw, ((0, Bp - B), (0, T_pad - T), (0, 0)))

    U_p = _pad_gate_cols(U, H, Hp)
    U_p = jnp.pad(U_p, ((0, Hp - H), (0, 0))).astype(jnp.bfloat16)  # (Hp, 4Hp)
    h0_p = jnp.pad(h0.astype(jnp.float32), ((0, Bp - B), (0, Hp - H)))
    c0_p = jnp.pad(c0.astype(jnp.float32), ((0, Bp - B), (0, Hp - H)))

    kernel = functools.partial(_lstm_recur_kernel, hidden=Hp, chunk=Tc)

    out_p = pl.pallas_call(
        kernel,
        out_shape=jax.ShapeDtypeStruct((Bp, T_pad, Hp), out_dtype),
        grid_spec=pltpu.PrefetchScalarGridSpec(
            num_scalar_prefetch=0,
            grid=(n_bt, n_tc),
            in_specs=[
                pl.BlockSpec((Bt, Tc, 4 * Hp), lambda bi, ti: (bi, ti, 0)),  # xW+b
                pl.BlockSpec((Hp, 4 * Hp), lambda bi, ti: (0, 0)),           # U
                pl.BlockSpec((Bt, Hp), lambda bi, ti: (bi, 0)),              # h0
                pl.BlockSpec((Bt, Hp), lambda bi, ti: (bi, 0)),              # c0
            ],
            out_specs=pl.BlockSpec((Bt, Tc, Hp), lambda bi, ti: (bi, ti, 0)),
            scratch_shapes=[
                pltpu.VMEM((Bt, Hp), jnp.float32),   # hidden carry
                pltpu.VMEM((Bt, Hp), jnp.float32),   # cell carry
            ],
        ),
        compiler_params=pltpu.CompilerParams(
            # batch tiles independent (shardable across v7x cores), time is
            # the serial carry axis.
            dimension_semantics=("parallel", "arbitrary")),
    )(xw, U_p, h0_p, c0_p)

    outputs = out_p[:B, :T, :H]                      # no transpose needed
    # hiddens is an exact duplicate of outputs (single LSTM layer, cur_out == h).
    hiddens = outputs[:, None, :, :]                 # [B, 1, T, H]
    return outputs, hiddens


def _reference_forward(x, seq_length, W, U, b, h0, c0):
    """Pure-JAX reference with the same numerics as the kernel path
    (bf16 MXU operands, f32 accumulation, bf16-stored x-projection)."""
    H = h0.shape[1]
    T = int(seq_length)
    xw = jnp.einsum('btd,dg->btg', x[:, :T].astype(jnp.bfloat16),
                    W.astype(jnp.bfloat16),
                    preferred_element_type=jnp.float32) + b.astype(jnp.float32)
    xw = xw.astype(jnp.bfloat16)
    Ub = U.astype(jnp.bfloat16)

    def step(carry, xw_t):
        h, c = carry
        gates = xw_t.astype(jnp.float32) + jnp.dot(
            h.astype(jnp.bfloat16), Ub, preferred_element_type=jnp.float32)
        i_g = jax.nn.sigmoid(gates[:, 0 * H:1 * H])
        f_g = jax.nn.sigmoid(gates[:, 1 * H:2 * H])
        g_g = jnp.tanh(gates[:, 2 * H:3 * H])
        o_g = jax.nn.sigmoid(gates[:, 3 * H:4 * H])
        c_new = f_g * c + i_g * g_g
        h_new = o_g * jnp.tanh(c_new)
        return (h_new, c_new), h_new

    xs = jnp.transpose(xw, (1, 0, 2))
    _, hs = jax.lax.scan(step, (h0.astype(jnp.float32),
                                c0.astype(jnp.float32)), xs)
    outputs = jnp.transpose(hs, (1, 0, 2)).astype(x.dtype)
    hiddens = outputs[:, None, :, :]
    return outputs, hiddens


if __name__ == "__main__":
    # Shapes implied by the module: in_channels = hidden_size; x: [B, num_pred*3, hidden]
    batch = 2
    hidden = 32          # hidden_size == in_channels
    num_pred = 8         # seq_length / num_for_predict
    dtype = jnp.float32

    key = jax.random.PRNGKey(0)
    k_x, k_w, k_u, k_b, k_h, k_c = jax.random.split(key, 6)

    x = jax.random.normal(k_x, (batch, num_pred * 3, hidden), dtype=dtype)

    # Deterministic LSTM-cell parameters (gate order: i, f, g, o).
    scale = 1.0 / jnp.sqrt(jnp.asarray(hidden, dtype))
    W = jax.random.normal(k_w, (hidden, 4 * hidden), dtype=dtype) * scale
    U = jax.random.normal(k_u, (hidden, 4 * hidden), dtype=dtype) * scale
    b = jax.random.normal(k_b, (1, 4 * hidden), dtype=dtype) * scale

    # initHidden: randn * sqrt(2 / hidden_size)
    std = jnp.sqrt(jnp.asarray(2.0 / hidden, dtype))
    h0 = jax.random.normal(k_h, (batch, hidden), dtype=dtype) * std
    c0 = jax.random.normal(k_c, (batch, hidden), dtype=dtype) * std

    outputs, hiddens = encoder_forward(x, num_pred, W, U, b, h0, c0)
    outputs = jax.block_until_ready(outputs)
    hiddens = jax.block_until_ready(hiddens)

    assert outputs.shape == (batch, num_pred, hidden)
    assert hiddens.shape == (batch, 1, num_pred, hidden)

    ref_out, ref_hid = _reference_forward(x, num_pred, W, U, b, h0, c0)
    # Tolerance reflects bf16 MXU operands (matched in the reference); the
    # remaining difference is only transcendental-impl / accumulation-order.
    assert jnp.allclose(outputs, ref_out, atol=2e-3, rtol=2e-3)
    assert jnp.allclose(hiddens, ref_hid, atol=2e-3, rtol=2e-3)

    print("KERNEL_OK")
</pallas_src>

<mosaic_0001>
module attributes {stable_mosaic.version = 11 : i64} {
  func.func @_lstm_recur_kernel(%arg0: i32, %arg1: i32, %arg2: memref<8x8x512xbf16, #tpu.memory_space<vmem>>, %arg3: memref<128x512xbf16, #tpu.memory_space<vmem>>, %arg4: memref<8x128xf32, #tpu.memory_space<vmem>>, %arg5: memref<8x128xf32, #tpu.memory_space<vmem>>, %arg6: memref<8x8x128xf32, #tpu.memory_space<vmem>>, %arg7: memref<8x128xf32, #tpu.memory_space<vmem>>, %arg8: memref<8x128xf32, #tpu.memory_space<vmem>>) attributes {dimension_semantics = [#tpu.dimension_semantics<parallel>, #tpu.dimension_semantics<arbitrary>], iteration_bounds = array<i64: 1, 1>, scalar_prefetch = 0 : i64, scratch_operands = 2 : i64, tpu.core_type = #tpu.core_type<tc>, window_params = [{transform_indices = @transform_0, window_bounds = array<i64: 8, 8, 512>}, {pipeline_mode = #tpu.pipeline_mode<synchronous>, transform_indices = @transform_1, window_bounds = array<i64: 128, 512>}, {transform_indices = @transform_2, window_bounds = array<i64: 8, 128>}, {transform_indices = @transform_3, window_bounds = array<i64: 8, 128>}, {transform_indices = @transform_4, window_bounds = array<i64: 8, 8, 128>}]} {
    %c0_i32 = arith.constant 0 : i32
    %0 = arith.cmpi eq, %arg1, %c0_i32 : i32
    %1 = arith.extui %0 : i1 to i32
    %c0_i32_0 = arith.constant 0 : i32
    %2 = arith.cmpi ne, %1, %c0_i32_0 : i32
    scf.if %2 {
      %c0_130 = arith.constant 0 : index
      %c0_131 = arith.constant 0 : index
      %328 = vector.load %arg4[%c0_130, %c0_131] : memref<8x128xf32, #tpu.memory_space<vmem>>, vector<8x128xf32>
      %c0_132 = arith.constant 0 : index
      %c0_133 = arith.constant 0 : index
      %329 = vector.load %arg7[%c0_132, %c0_133] : memref<8x128xf32, #tpu.memory_space<vmem>>, vector<8x128xf32>
      tpu.vector_store %arg7[%c0_132, %c0_133], %328 {strides = array<i32>} : memref<8x128xf32, #tpu.memory_space<vmem>>, vector<8x128xf32>,
      %c0_134 = arith.constant 0 : index
      %c0_135 = arith.constant 0 : index
      %330 = vector.load %arg5[%c0_134, %c0_135] : memref<8x128xf32, #tpu.memory_space<vmem>>, vector<8x128xf32>
      %c0_136 = arith.constant 0 : index
      %c0_137 = arith.constant 0 : index
      %331 = vector.load %arg8[%c0_136, %c0_137] : memref<8x128xf32, #tpu.memory_space<vmem>>, vector<8x128xf32>
      tpu.vector_store %arg8[%c0_136, %c0_137], %330 {strides = array<i32>} : memref<8x128xf32, #tpu.memory_space<vmem>>, vector<8x128xf32>,
    } else {
    }
    %c0 = arith.constant 0 : index
    %c0_1 = arith.constant 0 : index
    %3 = vector.load %arg3[%c0, %c0_1] : memref<128x512xbf16, #tpu.memory_space<vmem>>, vector<128x512xbf16>
    %c0_2 = arith.constant 0 : index
    %c0_3 = arith.constant 0 : index
    %4 = vector.load %arg7[%c0_2, %c0_3] : memref<8x128xf32, #tpu.memory_space<vmem>>, vector<8x128xf32>
    %c0_4 = arith.constant 0 : index
    %c0_5 = arith.constant 0 : index
    %5 = vector.load %arg8[%c0_4, %c0_5] : memref<8x128xf32, #tpu.memory_space<vmem>>, vector<8x128xf32>
    %c0_6 = arith.constant 0 : index
    %c0_7 = arith.constant 0 : index
    %c0_8 = arith.constant 0 : index
    %6 = vector.load %arg2[%c0_6, %c0_7, %c0_8] : memref<8x8x512xbf16, #tpu.memory_space<vmem>>, vector<8x1x512xbf16>
    %7 = vector.shape_cast %6 : vector<8x1x512xbf16> to vector<8x512xbf16>
    %8 = arith.extf %7 : vector<8x512xbf16> to vector<8x512xf32>
    %9 = arith.truncf %4 : vector<8x128xf32> to vector<8x128xbf16>
    %cst = arith.constant dense<0.000000e+00> : vector<8x512xf32>
    %10 = tpu.matmul %9, %3, %cst {dimension_numbers = #tpu.dot_dimension_numbers<[1], [0], [0], [1], [0, 0, 1, 1], [], []>} : vector<8x128xbf16>, vector<128x512xbf16>, vector<8x512xf32> -> vector<8x512xf32>
    %11 = arith.addf %8, %10 : vector<8x512xf32>
    %12 = vector.extract_strided_slice %11 {offsets = [0, 0], sizes = [8, 128], strides = [1, 1]} : vector<8x512xf32> to vector<8x128xf32>
    %cst_9 = arith.constant 5.000000e-01 : f32
    %13 = vector.broadcast %cst_9 : f32 to vector<8x128xf32>
    %14 = arith.mulf %13, %12 : vector<8x128xf32>
    %15 = math.tanh %14 : vector<8x128xf32>
    %cst_10 = arith.constant 1.000000e+00 : f32
    %16 = vector.broadcast %cst_10 : f32 to vector<8x128xf32>
    %17 = arith.addf %15, %16 : vector<8x128xf32>
    %cst_11 = arith.constant 5.000000e-01 : f32
    %18 = vector.broadcast %cst_11 : f32 to vector<8x128xf32>
    %19 = arith.mulf %18, %17 : vector<8x128xf32>
    %20 = vector.extract_strided_slice %11 {offsets = [0, 128], sizes = [8, 128], strides = [1, 1]} : vector<8x512xf32> to vector<8x128xf32>
    %cst_12 = arith.constant 5.000000e-01 : f32
    %21 = vector.broadcast %cst_12 : f32 to vector<8x128xf32>
    %22 = arith.mulf %21, %20 : vector<8x128xf32>
    %23 = math.tanh %22 : vector<8x128xf32>
    %cst_13 = arith.constant 1.000000e+00 : f32
    %24 = vector.broadcast %cst_13 : f32 to vector<8x128xf32>
    %25 = arith.addf %23, %24 : vector<8x128xf32>
    %cst_14 = arith.constant 5.000000e-01 : f32
    %26 = vector.broadcast %cst_14 : f32 to vector<8x128xf32>
    %27 = arith.mulf %26, %25 : vector<8x128xf32>
    %28 = vector.extract_strided_slice %11 {offsets = [0, 256], sizes = [8, 128], strides = [1, 1]} : vector<8x512xf32> to vector<8x128xf32>
    %29 = math.tanh %28 : vector<8x128xf32>
    %30 = vector.extract_strided_slice %11 {offsets = [0, 384], sizes = [8, 128], strides = [1, 1]} : vector<8x512xf32> to vector<8x128xf32>
    %cst_15 = arith.constant 5.000000e-01 : f32
    %31 = vector.broadcast %cst_15 : f32 to vector<8x128xf32>
    %32 = arith.mulf %31, %30 : vector<8x128xf32>
    %33 = math.tanh %32 : vector<8x128xf32>
    %cst_16 = arith.constant 1.000000e+00 : f32
    %34 = vector.broadcast %cst_16 : f32 to vector<8x128xf32>
    %35 = arith.addf %33, %34 : vector<8x128xf32>
    %cst_17 = arith.constant 5.000000e-01 : f32
    %36 = vector.broadcast %cst_17 : f32 to vector<8x128xf32>
    %37 = arith.mulf %36, %35 : vector<8x128xf32>
    %38 = arith.mulf %27, %5 : vector<8x128xf32>
    %39 = arith.mulf %19, %29 : vector<8x128xf32>
    %40 = arith.addf %38, %39 : vector<8x128xf32>
    %41 = math.tanh %40 : vector<8x128xf32>
    %42 = arith.mulf %37, %41 : vector<8x128xf32>
    %c0_18 = arith.constant 0 : index
    %c0_19 = arith.constant 0 : index
    %c0_20 = arith.constant 0 : index
    %43 = vector.load %arg6[%c0_18, %c0_19, %c0_20] : memref<8x8x128xf32, #tpu.memory_space<vmem>>, vector<8x1x128xf32>
    %44 = vector.shape_cast %43 : vector<8x1x128xf32> to vector<8x128xf32>
    %45 = vector.shape_cast %42 : vector<8x128xf32> to vector<8x1x128xf32>
    tpu.vector_store %arg6[%c0_18, %c0_19, %c0_20], %45 {strides = array<i32>} : memref<8x8x128xf32, #tpu.memory_space<vmem>>, vector<8x1x128xf32>,
    %c0_21 = arith.constant 0 : index
    %c1 = arith.constant 1 : index
    %c0_22 = arith.constant 0 : index
    %46 = vector.load %arg2[%c0_21, %c1, %c0_22] : memref<8x8x512xbf16, #tpu.memory_space<vmem>>, vector<8x1x512xbf16>
    %47 = vector.shape_cast %46 : vector<8x1x512xbf16> to vector<8x512xbf16>
    %48 = arith.extf %47 : vector<8x512xbf16> to vector<8x512xf32>
    %49 = arith.truncf %42 : vector<8x128xf32> to vector<8x128xbf16>
    %cst_23 = arith.constant dense<0.000000e+00> : vector<8x512xf32>
    %50 = tpu.matmul %49, %3, %cst_23 {dimension_numbers = #tpu.dot_dimension_numbers<[1], [0], [0], [1], [0, 0, 1, 1], [], []>} : vector<8x128xbf16>, vector<128x512xbf16>, vector<8x512xf32> -> vector<8x512xf32>
    %51 = arith.addf %48, %50 : vector<8x512xf32>
    %52 = vector.extract_strided_slice %51 {offsets = [0, 0], sizes = [8, 128], strides = [1, 1]} : vector<8x512xf32> to vector<8x128xf32>
    %cst_24 = arith.constant 5.000000e-01 : f32
    %53 = vector.broadcast %cst_24 : f32 to vector<8x128xf32>
    %54 = arith.mulf %53, %52 : vector<8x128xf32>
    %55 = math.tanh %54 : vector<8x128xf32>
    %cst_25 = arith.constant 1.000000e+00 : f32
    %56 = vector.broadcast %cst_25 : f32 to vector<8x128xf32>
    %57 = arith.addf %55, %56 : vector<8x128xf32>
    %cst_26 = arith.constant 5.000000e-01 : f32
    %58 = vector.broadcast %cst_26 : f32 to vector<8x128xf32>
    %59 = arith.mulf %58, %57 : vector<8x128xf32>
    %60 = vector.extract_strided_slice %51 {offsets = [0, 128], sizes = [8, 128], strides = [1, 1]} : vector<8x512xf32> to vector<8x128xf32>
    %cst_27 = arith.constant 5.000000e-01 : f32
    %61 = vector.broadcast %cst_27 : f32 to vector<8x128xf32>
    %62 = arith.mulf %61, %60 : vector<8x128xf32>
    %63 = math.tanh %62 : vector<8x128xf32>
    %cst_28 = arith.constant 1.000000e+00 : f32
    %64 = vector.broadcast %cst_28 : f32 to vector<8x128xf32>
    %65 = arith.addf %63, %64 : vector<8x128xf32>
    %cst_29 = arith.constant 5.000000e-01 : f32
    %66 = vector.broadcast %cst_29 : f32 to vector<8x128xf32>
    %67 = arith.mulf %66, %65 : vector<8x128xf32>
    %68 = vector.extract_strided_slice %51 {offsets = [0, 256], sizes = [8, 128], strides = [1, 1]} : vector<8x512xf32> to vector<8x128xf32>
    %69 = math.tanh %68 : vector<8x128xf32>
    %70 = vector.extract_strided_slice %51 {offsets = [0, 384], sizes = [8, 128], strides = [1, 1]} : vector<8x512xf32> to vector<8x128xf32>
    %cst_30 = arith.constant 5.000000e-01 : f32
    %71 = vector.broadcast %cst_30 : f32 to vector<8x128xf32>
    %72 = arith.mulf %71, %70 : vector<8x128xf32>
    %73 = math.tanh %72 : vector<8x128xf32>
    %cst_31 = arith.constant 1.000000e+00 : f32
    %74 = vector.broadcast %cst_31 : f32 to vector<8x128xf32>
    %75 = arith.addf %73, %74 : vector<8x128xf32>
    %cst_32 = arith.constant 5.000000e-01 : f32
    %76 = vector.broadcast %cst_32 : f32 to vector<8x128xf32>
    %77 = arith.mulf %76, %75 : vector<8x128xf32>
    %78 = arith.mulf %67, %40 : vector<8x128xf32>
    %79 = arith.mulf %59, %69 : vector<8x128xf32>
    %80 = arith.addf %78, %79 : vector<8x128xf32>
    %81 = math.tanh %80 : vector<8x128xf32>
    %82 = arith.mulf %77, %81 : vector<8x128xf32>
    %c0_33 = arith.constant 0 : index
    %c1_34 = arith.constant 1 : index
    %c0_35 = arith.constant 0 : index
    %83 = vector.load %arg6[%c0_33, %c1_34, %c0_35] : memref<8x8x128xf32, #tpu.memory_space<vmem>>, vector<8x1x128xf32>
    %84 = vector.shape_cast %83 : vector<8x1x128xf32> to vector<8x128xf32>
    %85 = vector.shape_cast %82 : vector<8x128xf32> to vector<8x1x128xf32>
    tpu.vector_store %arg6[%c0_33, %c1_34, %c0_35], %85 {strides = array<i32>} : memref<8x8x128xf32, #tpu.memory_space<vmem>>, vector<8x1x128xf32>,
    %c0_36 = arith.constant 0 : index
    %c2 = arith.constant 2 : index
    %c0_37 = arith.constant 0 : index
    %86 = vector.load %arg2[%c0_36, %c2, %c0_37] : memref<8x8x512xbf16, #tpu.memory_space<vmem>>, vector<8x1x512xbf16>
    %87 = vector.shape_cast %86 : vector<8x1x512xbf16> to vector<8x512xbf16>
    %88 = arith.extf %87 : vector<8x512xbf16> to vector<8x512xf32>
    %89 = arith.truncf %82 : vector<8x128xf32> to vector<8x128xbf16>
    %cst_38 = arith.constant dense<0.000000e+00> : vector<8x512xf32>
    %90 = tpu.matmul %89, %3, %cst_38 {dimension_numbers = #tpu.dot_dimension_numbers<[1], [0], [0], [1], [0, 0, 1, 1], [], []>} : vector<8x128xbf16>, vector<128x512xbf16>, vector<8x512xf32> -> vector<8x512xf32>
    %91 = arith.addf %88, %90 : vector<8x512xf32>
    %92 = vector.extract_strided_slice %91 {offsets = [0, 0], sizes = [8, 128], strides = [1, 1]} : vector<8x512xf32> to vector<8x128xf32>
    %cst_39 = arith.constant 5.000000e-01 : f32
    %93 = vector.broadcast %cst_39 : f32 to vector<8x128xf32>
    %94 = arith.mulf %93, %92 : vector<8x128xf32>
    %95 = math.tanh %94 : vector<8x128xf32>
    %cst_40 = arith.constant 1.000000e+00 : f32
    %96 = vector.broadcast %cst_40 : f32 to vector<8x128xf32>
    %97 = arith.addf %95, %96 : vector<8x128xf32>
    %cst_41 = arith.constant 5.000000e-01 : f32
    %98 = vector.broadcast %cst_41 : f32 to vector<8x128xf32>
    %99 = arith.mulf %98, %97 : vector<8x128xf32>
    %100 = vector.extract_strided_slice %91 {offsets = [0, 128], sizes = [8, 128], strides = [1, 1]} : vector<8x512xf32> to vector<8x128xf32>
    %cst_42 = arith.constant 5.000000e-01 : f32
    %101 = vector.broadcast %cst_42 : f32 to vector<8x128xf32>
    %102 = arith.mulf %101, %100 : vector<8x128xf32>
    %103 = math.tanh %102 : vector<8x128xf32>
    %cst_43 = arith.constant 1.000000e+00 : f32
    %104 = vector.broadcast %cst_43 : f32 to vector<8x128xf32>
    %105 = arith.addf %103, %104 : vector<8x128xf32>
    %cst_44 = arith.constant 5.000000e-01 : f32
    %106 = vector.broadcast %cst_44 : f32 to vector<8x128xf32>
    %107 = arith.mulf %106, %105 : vector<8x128xf32>
    %108 = vector.extract_strided_slice %91 {offsets = [0, 256], sizes = [8, 128], strides = [1, 1]} : vector<8x512xf32> to vector<8x128xf32>
    %109 = math.tanh %108 : vector<8x128xf32>
    %110 = vector.extract_strided_slice %91 {offsets = [0, 384], sizes = [8, 128], strides = [1, 1]} : vector<8x512xf32> to vector<8x128xf32>
    %cst_45 = arith.constant 5.000000e-01 : f32
    %111 = vector.broadcast %cst_45 : f32 to vector<8x128xf32>
    %112 = arith.mulf %111, %110 : vector<8x128xf32>
    %113 = math.tanh %112 : vector<8x128xf32>
    %cst_46 = arith.constant 1.000000e+00 : f32
    %114 = vector.broadcast %cst_46 : f32 to vector<8x128xf32>
    %115 = arith.addf %113, %114 : vector<8x128xf32>
    %cst_47 = arith.constant 5.000000e-01 : f32
    %116 = vector.broadcast %cst_47 : f32 to vector<8x128xf32>
    %117 = arith.mulf %116, %115 : vector<8x128xf32>
    %118 = arith.mulf %107, %80 : vector<8x128xf32>
    %119 = arith.mulf %99, %109 : vector<8x128xf32>
    %120 = arith.addf %118, %119 : vector<8x128xf32>
    %121 = math.tanh %120 : vector<8x128xf32>
    %122 = arith.mulf %117, %121 : vector<8x128xf32>
    %c0_48 = arith.constant 0 : index
    %c2_49 = arith.constant 2 : index
    %c0_50 = arith.constant 0 : index
    %123 = vector.load %arg6[%c0_48, %c2_49, %c0_50] : memref<8x8x128xf32, #tpu.memory_space<vmem>>, vector<8x1x128xf32>
    %124 = vector.shape_cast %123 : vector<8x1x128xf32> to vector<8x128xf32>
    %125 = vector.shape_cast %122 : vector<8x128xf32> to vector<8x1x128xf32>
    tpu.vector_store %arg6[%c0_48, %c2_49, %c0_50], %125 {strides = array<i32>} : memref<8x8x128xf32, #tpu.memory_space<vmem>>, vector<8x1x128xf32>,
    %c0_51 = arith.constant 0 : index
    %c3 = arith.constant 3 : index
    %c0_52 = arith.constant 0 : index
    %126 = vector.load %arg2[%c0_51, %c3, %c0_52] : memref<8x8x512xbf16, #tpu.memory_space<vmem>>, vector<8x1x512xbf16>
    %127 = vector.shape_cast %126 : vector<8x1x512xbf16> to vector<8x512xbf16>
    %128 = arith.extf %127 : vector<8x512xbf16> to vector<8x512xf32>
    %129 = arith.truncf %122 : vector<8x128xf32> to vector<8x128xbf16>
    %cst_53 = arith.constant dense<0.000000e+00> : vector<8x512xf32>
    %130 = tpu.matmul %129, %3, %cst_53 {dimension_numbers = #tpu.dot_dimension_numbers<[1], [0], [0], [1], [0, 0, 1, 1], [], []>} : vector<8x128xbf16>, vector<128x512xbf16>, vector<8x512xf32> -> vector<8x512xf32>
    %131 = arith.addf %128, %130 : vector<8x512xf32>
    %132 = vector.extract_strided_slice %131 {offsets = [0, 0], sizes = [8, 128], strides = [1, 1]} : vector<8x512xf32> to vector<8x128xf32>
    %cst_54 = arith.constant 5.000000e-01 : f32
    %133 = vector.broadcast %cst_54 : f32 to vector<8x128xf32>
    %134 = arith.mulf %133, %132 : vector<8x128xf32>
    %135 = math.tanh %134 : vector<8x128xf32>
    %cst_55 = arith.constant 1.000000e+00 : f32
    %136 = vector.broadcast %cst_55 : f32 to vector<8x128xf32>
    %137 = arith.addf %135, %136 : vector<8x128xf32>
    %cst_56 = arith.constant 5.000000e-01 : f32
    %138 = vector.broadcast %cst_56 : f32 to vector<8x128xf32>
    %139 = arith.mulf %138, %137 : vector<8x128xf32>
    %140 = vector.extract_strided_slice %131 {offsets = [0, 128], sizes = [8, 128], strides = [1, 1]} : vector<8x512xf32> to vector<8x128xf32>
    %cst_57 = arith.constant 5.000000e-01 : f32
    %141 = vector.broadcast %cst_57 : f32 to vector<8x128xf32>
    %142 = arith.mulf %141, %140 : vector<8x128xf32>
    %143 = math.tanh %142 : vector<8x128xf32>
    %cst_58 = arith.constant 1.000000e+00 : f32
    %144 = vector.broadcast %cst_58 : f32 to vector<8x128xf32>
    %145 = arith.addf %143, %144 : vector<8x128xf32>
    %cst_59 = arith.constant 5.000000e-01 : f32
    %146 = vector.broadcast %cst_59 : f32 to vector<8x128xf32>
    %147 = arith.mulf %146, %145 : vector<8x128xf32>
    %148 = vector.extract_strided_slice %131 {offsets = [0, 256], sizes = [8, 128], strides = [1, 1]} : vector<8x512xf32> to vector<8x128xf32>
    %149 = math.tanh %148 : vector<8x128xf32>
    %150 = vector.extract_strided_slice %131 {offsets = [0, 384], sizes = [8, 128], strides = [1, 1]} : vector<8x512xf32> to vector<8x128xf32>
    %cst_60 = arith.constant 5.000000e-01 : f32
    %151 = vector.broadcast %cst_60 : f32 to vector<8x128xf32>
    %152 = arith.mulf %151, %150 : vector<8x128xf32>
    %153 = math.tanh %152 : vector<8x128xf32>
    %cst_61 = arith.constant 1.000000e+00 : f32
    %154 = vector.broadcast %cst_61 : f32 to vector<8x128xf32>
    %155 = arith.addf %153, %154 : vector<8x128xf32>
    %cst_62 = arith.constant 5.000000e-01 : f32
    %156 = vector.broadcast %cst_62 : f32 to vector<8x128xf32>
    %157 = arith.mulf %156, %155 : vector<8x128xf32>
    %158 = arith.mulf %147, %120 : vector<8x128xf32>
    %159 = arith.mulf %139, %149 : vector<8x128xf32>
    %160 = arith.addf %158, %159 : vector<8x128xf32>
    %161 = math.tanh %160 : vector<8x128xf32>
    %162 = arith.mulf %157, %161 : vector<8x128xf32>
    %c0_63 = arith.constant 0 : index
    %c3_64 = arith.constant 3 : index
    %c0_65 = arith.constant 0 : index
    %163 = vector.load %arg6[%c0_63, %c3_64, %c0_65] : memref<8x8x128xf32, #tpu.memory_space<vmem>>, vector<8x1x128xf32>
    %164 = vector.shape_cast %163 : vector<8x1x128xf32> to vector<8x128xf32>
    %165 = vector.shape_cast %162 : vector<8x128xf32> to vector<8x1x128xf32>
    tpu.vector_store %arg6[%c0_63, %c3_64, %c0_65], %165 {strides = array<i32>} : memref<8x8x128xf32, #tpu.memory_space<vmem>>, vector<8x1x128xf32>,
    %c0_66 = arith.constant 0 : index
    %c4 = arith.constant 4 : index
    %c0_67 = arith.constant 0 : index
    %166 = vector.load %arg2[%c0_66, %c4, %c0_67] : memref<8x8x512xbf16, #tpu.memory_space<vmem>>, vector<8x1x512xbf16>
    %167 = vector.shape_cast %166 : vector<8x1x512xbf16> to vector<8x512xbf16>
    %168 = arith.extf %167 : vector<8x512xbf16> to vector<8x512xf32>
    %169 = arith.truncf %162 : vector<8x128xf32> to vector<8x128xbf16>
    %cst_68 = arith.constant dense<0.000000e+00> : vector<8x512xf32>
    %170 = tpu.matmul %169, %3, %cst_68 {dimension_numbers = #tpu.dot_dimension_numbers<[1], [0], [0], [1], [0, 0, 1, 1], [], []>} : vector<8x128xbf16>, vector<128x512xbf16>, vector<8x512xf32> -> vector<8x512xf32>
    %171 = arith.addf %168, %170 : vector<8x512xf32>
    %172 = vector.extract_strided_slice %171 {offsets = [0, 0], sizes = [8, 128], strides = [1, 1]} : vector<8x512xf32> to vector<8x128xf32>
    %cst_69 = arith.constant 5.000000e-01 : f32
    %173 = vector.broadcast %cst_69 : f32 to vector<8x128xf32>
    %174 = arith.mulf %173, %172 : vector<8x128xf32>
    %175 = math.tanh %174 : vector<8x128xf32>
    %cst_70 = arith.constant 1.000000e+00 : f32
    %176 = vector.broadcast %cst_70 : f32 to vector<8x128xf32>
    %177 = arith.addf %175, %176 : vector<8x128xf32>
    %cst_71 = arith.constant 5.000000e-01 : f32
    %178 = vector.broadcast %cst_71 : f32 to vector<8x128xf32>
    %179 = arith.mulf %178, %177 : vector<8x128xf32>
    %180 = vector.extract_strided_slice %171 {offsets = [0, 128], sizes = [8, 128], strides = [1, 1]} : vector<8x512xf32> to vector<8x128xf32>
    %cst_72 = arith.constant 5.000000e-01 : f32
    %181 = vector.broadcast %cst_72 : f32 to vector<8x128xf32>
    %182 = arith.mulf %181, %180 : vector<8x128xf32>
    %183 = math.tanh %182 : vector<8x128xf32>
    %cst_73 = arith.constant 1.000000e+00 : f32
    %184 = vector.broadcast %cst_73 : f32 to vector<8x128xf32>
    %185 = arith.addf %183, %184 : vector<8x128xf32>
    %cst_74 = arith.constant 5.000000e-01 : f32
    %186 = vector.broadcast %cst_74 : f32 to vector<8x128xf32>
    %187 = arith.mulf %186, %185 : vector<8x128xf32>
    %188 = vector.extract_strided_slice %171 {offsets = [0, 256], sizes = [8, 128], strides = [1, 1]} : vector<8x512xf32> to vector<8x128xf32>
    %189 = math.tanh %188 : vector<8x128xf32>
    %190 = vector.extract_strided_slice %171 {offsets = [0, 384], sizes = [8, 128], strides = [1, 1]} : vector<8x512xf32> to vector<8x128xf32>
    %cst_75 = arith.constant 5.000000e-01 : f32
    %191 = vector.broadcast %cst_75 : f32 to vector<8x128xf32>
    %192 = arith.mulf %191, %190 : vector<8x128xf32>
    %193 = math.tanh %192 : vector<8x128xf32>
    %cst_76 = arith.constant 1.000000e+00 : f32
    %194 = vector.broadcast %cst_76 : f32 to vector<8x128xf32>
    %195 = arith.addf %193, %194 : vector<8x128xf32>
    %cst_77 = arith.constant 5.000000e-01 : f32
    %196 = vector.broadcast %cst_77 : f32 to vector<8x128xf32>
    %197 = arith.mulf %196, %195 : vector<8x128xf32>
    %198 = arith.mulf %187, %160 : vector<8x128xf32>
    %199 = arith.mulf %179, %189 : vector<8x128xf32>
    %200 = arith.addf %198, %199 : vector<8x128xf32>
    %201 = math.tanh %200 : vector<8x128xf32>
    %202 = arith.mulf %197, %201 : vector<8x128xf32>
    %c0_78 = arith.constant 0 : index
    %c4_79 = arith.constant 4 : index
    %c0_80 = arith.constant 0 : index
    %203 = vector.load %arg6[%c0_78, %c4_79, %c0_80] : memref<8x8x128xf32, #tpu.memory_space<vmem>>, vector<8x1x128xf32>
    %204 = vector.shape_cast %203 : vector<8x1x128xf32> to vector<8x128xf32>
    %205 = vector.shape_cast %202 : vector<8x128xf32> to vector<8x1x128xf32>
    tpu.vector_store %arg6[%c0_78, %c4_79, %c0_80], %205 {strides = array<i32>} : memref<8x8x128xf32, #tpu.memory_space<vmem>>, vector<8x1x128xf32>,
    %c0_81 = arith.constant 0 : index
    %c5 = arith.constant 5 : index
    %c0_82 = arith.constant 0 : index
    %206 = vector.load %arg2[%c0_81, %c5, %c0_82] : memref<8x8x512xbf16, #tpu.memory_space<vmem>>, vector<8x1x512xbf16>
    %207 = vector.shape_cast %206 : vector<8x1x512xbf16> to vector<8x512xbf16>
    %208 = arith.extf %207 : vector<8x512xbf16> to vector<8x512xf32>
    %209 = arith.truncf %202 : vector<8x128xf32> to vector<8x128xbf16>
    %cst_83 = arith.constant dense<0.000000e+00> : vector<8x512xf32>
    %210 = tpu.matmul %209, %3, %cst_83 {dimension_numbers = #tpu.dot_dimension_numbers<[1], [0], [0], [1], [0, 0, 1, 1], [], []>} : vector<8x128xbf16>, vector<128x512xbf16>, vector<8x512xf32> -> vector<8x512xf32>
    %211 = arith.addf %208, %210 : vector<8x512xf32>
    %212 = vector.extract_strided_slice %211 {offsets = [0, 0], sizes = [8, 128], strides = [1, 1]} : vector<8x512xf32> to vector<8x128xf32>
    %cst_84 = arith.constant 5.000000e-01 : f32
    %213 = vector.broadcast %cst_84 : f32 to vector<8x128xf32>
    %214 = arith.mulf %213, %212 : vector<8x128xf32>
    %215 = math.tanh %214 : vector<8x128xf32>
    %cst_85 = arith.constant 1.000000e+00 : f32
    %216 = vector.broadcast %cst_85 : f32 to vector<8x128xf32>
    %217 = arith.addf %215, %216 : vector<8x128xf32>
    %cst_86 = arith.constant 5.000000e-01 : f32
    %218 = vector.broadcast %cst_86 : f32 to vector<8x128xf32>
    %219 = arith.mulf %218, %217 : vector<8x128xf32>
    %220 = vector.extract_strided_slice %211 {offsets = [0, 128], sizes = [8, 128], strides = [1, 1]} : vector<8x512xf32> to vector<8x128xf32>
    %cst_87 = arith.constant 5.000000e-01 : f32
    %221 = vector.broadcast %cst_87 : f32 to vector<8x128xf32>
    %222 = arith.mulf %221, %220 : vector<8x128xf32>
    %223 = math.tanh %222 : vector<8x128xf32>
    %cst_88 = arith.constant 1.000000e+00 : f32
    %224 = vector.broadcast %cst_88 : f32 to vector<8x128xf32>
    %225 = arith.addf %223, %224 : vector<8x128xf32>
    %cst_89 = arith.constant 5.000000e-01 : f32
    %226 = vector.broadcast %cst_89 : f32 to vector<8x128xf32>
    %227 = arith.mulf %226, %225 : vector<8x128xf32>
    %228 = vector.extract_strided_slice %211 {offsets = [0, 256], sizes = [8, 128], strides = [1, 1]} : vector<8x512xf32> to vector<8x128xf32>
    %229 = math.tanh %228 : vector<8x128xf32>
    %230 = vector.extract_strided_slice %211 {offsets = [0, 384], sizes = [8, 128], strides = [1, 1]} : vector<8x512xf32> to vector<8x128xf32>
    %cst_90 = arith.constant 5.000000e-01 : f32
    %231 = vector.broadcast %cst_90 : f32 to vector<8x128xf32>
    %232 = arith.mulf %231, %230 : vector<8x128xf32>
    %233 = math.tanh %232 : vector<8x128xf32>
    %cst_91 = arith.constant 1.000000e+00 : f32
    %234 = vector.broadcast %cst_91 : f32 to vector<8x128xf32>
    %235 = arith.addf %233, %234 : vector<8x128xf32>
    %cst_92 = arith.constant 5.000000e-01 : f32
    %236 = vector.broadcast %cst_92 : f32 to vector<8x128xf32>
    %237 = arith.mulf %236, %235 : vector<8x128xf32>
    %238 = arith.mulf %227, %200 : vector<8x128xf32>
    %239 = arith.mulf %219, %229 : vector<8x128xf32>
    %240 = arith.addf %238, %239 : vector<8x128xf32>
    %241 = math.tanh %240 : vector<8x128xf32>
    %242 = arith.mulf %237, %241 : vector<8x128xf32>
    %c0_93 = arith.constant 0 : index
    %c5_94 = arith.constant 5 : index
    %c0_95 = arith.constant 0 : index
    %243 = vector.load %arg6[%c0_93, %c5_94, %c0_95] : memref<8x8x128xf32, #tpu.memory_space<vmem>>, vector<8x1x128xf32>
    %244 = vector.shape_cast %243 : vector<8x1x128xf32> to vector<8x128xf32>
    %245 = vector.shape_cast %242 : vector<8x128xf32> to vector<8x1x128xf32>
    tpu.vector_store %arg6[%c0_93, %c5_94, %c0_95], %245 {strides = array<i32>} : memref<8x8x128xf32, #tpu.memory_space<vmem>>, vector<8x1x128xf32>,
    %c0_96 = arith.constant 0 : index
    %c6 = arith.constant 6 : index
    %c0_97 = arith.constant 0 : index
    %246 = vector.load %arg2[%c0_96, %c6, %c0_97] : memref<8x8x512xbf16, #tpu.memory_space<vmem>>, vector<8x1x512xbf16>
    %247 = vector.shape_cast %246 : vector<8x1x512xbf16> to vector<8x512xbf16>
    %248 = arith.extf %247 : vector<8x512xbf16> to vector<8x512xf32>
    %249 = arith.truncf %242 : vector<8x128xf32> to vector<8x128xbf16>
    %cst_98 = arith.constant dense<0.000000e+00> : vector<8x512xf32>
    %250 = tpu.matmul %249, %3, %cst_98 {dimension_numbers = #tpu.dot_dimension_numbers<[1], [0], [0], [1], [0, 0, 1, 1], [], []>} : vector<8x128xbf16>, vector<128x512xbf16>, vector<8x512xf32> -> vector<8x512xf32>
    %251 = arith.addf %248, %250 : vector<8x512xf32>
    %252 = vector.extract_strided_slice %251 {offsets = [0, 0], sizes = [8, 128], strides = [1, 1]} : vector<8x512xf32> to vector<8x128xf32>
    %cst_99 = arith.constant 5.000000e-01 : f32
    %253 = vector.broadcast %cst_99 : f32 to vector<8x128xf32>
    %254 = arith.mulf %253, %252 : vector<8x128xf32>
    %255 = math.tanh %254 : vector<8x128xf32>
    %cst_100 = arith.constant 1.000000e+00 : f32
    %256 = vector.broadcast %cst_100 : f32 to vector<8x128xf32>
    %257 = arith.addf %255, %256 : vector<8x128xf32>
    %cst_101 = arith.constant 5.000000e-01 : f32
    %258 = vector.broadcast %cst_101 : f32 to vector<8x128xf32>
    %259 = arith.mulf %258, %257 : vector<8x128xf32>
    %260 = vector.extract_strided_slice %251 {offsets = [0, 128], sizes = [8, 128], strides = [1, 1]} : vector<8x512xf32> to vector<8x128xf32>
    %cst_102 = arith.constant 5.000000e-01 : f32
    %261 = vector.broadcast %cst_102 : f32 to vector<8x128xf32>
    %262 = arith.mulf %261, %260 : vector<8x128xf32>
    %263 = math.tanh %262 : vector<8x128xf32>
    %cst_103 = arith.constant 1.000000e+00 : f32
    %264 = vector.broadcast %cst_103 : f32 to vector<8x128xf32>
    %265 = arith.addf %263, %264 : vector<8x128xf32>
    %cst_104 = arith.constant 5.000000e-01 : f32
    %266 = vector.broadcast %cst_104 : f32 to vector<8x128xf32>
    %267 = arith.mulf %266, %265 : vector<8x128xf32>
    %268 = vector.extract_strided_slice %251 {offsets = [0, 256], sizes = [8, 128], strides = [1, 1]} : vector<8x512xf32> to vector<8x128xf32>
    %269 = math.tanh %268 : vector<8x128xf32>
    %270 = vector.extract_strided_slice %251 {offsets = [0, 384], sizes = [8, 128], strides = [1, 1]} : vector<8x512xf32> to vector<8x128xf32>
    %cst_105 = arith.constant 5.000000e-01 : f32
    %271 = vector.broadcast %cst_105 : f32 to vector<8x128xf32>
    %272 = arith.mulf %271, %270 : vector<8x128xf32>
    %273 = math.tanh %272 : vector<8x128xf32>
    %cst_106 = arith.constant 1.000000e+00 : f32
    %274 = vector.broadcast %cst_106 : f32 to vector<8x128xf32>
    %275 = arith.addf %273, %274 : vector<8x128xf32>
    %cst_107 = arith.constant 5.000000e-01 : f32
    %276 = vector.broadcast %cst_107 : f32 to vector<8x128xf32>
    %277 = arith.mulf %276, %275 : vector<8x128xf32>
    %278 = arith.mulf %267, %240 : vector<8x128xf32>
    %279 = arith.mulf %259, %269 : vector<8x128xf32>
    %280 = arith.addf %278, %279 : vector<8x128xf32>
    %281 = math.tanh %280 : vector<8x128xf32>
    %282 = arith.mulf %277, %281 : vector<8x128xf32>
    %c0_108 = arith.constant 0 : index
    %c6_109 = arith.constant 6 : index
    %c0_110 = arith.constant 0 : index
    %283 = vector.load %arg6[%c0_108, %c6_109, %c0_110] : memref<8x8x128xf32, #tpu.memory_space<vmem>>, vector<8x1x128xf32>
    %284 = vector.shape_cast %283 : vector<8x1x128xf32> to vector<8x128xf32>
    %285 = vector.shape_cast %282 : vector<8x128xf32> to vector<8x1x128xf32>
    tpu.vector_store %arg6[%c0_108, %c6_109, %c0_110], %285 {strides = array<i32>} : memref<8x8x128xf32, #tpu.memory_space<vmem>>, vector<8x1x128xf32>,
    %c0_111 = arith.constant 0 : index
    %c7 = arith.constant 7 : index
    %c0_112 = arith.constant 0 : index
    %286 = vector.load %arg2[%c0_111, %c7, %c0_112] : memref<8x8x512xbf16, #tpu.memory_space<vmem>>, vector<8x1x512xbf16>
    %287 = vector.shape_cast %286 : vector<8x1x512xbf16> to vector<8x512xbf16>
    %288 = arith.extf %287 : vector<8x512xbf16> to vector<8x512xf32>
    %289 = arith.truncf %282 : vector<8x128xf32> to vector<8x128xbf16>
    %cst_113 = arith.constant dense<0.000000e+00> : vector<8x512xf32>
    %290 = tpu.matmul %289, %3, %cst_113 {dimension_numbers = #tpu.dot_dimension_numbers<[1], [0], [0], [1], [0, 0, 1, 1], [], []>} : vector<8x128xbf16>, vector<128x512xbf16>, vector<8x512xf32> -> vector<8x512xf32>
    %291 = arith.addf %288, %290 : vector<8x512xf32>
    %292 = vector.extract_strided_slice %291 {offsets = [0, 0], sizes = [8, 128], strides = [1, 1]} : vector<8x512xf32> to vector<8x128xf32>
    %cst_114 = arith.constant 5.000000e-01 : f32
    %293 = vector.broadcast %cst_114 : f32 to vector<8x128xf32>
    %294 = arith.mulf %293, %292 : vector<8x128xf32>
    %295 = math.tanh %294 : vector<8x128xf32>
    %cst_115 = arith.constant 1.000000e+00 : f32
    %296 = vector.broadcast %cst_115 : f32 to vector<8x128xf32>
    %297 = arith.addf %295, %296 : vector<8x128xf32>
    %cst_116 = arith.constant 5.000000e-01 : f32
    %298 = vector.broadcast %cst_116 : f32 to vector<8x128xf32>
    %299 = arith.mulf %298, %297 : vector<8x128xf32>
    %300 = vector.extract_strided_slice %291 {offsets = [0, 128], sizes = [8, 128], strides = [1, 1]} : vector<8x512xf32> to vector<8x128xf32>
    %cst_117 = arith.constant 5.000000e-01 : f32
    %301 = vector.broadcast %cst_117 : f32 to vector<8x128xf32>
    %302 = arith.mulf %301, %300 : vector<8x128xf32>
    %303 = math.tanh %302 : vector<8x128xf32>
    %cst_118 = arith.constant 1.000000e+00 : f32
    %304 = vector.broadcast %cst_118 : f32 to vector<8x128xf32>
    %305 = arith.addf %303, %304 : vector<8x128xf32>
    %cst_119 = arith.constant 5.000000e-01 : f32
    %306 = vector.broadcast %cst_119 : f32 to vector<8x128xf32>
    %307 = arith.mulf %306, %305 : vector<8x128xf32>
    %308 = vector.extract_strided_slice %291 {offsets = [0, 256], sizes = [8, 128], strides = [1, 1]} : vector<8x512xf32> to vector<8x128xf32>
    %309 = math.tanh %308 : vector<8x128xf32>
    %310 = vector.extract_strided_slice %291 {offsets = [0, 384], sizes = [8, 128], strides = [1, 1]} : vector<8x512xf32> to vector<8x128xf32>
    %cst_120 = arith.constant 5.000000e-01 : f32
    %311 = vector.broadcast %cst_120 : f32 to vector<8x128xf32>
    %312 = arith.mulf %311, %310 : vector<8x128xf32>
    %313 = math.tanh %312 : vector<8x128xf32>
    %cst_121 = arith.constant 1.000000e+00 : f32
    %314 = vector.broadcast %cst_121 : f32 to vector<8x128xf32>
    %315 = arith.addf %313, %314 : vector<8x128xf32>
    %cst_122 = arith.constant 5.000000e-01 : f32
    %316 = vector.broadcast %cst_122 : f32 to vector<8x128xf32>
    %317 = arith.mulf %316, %315 : vector<8x128xf32>
    %318 = arith.mulf %307, %280 : vector<8x128xf32>
    %319 = arith.mulf %299, %309 : vector<8x128xf32>
    %320 = arith.addf %318, %319 : vector<8x128xf32>
    %321 = math.tanh %320 : vector<8x128xf32>
    %322 = arith.mulf %317, %321 : vector<8x128xf32>
    %c0_123 = arith.constant 0 : index
    %c7_124 = arith.constant 7 : index
    %c0_125 = arith.constant 0 : index
    %323 = vector.load %arg6[%c0_123, %c7_124, %c0_125] : memref<8x8x128xf32, #tpu.memory_space<vmem>>, vector<8x1x128xf32>
    %324 = vector.shape_cast %323 : vector<8x1x128xf32> to vector<8x128xf32>
    %325 = vector.shape_cast %322 : vector<8x128xf32> to vector<8x1x128xf32>
    tpu.vector_store %arg6[%c0_123, %c7_124, %c0_125], %325 {strides = array<i32>} : memref<8x8x128xf32, #tpu.memory_space<vmem>>, vector<8x1x128xf32>,
    %c0_126 = arith.constant 0 : index
    %c0_127 = arith.constant 0 : index
    %326 = vector.load %arg7[%c0_126, %c0_127] : memref<8x128xf32, #tpu.memory_space<vmem>>, vector<8x128xf32>
    tpu.vector_store %arg7[%c0_126, %c0_127], %322 {strides = array<i32>} : memref<8x128xf32, #tpu.memory_space<vmem>>, vector<8x128xf32>,
    %c0_128 = arith.constant 0 : index
    %c0_129 = arith.constant 0 : index
    %327 = vector.load %arg8[%c0_128, %c0_129] : memref<8x128xf32, #tpu.memory_space<vmem>>, vector<8x128xf32>
    tpu.vector_store %arg8[%c0_128, %c0_129], %320 {strides = array<i32>} : memref<8x128xf32, #tpu.memory_space<vmem>>, vector<8x128xf32>,
    return
  }
  func.func @transform_0(%arg0: i32, %arg1: i32) -> (i32, i32, i32) {
    %c0_i32 = arith.constant 0 : i32
    %c0_i32_0 = arith.constant 0 : i32
    return %arg0, %arg1, %c0_i32 : i32, i32, i32
  }
  func.func @transform_1(%arg0: i32, %arg1: i32) -> (i32, i32) {
    %c0_i32 = arith.constant 0 : i32
    %c0_i32_0 = arith.constant 0 : i32
    %c0_i32_1 = arith.constant 0 : i32
    return %c0_i32, %c0_i32_0 : i32, i32
  }
  func.func @transform_2(%arg0: i32, %arg1: i32) -> (i32, i32) {
    %c0_i32 = arith.constant 0 : i32
    %c0_i32_0 = arith.constant 0 : i32
    return %arg0, %c0_i32 : i32, i32
  }
  func.func @transform_3(%arg0: i32, %arg1: i32) -> (i32, i32) {
    %c0_i32 = arith.constant 0 : i32
    %c0_i32_0 = arith.constant 0 : i32
    return %arg0, %c0_i32 : i32, i32
  }
  func.func @transform_4(%arg0: i32, %arg1: i32) -> (i32, i32, i32) {
    %c0_i32 = arith.constant 0 : i32
    %c0_i32_0 = arith.constant 0 : i32
    return %arg0, %arg1, %c0_i32 : i32, i32, i32
  }
}

</mosaic_0001>

<llo_original>
// kernel: tpu_custom_call.1
$region0: #{tpu_custom_call.1}
  #allocation0 [shape = 'u32[]', space=smem, size = 0x4, offset = 0x4, fixed_abs, tag = 'smem constant byte address 0x4 - core index']
  #allocation1 [shape = 'u32[144,128]{1,0:T(1,128)}', space=vmem, size = 0x12000, scoped, tag = 'internal scratch']
  #allocation2 [shape = 'f32[8,128]{1,0:T(8,128)}', space=vmem, size = 0x1000, scoped, tag = 'scratch operand']
  #allocation3 [shape = 'f32[8,128]{1,0:T(8,128)}', space=vmem, size = 0x1000, scoped, tag = 'scratch operand']
  %s0 = inlined_call_operand.hbm [shape: bf16[8,8,512], index: 0, kind: input, shape index: {}]
  %s1 = inlined_call_operand.hbm [shape: bf16[128,512], index: 1, kind: input, shape index: {}]
  %s2 = inlined_call_operand.hbm [shape: f32[8,128], index: 2, kind: input, shape index: {}]
  %s3 = inlined_call_operand.vmem [shape: f32[8,128], index: 3, kind: input, shape index: {}]
  %s4 = inlined_call_operand.hbm [shape: f32[8,8,128], index: 4, kind: output, shape index: {}]
  %s5 = sld [smem:[#allocation0]]
  $region42: #{tpu_custom_call.1} parent=0
    _
  %s7 = ssub.s32 1, %s5
  %s8 = scalar_select 0, %s7, %s5
  $region1: #{tpu_custom_call.1} parent=0
    #allocation4 [shape = 'u8[65536]{0}', space=vmem, size = 0x10000, scoped, tag = 'input window, operand 0, single buffered']
    #allocation5 [shape = 's32[1]{0}', space=sflag, size = 0x4, scoped, tag = 'scoped memory for tpu_custom_call.1']
    #allocation6 [shape = 's32[1]{0}', space=sflag, size = 0x4, scoped, tag = 'scoped memory for tpu_custom_call.1']
    #allocation7 [shape = 'u8[131072]{0}', space=vmem, size = 0x20000, scoped, tag = 'input window, operand 1, single buffered']
    #allocation8 [shape = 's32[1]{0}', space=sflag, size = 0x4, scoped, tag = 'scoped memory for tpu_custom_call.1']
    #allocation9 [shape = 'u8[4096]{0}', space=vmem, size = 0x1000, scoped, tag = 'input window, operand 2, single buffered']
    #allocation10 [shape = 'u8[32768]{0}', space=vmem, size = 0x8000, scoped, tag = 'output window, operand 0, single buffered']
    %9 = vsyncpa [#allocation5], 0
    %10 = vsyncpa [#allocation8], 0
    %11 = vsyncpa [#allocation6], 0
    // Predicated region
    $region2: #{tpu_custom_call.1} parent=1 // pred_check
      _
    $region3: #{tpu_custom_call.1} parent=1 // pred_check_branch
      %13 = sbr.rel (0) target = $region5
    $region4: #{tpu_custom_call.1} parent=1 // pred_region
      %s15 = ssub.s32 2048, 2048
      %16 = vsyncadd [#allocation5], %s15
      %s17 = sshll.u32 [#allocation4], 4
      %s18 = int_to_ptr.vmem [resolvable:$true] %s17
      %23 = dma.hbm_to_vmem [thread:$0]  %s0, 2048, %s18, [#allocation5], 256, 256, 16
    $region5: #{tpu_custom_call.1} parent=1 // pred_fallthru
      _
    // Predicated region
    $region6: #{tpu_custom_call.1} parent=1 // pred_check
      _
    $region7: #{tpu_custom_call.1} parent=1 // pred_check_branch
      %25 = sbr.rel (0) target = $region9
    $region8: #{tpu_custom_call.1} parent=1 // pred_region
      %s27 = ssub.s32 4096, 4096
      %28 = vsyncadd [#allocation8], %s27
      %s29 = sshll.u32 [#allocation7], 4
      %s30 = int_to_ptr.vmem [resolvable:$true] %s29
      %35 = dma.hbm_to_vmem [thread:$0]  %s1, 4096, %s30, [#allocation8], 256, 256, 16
    $region9: #{tpu_custom_call.1} parent=1 // pred_fallthru
      _
    // Predicated region
    $region10: #{tpu_custom_call.1} parent=1 // pred_check
      _
    $region11: #{tpu_custom_call.1} parent=1 // pred_check_branch
      %37 = sbr.rel (0) target = $region13
    $region12: #{tpu_custom_call.1} parent=1 // pred_region
      %s39 = ssub.s32 128, 128
      %40 = vsyncadd [#allocation8], %s39
      %s42 = sshll.u32 [#allocation9], 4
      %s43 = int_to_ptr.vmem [resolvable:$true] %s42
      %45 = dma.hbm_to_vmem [thread:$0]  %s2, 128, %s43, [#allocation8]
    $region13: #{tpu_custom_call.1} parent=1 // pred_fallthru
      _
    // Predicated region
    $region14: #{tpu_custom_call.1} parent=1 // pred_check
      _
    $region15: #{tpu_custom_call.1} parent=1 // pred_check_branch
      %47 = sbr.rel (0) target = $region17
    $region16: #{tpu_custom_call.1} parent=1 // pred_region
      _
    $region17: #{tpu_custom_call.1} parent=1 // pred_fallthru
      _
    // Predicated region
    $region18: #{tpu_custom_call.1} parent=1 // pred_check
      _
    $region19: #{tpu_custom_call.1} parent=1 // pred_check_branch
      %49 = sbr.rel (0) target = $region21
    $region20: #{tpu_custom_call.1} parent=1 // pred_region
      %50 = dma.done [#allocation5], 2048
    $region21: #{tpu_custom_call.1} parent=1 // pred_fallthru
      _
    // Predicated region
    $region22: #{tpu_custom_call.1} parent=1 // pred_check
      _
    $region23: #{tpu_custom_call.1} parent=1 // pred_check_branch
      %52 = sbr.rel (0) target = $region25
    $region24: #{tpu_custom_call.1} parent=1 // pred_region
      %53 = dma.done [#allocation8], 4096
    $region25: #{tpu_custom_call.1} parent=1 // pred_fallthru
      _
    // Predicated region
    $region26: #{tpu_custom_call.1} parent=1 // pred_check
      _
    $region27: #{tpu_custom_call.1} parent=1 // pred_check_branch
      %55 = sbr.rel (0) target = $region29
    $region28: #{tpu_custom_call.1} parent=1 // pred_region
      %56 = dma.done [#allocation8], 128
    $region29: #{tpu_custom_call.1} parent=1 // pred_fallthru
      _
    %p58 = scmp.eq.s32.totalorder 0, 0
    // Predicated region
    $region30: #{tpu_custom_call.1} parent=1 // pred_check
      %p59 = pneg %p58
    $region31: #{tpu_custom_call.1} parent=1 // pred_check_branch
      %61 = sbr.rel (%p59) target = $region33
    $region32: #{tpu_custom_call.1} parent=1 // pred_region
      %v62 = vld [vmem:[#allocation9] sm:$0xff]
      %63 = vst [vmem:[#allocation2] sm:$0xff] %v62
      %v64 = vld [vmem:[%s3] sm:$0xff]
      %65 = vst [vmem:[#allocation3] sm:$0xff] %v64
    $region33: #{tpu_custom_call.1} parent=1 // pred_fallthru
      _
    %v66 = vld [vmem:[#allocation7] sm:$0xff]
    %v67 = vld [vmem:[#allocation7 + $0x8] sm:$0xff]
    %v68 = vld [vmem:[#allocation7 + $0x10] sm:$0xff]
    %v69 = vld [vmem:[#allocation7 + $0x18] sm:$0xff]
    %v70 = vld [vmem:[#allocation7 + $0x20] sm:$0xff]
    %v71 = vld [vmem:[#allocation7 + $0x28] sm:$0xff]
    %v72 = vld [vmem:[#allocation7 + $0x30] sm:$0xff]
    %v73 = vld [vmem:[#allocation7 + $0x38] sm:$0xff]
    %v74 = vld [vmem:[#allocation7 + $0x40] sm:$0xff]
    %v75 = vld [vmem:[#allocation7 + $0x48] sm:$0xff]
    %v76 = vld [vmem:[#allocation7 + $0x50] sm:$0xff]
    %v77 = vld [vmem:[#allocation7 + $0x58] sm:$0xff]
    %v78 = vld [vmem:[#allocation7 + $0x60] sm:$0xff]
    %v79 = vld [vmem:[#allocation7 + $0x68] sm:$0xff]
    %v80 = vld [vmem:[#allocation7 + $0x70] sm:$0xff]
    %v81 = vld [vmem:[#allocation7 + $0x78] sm:$0xff]
    %v82 = vld [vmem:[#allocation7 + $0x80] sm:$0xff]
    %v83 = vld [vmem:[#allocation7 + $0x88] sm:$0xff]
    %v84 = vld [vmem:[#allocation7 + $0x90] sm:$0xff]
    %v85 = vld [vmem:[#allocation7 + $0x98] sm:$0xff]
    %v86 = vld [vmem:[#allocation7 + $0xa0] sm:$0xff]
    %v87 = vld [vmem:[#allocation7 + $0xa8] sm:$0xff]
    %v88 = vld [vmem:[#allocation7 + $0xb0] sm:$0xff]
    %v89 = vld [vmem:[#allocation7 + $0xb8] sm:$0xff]
    %v90 = vld [vmem:[#allocation7 + $0xc0] sm:$0xff]
    %v91 = vld [vmem:[#allocation7 + $0xc8] sm:$0xff]
    %v92 = vld [vmem:[#allocation7 + $0xd0] sm:$0xff]
    %v93 = vld [vmem:[#allocation7 + $0xd8] sm:$0xff]
    %v94 = vld [vmem:[#allocation7 + $0xe0] sm:$0xff]
    %v95 = vld [vmem:[#allocation7 + $0xe8] sm:$0xff]
    %v96 = vld [vmem:[#allocation7 + $0xf0] sm:$0xff]
    %v97 = vld [vmem:[#allocation7 + $0xf8] sm:$0xff]
    %v98 = vld [vmem:[#allocation2] sm:$0xff]
    %v99 = vld [vmem:[#allocation3] sm:$0xff]
    %v100 = vld [vmem:[#allocation4] sm:$0x11]
    %v101 = vld [vmem:[#allocation4 + $0x8] sm:$0x11]
    %v102 = vld [vmem:[#allocation4 + $0x10] sm:$0x11]
    %v103 = vld [vmem:[#allocation4 + $0x18] sm:$0x11]
    %v104 = vld [vmem:[#allocation4 + $0x20] sm:$0x11]
    %v105 = vld [vmem:[#allocation4 + $0x28] sm:$0x11]
    %v106 = vld [vmem:[#allocation4 + $0x30] sm:$0x11]
    %v107 = vld [vmem:[#allocation4 + $0x38] sm:$0x11]
    %v108 = vld [vmem:[#allocation4 + $0x40] sm:$0x11]
    %v109 = vld [vmem:[#allocation4 + $0x48] sm:$0x11]
    %v110 = vld [vmem:[#allocation4 + $0x50] sm:$0x11]
    %v111 = vld [vmem:[#allocation4 + $0x58] sm:$0x11]
    %v112 = vld [vmem:[#allocation4 + $0x60] sm:$0x11]
    %v113 = vld [vmem:[#allocation4 + $0x68] sm:$0x11]
    %v114 = vld [vmem:[#allocation4 + $0x70] sm:$0x11]
    %v115 = vld [vmem:[#allocation4 + $0x78] sm:$0x11]
    %v116 = vunpack.c.l.bf16 %v100
    %v117 = vunpack.c.h.bf16 %v100
    %v118 = vunpack.c.l.bf16 %v101
    %v119 = vunpack.c.h.bf16 %v101
    %v120 = vunpack.c.l.bf16 %v102
    %v121 = vunpack.c.h.bf16 %v102
    %v122 = vunpack.c.l.bf16 %v103
    %v123 = vunpack.c.h.bf16 %v103
    %v124 = vunpack.c.l.bf16 %v104
    %v125 = vunpack.c.h.bf16 %v104
    %v126 = vunpack.c.l.bf16 %v105
    %v127 = vunpack.c.h.bf16 %v105
    %v128 = vunpack.c.l.bf16 %v106
    %v129 = vunpack.c.h.bf16 %v106
    %v130 = vunpack.c.l.bf16 %v107
    %v131 = vunpack.c.h.bf16 %v107
    %v132 = vunpack.c.l.bf16 %v108
    %v133 = vunpack.c.h.bf16 %v108
    %v134 = vunpack.c.l.bf16 %v109
    %v135 = vunpack.c.h.bf16 %v109
    %v136 = vunpack.c.l.bf16 %v110
    %v137 = vunpack.c.h.bf16 %v110
    %v138 = vunpack.c.l.bf16 %v111
    %v139 = vunpack.c.h.bf16 %v111
    %v140 = vunpack.c.l.bf16 %v112
    %v141 = vunpack.c.h.bf16 %v112
    %v142 = vunpack.c.l.bf16 %v113
    %v143 = vunpack.c.h.bf16 %v113
    %v144 = vunpack.c.l.bf16 %v114
    %v145 = vunpack.c.h.bf16 %v114
    %v146 = vunpack.c.l.bf16 %v115
    %v147 = vunpack.c.h.bf16 %v115
    %v148 = vpack.c.bf16 %v98, %v98
    %v181 = vunpack.c.l.b16 %v66
    %v182 = vunpack.c.h.b16 %v66
    %v183 = vunpack.c.l.b16 %v67
    %v184 = vunpack.c.h.b16 %v67
    %v185 = vunpack.c.l.b16 %v68
    %v186 = vunpack.c.h.b16 %v68
    %v187 = vunpack.c.l.b16 %v69
    %v188 = vunpack.c.h.b16 %v69
    %v189 = vunpack.c.l.b16 %v70
    %v190 = vunpack.c.h.b16 %v70
    %v191 = vunpack.c.l.b16 %v71
    %v192 = vunpack.c.h.b16 %v71
    %v193 = vunpack.c.l.b16 %v72
    %v194 = vunpack.c.h.b16 %v72
    %v195 = vunpack.c.l.b16 %v73
    %v196 = vunpack.c.h.b16 %v73
    %v197 = vunpack.c.l.b16 %v74
    %v198 = vunpack.c.h.b16 %v74
    %v199 = vunpack.c.l.b16 %v75
    %v200 = vunpack.c.h.b16 %v75
    %v201 = vunpack.c.l.b16 %v76
    %v202 = vunpack.c.h.b16 %v76
    %v203 = vunpack.c.l.b16 %v77
    %v204 = vunpack.c.h.b16 %v77
    %v205 = vunpack.c.l.b16 %v78
    %v206 = vunpack.c.h.b16 %v78
    %v207 = vunpack.c.l.b16 %v79
    %v208 = vunpack.c.h.b16 %v79
    %v209 = vunpack.c.l.b16 %v80
    %v210 = vunpack.c.h.b16 %v80
    %v211 = vunpack.c.l.b16 %v81
    %v212 = vunpack.c.h.b16 %v81
    %v213 = vunpack.c.l.b16 %v82
    %v214 = vunpack.c.h.b16 %v82
    %v215 = vunpack.c.l.b16 %v83
    %v216 = vunpack.c.h.b16 %v83
    %v217 = vunpack.c.l.b16 %v84
    %v218 = vunpack.c.h.b16 %v84
    %v219 = vunpack.c.l.b16 %v85
    %v220 = vunpack.c.h.b16 %v85
    %v221 = vunpack.c.l.b16 %v86
    %v222 = vunpack.c.h.b16 %v86
    %v223 = vunpack.c.l.b16 %v87
    %v224 = vunpack.c.h.b16 %v87
    %v225 = vunpack.c.l.b16 %v88
    %v226 = vunpack.c.h.b16 %v88
    %v227 = vunpack.c.l.b16 %v89
    %v228 = vunpack.c.h.b16 %v89
    %v229 = vunpack.c.l.b16 %v90
    %v230 = vunpack.c.h.b16 %v90
    %v231 = vunpack.c.l.b16 %v91
    %v232 = vunpack.c.h.b16 %v91
    %v233 = vunpack.c.l.b16 %v92
    %v234 = vunpack.c.h.b16 %v92
    %v235 = vunpack.c.l.b16 %v93
    %v236 = vunpack.c.h.b16 %v93
    %v237 = vunpack.c.l.b16 %v94
    %v238 = vunpack.c.h.b16 %v94
    %v239 = vunpack.c.l.b16 %v95
    %v240 = vunpack.c.h.b16 %v95
    %v241 = vunpack.c.l.b16 %v96
    %v242 = vunpack.c.h.b16 %v96
    %v243 = vunpack.c.l.b16 %v97
    %v244 = vunpack.c.h.b16 %v97
    %v245 = vpack.c.b16 %v185, %v181
    %v246 = vpack.c.b16 %v186, %v182
    %v247 = vpack.c.b16 %v187, %v183
    %v248 = vpack.c.b16 %v188, %v184
    %v249 = vpack.c.b16 %v193, %v189
    %v250 = vpack.c.b16 %v194, %v190
    %v251 = vpack.c.b16 %v195, %v191
    %v252 = vpack.c.b16 %v196, %v192
    %v253 = vpack.c.b16 %v201, %v197
    %v254 = vpack.c.b16 %v202, %v198
    %v255 = vpack.c.b16 %v203, %v199
    %v256 = vpack.c.b16 %v204, %v200
    %v257 = vpack.c.b16 %v209, %v205
    %v258 = vpack.c.b16 %v210, %v206
    %v259 = vpack.c.b16 %v211, %v207
    %v260 = vpack.c.b16 %v212, %v208
    %v261 = vpack.c.b16 %v217, %v213
    %v262 = vpack.c.b16 %v218, %v214
    %v263 = vpack.c.b16 %v219, %v215
    %v264 = vpack.c.b16 %v220, %v216
    %v265 = vpack.c.b16 %v225, %v221
    %v266 = vpack.c.b16 %v226, %v222
    %v267 = vpack.c.b16 %v227, %v223
    %v268 = vpack.c.b16 %v228, %v224
    %v269 = vpack.c.b16 %v233, %v229
    %v270 = vpack.c.b16 %v234, %v230
    %v271 = vpack.c.b16 %v235, %v231
    %v272 = vpack.c.b16 %v236, %v232
    %v273 = vpack.c.b16 %v241, %v237
    %v274 = vpack.c.b16 %v242, %v238
    %v275 = vpack.c.b16 %v243, %v239
    %v276 = vpack.c.b16 %v244, %v240
    %309 = vmatprep.subr.bf16.mxu0 %v246
    %310 = vmatpush1.bf16.msra.mxu0 %v245
    %311 = vmatprep.subr.bf16.mxu0 %v250
    %312 = vmatpush1.bf16.msra.mxu0 %v249
    %313 = vmatprep.subr.bf16.mxu0 %v254
    %314 = vmatpush1.bf16.msra.mxu0 %v253
    %315 = vmatprep.subr.bf16.mxu0 %v258
    %316 = vmatpush1.bf16.msra.mxu0 %v257
    %317 = vmatprep.subr.bf16.mxu0 %v262
    %318 = vmatpush1.bf16.msra.mxu0 %v261
    %319 = vmatprep.subr.bf16.mxu0 %v266
    %320 = vmatpush1.bf16.msra.mxu0 %v265
    %321 = vmatprep.subr.bf16.mxu0 %v270
    %322 = vmatpush1.bf16.msra.mxu0 %v269
    %323 = vmatprep.subr.bf16.mxu0 %v274
    %324 = vmatpush1.bf16.msra.mxu0 %v273
    %325 = vmatprep.subr.bf16.mxu0 0
    %326 = vmatpush1.bf16.msra.mxu0 0
    %327 = vmatprep.subr.bf16.mxu0 0
    %328 = vmatpush1.bf16.msra.mxu0 0
    %329 = vmatprep.subr.bf16.mxu0 0
    %330 = vmatpush1.bf16.msra.mxu0 0
    %331 = vmatprep.subr.bf16.mxu0 0
    %332 = vmatpush1.bf16.msra.mxu0 0
    %333 = vmatprep.subr.bf16.mxu0 0
    %334 = vmatpush1.bf16.msra.mxu0 0
    %335 = vmatprep.subr.bf16.mxu0 0
    %336 = vmatpush1.bf16.msra.mxu0 0
    %337 = vmatprep.subr.bf16.mxu0 0
    %338 = vmatpush1.bf16.msra.mxu0 0
    %339 = vmatprep.subr.bf16.mxu0 0
    %340 = vmatpush1.bf16.msra.mxu0 0
    %341 = vmatprep.mubr.bf16.mxu0 0
    %342 = vmatmul.mubr.bf16.gmra.mrb[0].mxu0 %v148
    %v343 = vpop.f32.mrb[0].mxu0
    %v344 = vadd.f32 0.0, %v343
    %v345 = vpop.f32.mrb[0].mxu0
    %v346 = vadd.f32 0.0, %v345
    %v347 = vpop.f32.mrb[0].mxu0
    %v348 = vpop.f32.mrb[0].mxu0
    %349 = vdwg.mxu0
    %350 = vmatprep.subr.bf16.mxu0 %v248
    %351 = vmatpush1.bf16.msra.mxu0 %v247
    %352 = vmatprep.subr.bf16.mxu0 %v252
    %353 = vmatpush1.bf16.msra.mxu0 %v251
    %354 = vmatprep.subr.bf16.mxu0 %v256
    %355 = vmatpush1.bf16.msra.mxu0 %v255
    %356 = vmatprep.subr.bf16.mxu0 %v260
    %357 = vmatpush1.bf16.msra.mxu0 %v259
    %358 = vmatprep.subr.bf16.mxu0 %v264
    %359 = vmatpush1.bf16.msra.mxu0 %v263
    %360 = vmatprep.subr.bf16.mxu0 %v268
    %361 = vmatpush1.bf16.msra.mxu0 %v267
    %362 = vmatprep.subr.bf16.mxu0 %v272
    %363 = vmatpush1.bf16.msra.mxu0 %v271
    %364 = vmatprep.subr.bf16.mxu0 %v276
    %365 = vmatpush1.bf16.msra.mxu0 %v275
    %366 = vmatprep.subr.bf16.mxu0 0
    %367 = vmatpush1.bf16.msra.mxu0 0
    %368 = vmatprep.subr.bf16.mxu0 0
    %369 = vmatpush1.bf16.msra.mxu0 0
    %370 = vmatprep.subr.bf16.mxu0 0
    %371 = vmatpush1.bf16.msra.mxu0 0
    %372 = vmatprep.subr.bf16.mxu0 0
    %373 = vmatpush1.bf16.msra.mxu0 0
    %374 = vmatprep.subr.bf16.mxu0 0
    %375 = vmatpush1.bf16.msra.mxu0 0
    %376 = vmatprep.subr.bf16.mxu0 0
    %377 = vmatpush1.bf16.msra.mxu0 0
    %378 = vmatprep.subr.bf16.mxu0 0
    %379 = vmatpush1.bf16.msra.mxu0 0
    %380 = vmatprep.subr.bf16.mxu0 0
    %381 = vmatpush1.bf16.msra.mxu0 0
    %382 = vmatprep.mubr.bf16.mxu0 0
    %383 = vmatmul.mubr.bf16.gmra.mrb[0].mxu0 %v148
    %v384 = vpop.f32.mrb[0].mxu0
    %v385 = vadd.f32 0.0, %v384
    %v386 = vpop.f32.mrb[0].mxu0
    %v387 = vadd.f32 0.0, %v386
    %v388 = vpop.f32.mrb[0].mxu0
    %v389 = vpop.f32.mrb[0].mxu0
    %390 = vdwg.mxu0
    %v395 = vrot.slane %v344, 1
    %v396 = vrot.slane %v346, 1
    %v397 = vrot.slane %v385, 1
    %v398 = vrot.slane %v387, 1
    %v399 = vrot.slane %v344, 2
    %v400 = vrot.slane %v346, 2
    %v401 = vrot.slane %v385, 2
    %v402 = vrot.slane %v387, 2
    %v403 = vrot.slane %v344, 3
    %v404 = vrot.slane %v346, 3
    %v405 = vrot.slane %v385, 3
    %v406 = vrot.slane %v387, 3
    %v407 = vrot.slane %v344, 4
    %v408 = vrot.slane %v346, 4
    %v409 = vrot.slane %v385, 4
    %v410 = vrot.slane %v387, 4
    %v411 = vrot.slane %v344, 5
    %v412 = vrot.slane %v346, 5
    %v413 = vrot.slane %v385, 5
    %v414 = vrot.slane %v387, 5
    %v415 = vrot.slane %v344, 6
    %v416 = vrot.slane %v346, 6
    %v417 = vrot.slane %v385, 6
    %v418 = vrot.slane %v387, 6
    %v419 = vrot.slane %v344, 7
    %v420 = vrot.slane %v346, 7
    %v421 = vrot.slane %v385, 7
    %v422 = vrot.slane %v387, 7
    %v455 = vadd.f32 %v116, %v344
    %v456 = vadd.f32 %v117, %v346
    %v457 = vadd.f32 %v118, %v385
    %v458 = vadd.f32 %v119, %v387
    %v459 = vadd.f32 %v120, %v395
    %v460 = vadd.f32 %v121, %v396
    %v461 = vadd.f32 %v122, %v397
    %v462 = vadd.f32 %v123, %v398
    %v463 = vadd.f32 %v124, %v399
    %v464 = vadd.f32 %v125, %v400
    %v465 = vadd.f32 %v126, %v401
    %v466 = vadd.f32 %v127, %v402
    %v467 = vadd.f32 %v128, %v403
    %v468 = vadd.f32 %v129, %v404
    %v469 = vadd.f32 %v130, %v405
    %v470 = vadd.f32 %v131, %v406
    %v471 = vadd.f32 %v132, %v407
    %v472 = vadd.f32 %v133, %v408
    %v473 = vadd.f32 %v134, %v409
    %v474 = vadd.f32 %v135, %v410
    %v475 = vadd.f32 %v136, %v411
    %v476 = vadd.f32 %v137, %v412
    %v477 = vadd.f32 %v138, %v413
    %v478 = vadd.f32 %v139, %v414
    %v479 = vadd.f32 %v140, %v415
    %v480 = vadd.f32 %v141, %v416
    %v481 = vadd.f32 %v142, %v417
    %v482 = vadd.f32 %v143, %v418
    %v483 = vadd.f32 %v144, %v419
    %v484 = vadd.f32 %v145, %v420
    %v485 = vadd.f32 %v146, %v421
    %v486 = vadd.f32 %v147, %v422
    %v487 = vmul.f32 %v455, 0.5
    %v488 = vmul.f32 %v459, 0.5
    %v489 = vmul.f32 %v463, 0.5
    %v490 = vmul.f32 %v467, 0.5
    %v491 = vmul.f32 %v471, 0.5
    %v492 = vmul.f32 %v475, 0.5
    %v493 = vmul.f32 %v479, 0.5
    %v494 = vmul.f32 %v483, 0.5
    %v495 = vtanh.pop %v487
    %v496 = vtanh.pop %v488
    %v497 = vtanh.pop %v489
    %v498 = vtanh.pop %v490
    %v499 = vtanh.pop %v491
    %v500 = vtanh.pop %v492
    %v501 = vtanh.pop %v493
    %v502 = vtanh.pop %v494
    %v503 = vadd.f32 %v495, 1.0
    %v504 = vadd.f32 %v496, 1.0
    %v505 = vadd.f32 %v497, 1.0
    %v506 = vadd.f32 %v498, 1.0
    %v507 = vadd.f32 %v499, 1.0
    %v508 = vadd.f32 %v500, 1.0
    %v509 = vadd.f32 %v501, 1.0
    %v510 = vadd.f32 %v502, 1.0
    %v511 = vmul.f32 %v503, 0.5
    %v512 = vmul.f32 %v504, 0.5
    %v513 = vmul.f32 %v505, 0.5
    %v514 = vmul.f32 %v506, 0.5
    %v515 = vmul.f32 %v507, 0.5
    %v516 = vmul.f32 %v508, 0.5
    %v517 = vmul.f32 %v509, 0.5
    %v518 = vmul.f32 %v510, 0.5
    %v519 = vmul.f32 %v456, 0.5
    %v520 = vmul.f32 %v460, 0.5
    %v521 = vmul.f32 %v464, 0.5
    %v522 = vmul.f32 %v468, 0.5
    %v523 = vmul.f32 %v472, 0.5
    %v524 = vmul.f32 %v476, 0.5
    %v525 = vmul.f32 %v480, 0.5
    %v526 = vmul.f32 %v484, 0.5
    %v527 = vtanh.pop %v519
    %v528 = vtanh.pop %v520
    %v529 = vtanh.pop %v521
    %v530 = vtanh.pop %v522
    %v531 = vtanh.pop %v523
    %v532 = vtanh.pop %v524
    %v533 = vtanh.pop %v525
    %v534 = vtanh.pop %v526
    %v535 = vadd.f32 %v527, 1.0
    %v536 = vadd.f32 %v528, 1.0
    %v537 = vadd.f32 %v529, 1.0
    %v538 = vadd.f32 %v530, 1.0
    %v539 = vadd.f32 %v531, 1.0
    %v540 = vadd.f32 %v532, 1.0
    %v541 = vadd.f32 %v533, 1.0
    %v542 = vadd.f32 %v534, 1.0
    %v543 = vmul.f32 %v535, 0.5
    %v544 = vmul.f32 %v536, 0.5
    %v545 = vmul.f32 %v537, 0.5
    %v546 = vmul.f32 %v538, 0.5
    %v547 = vmul.f32 %v539, 0.5
    %v548 = vmul.f32 %v540, 0.5
    %v549 = vmul.f32 %v541, 0.5
    %v550 = vmul.f32 %v542, 0.5
    %v551 = vtanh.pop %v457
    %v552 = vtanh.pop %v461
    %v553 = vtanh.pop %v465
    %v554 = vtanh.pop %v469
    %v555 = vtanh.pop %v473
    %v556 = vtanh.pop %v477
    %v557 = vtanh.pop %v481
    %v558 = vtanh.pop %v485
    %v559 = vmul.f32 %v458, 0.5
    %v560 = vmul.f32 %v462, 0.5
    %v561 = vmul.f32 %v466, 0.5
    %v562 = vmul.f32 %v470, 0.5
    %v563 = vmul.f32 %v474, 0.5
    %v564 = vmul.f32 %v478, 0.5
    %v565 = vmul.f32 %v482, 0.5
    %v566 = vmul.f32 %v486, 0.5
    %v567 = vtanh.pop %v559
    %v568 = vtanh.pop %v560
    %v569 = vtanh.pop %v561
    %v570 = vtanh.pop %v562
    %v571 = vtanh.pop %v563
    %v572 = vtanh.pop %v564
    %v573 = vtanh.pop %v565
    %v574 = vtanh.pop %v566
    %v575 = vadd.f32 %v567, 1.0
    %v576 = vadd.f32 %v568, 1.0
    %v577 = vadd.f32 %v569, 1.0
    %v578 = vadd.f32 %v570, 1.0
    %v579 = vadd.f32 %v571, 1.0
    %v580 = vadd.f32 %v572, 1.0
    %v581 = vadd.f32 %v573, 1.0
    %v582 = vadd.f32 %v574, 1.0
    %v583 = vmul.f32 %v575, 0.5
    %v584 = vmul.f32 %v576, 0.5
    %v585 = vmul.f32 %v577, 0.5
    %v586 = vmul.f32 %v578, 0.5
    %v587 = vmul.f32 %v579, 0.5
    %v588 = vmul.f32 %v580, 0.5
    %v589 = vmul.f32 %v581, 0.5
    %v590 = vmul.f32 %v582, 0.5
    %v592 = vrot.slane %v99, 1
    %v593 = vrot.slane %v99, 2
    %v594 = vrot.slane %v99, 3
    %v595 = vrot.slane %v99, 4
    %v596 = vrot.slane %v99, 5
    %v597 = vrot.slane %v99, 6
    %v598 = vrot.slane %v99, 7
    %v607 = vmul.f32 %v543, %v99
    %v608 = vmul.f32 %v544, %v592
    %v609 = vmul.f32 %v545, %v593
    %v610 = vmul.f32 %v546, %v594
    %v611 = vmul.f32 %v547, %v595
    %v612 = vmul.f32 %v548, %v596
    %v613 = vmul.f32 %v549, %v597
    %v614 = vmul.f32 %v550, %v598
    %v615 = vmul.f32 %v511, %v551
    %v616 = vmul.f32 %v512, %v552
    %v617 = vmul.f32 %v513, %v553
    %v618 = vmul.f32 %v514, %v554
    %v619 = vmul.f32 %v515, %v555
    %v620 = vmul.f32 %v516, %v556
    %v621 = vmul.f32 %v517, %v557
    %v622 = vmul.f32 %v518, %v558
    %v623 = vadd.f32 %v607, %v615
    %v624 = vadd.f32 %v608, %v616
    %v625 = vadd.f32 %v609, %v617
    %v626 = vadd.f32 %v610, %v618
    %v627 = vadd.f32 %v611, %v619
    %v628 = vadd.f32 %v612, %v620
    %v629 = vadd.f32 %v613, %v621
    %v630 = vadd.f32 %v614, %v622
    %v631 = vtanh.pop %v623
    %v632 = vtanh.pop %v624
    %v633 = vtanh.pop %v625
    %v634 = vtanh.pop %v626
    %v635 = vtanh.pop %v627
    %v636 = vtanh.pop %v628
    %v637 = vtanh.pop %v629
    %v638 = vtanh.pop %v630
    %v639 = vmul.f32 %v583, %v631
    %v640 = vmul.f32 %v584, %v632
    %v641 = vmul.f32 %v585, %v633
    %v642 = vmul.f32 %v586, %v634
    %v643 = vmul.f32 %v587, %v635
    %v644 = vmul.f32 %v588, %v636
    %v645 = vmul.f32 %v589, %v637
    %v646 = vmul.f32 %v590, %v638
    %647 = vst [vmem:[#allocation10] sm:$0x1] %v639
    %648 = vst [vmem:[#allocation10 + $0x8] sm:$0x1] %v640
    %649 = vst [vmem:[#allocation10 + $0x10] sm:$0x1] %v641
    %650 = vst [vmem:[#allocation10 + $0x18] sm:$0x1] %v642
    %651 = vst [vmem:[#allocation10 + $0x20] sm:$0x1] %v643
    %652 = vst [vmem:[#allocation10 + $0x28] sm:$0x1] %v644
    %653 = vst [vmem:[#allocation10 + $0x30] sm:$0x1] %v645
    %654 = vst [vmem:[#allocation10 + $0x38] sm:$0x1] %v646
    %v655 = vld [vmem:[#allocation4] sm:$0x11]
    %v656 = vld [vmem:[#allocation4 + $0x8] sm:$0x11]
    %v657 = vld [vmem:[#allocation4 + $0x10] sm:$0x11]
    %v658 = vld [vmem:[#allocation4 + $0x18] sm:$0x11]
    %v659 = vld [vmem:[#allocation4 + $0x20] sm:$0x11]
    %v660 = vld [vmem:[#allocation4 + $0x28] sm:$0x11]
    %v661 = vld [vmem:[#allocation4 + $0x30] sm:$0x11]
    %v662 = vld [vmem:[#allocation4 + $0x38] sm:$0x11]
    %v663 = vld [vmem:[#allocation4 + $0x40] sm:$0x11]
    %v664 = vld [vmem:[#allocation4 + $0x48] sm:$0x11]
    %v665 = vld [vmem:[#allocation4 + $0x50] sm:$0x11]
    %v666 = vld [vmem:[#allocation4 + $0x58] sm:$0x11]
    %v667 = vld [vmem:[#allocation4 + $0x60] sm:$0x11]
    %v668 = vld [vmem:[#allocation4 + $0x68] sm:$0x11]
    %v669 = vld [vmem:[#allocation4 + $0x70] sm:$0x11]
    %v670 = vld [vmem:[#allocation4 + $0x78] sm:$0x11]
    %v671 = vunpack.c.l.bf16 %v655
    %v672 = vunpack.c.h.bf16 %v655
    %v673 = vunpack.c.l.bf16 %v656
    %v674 = vunpack.c.h.bf16 %v656
    %v675 = vunpack.c.l.bf16 %v657
    %v676 = vunpack.c.h.bf16 %v657
    %v677 = vunpack.c.l.bf16 %v658
    %v678 = vunpack.c.h.bf16 %v658
    %v679 = vunpack.c.l.bf16 %v659
    %v680 = vunpack.c.h.bf16 %v659
    %v681 = vunpack.c.l.bf16 %v660
    %v682 = vunpack.c.h.bf16 %v660
    %v683 = vunpack.c.l.bf16 %v661
    %v684 = vunpack.c.h.bf16 %v661
    %v685 = vunpack.c.l.bf16 %v662
    %v686 = vunpack.c.h.bf16 %v662
    %v687 = vunpack.c.l.bf16 %v663
    %v688 = vunpack.c.h.bf16 %v663
    %v689 = vunpack.c.l.bf16 %v664
    %v690 = vunpack.c.h.bf16 %v664
    %v691 = vunpack.c.l.bf16 %v665
    %v692 = vunpack.c.h.bf16 %v665
    %v693 = vunpack.c.l.bf16 %v666
    %v694 = vunpack.c.h.bf16 %v666
    %v695 = vunpack.c.l.bf16 %v667
    %v696 = vunpack.c.h.bf16 %v667
    %v697 = vunpack.c.l.bf16 %v668
    %v698 = vunpack.c.h.bf16 %v668
    %v699 = vunpack.c.l.bf16 %v669
    %v700 = vunpack.c.h.bf16 %v669
    %v701 = vunpack.c.l.bf16 %v670
    %v702 = vunpack.c.h.bf16 %v670
    %v703 = vpack.c.bf16 %v639, %v639
    %v704 = vpack.c.bf16 %v640, %v640
    %v705 = vpack.c.bf16 %v641, %v641
    %v706 = vpack.c.bf16 %v642, %v642
    %v707 = vpack.c.bf16 %v643, %v643
    %v708 = vpack.c.bf16 %v644, %v644
    %v709 = vpack.c.bf16 %v645, %v645
    %v710 = vpack.c.bf16 %v646, %v646
    %v719 = vunpack.c.l.b16 %v703
    %v720 = vunpack.c.l.b16 %v704
    %v721 = vunpack.c.l.b16 %v705
    %v722 = vunpack.c.l.b16 %v706
    %v723 = vunpack.c.l.b16 %v707
    %v724 = vunpack.c.l.b16 %v708
    %v725 = vunpack.c.l.b16 %v709
    %v726 = vunpack.c.l.b16 %v710
    %v727 = vrot.slane %v720, 7
    %vm728 = vcmask 1041409
    %v729 = vsel %vm728, %v727, %v719
    %v730 = vrot.slane %v721, 6
    %vm731 = vcmask 1042434
    %v732 = vsel %vm731, %v730, %v729
    %v733 = vrot.slane %v722, 5
    %vm734 = vcmask 1043459
    %v735 = vsel %vm734, %v733, %v732
    %v736 = vrot.slane %v723, 4
    %vm737 = vcmask 1044484
    %v738 = vsel %vm737, %v736, %v735
    %v739 = vrot.slane %v724, 3
    %vm740 = vcmask 1045509
    %v741 = vsel %vm740, %v739, %v738
    %v742 = vrot.slane %v725, 2
    %vm743 = vcmask 1046534
    %v744 = vsel %vm743, %v742, %v741
    %v745 = vrot.slane %v726, 1
    %vm746 = vcmask 1047559
    %v747 = vsel %vm746, %v745, %v744
    %v748 = vpack.c.b16 %v747, %v747
    %750 = vmatprep.subr.bf16.mxu0 %v246
    %751 = vmatpush1.bf16.msra.mxu0 %v245
    %752 = vmatprep.subr.bf16.mxu0 %v250
    %753 = vmatpush1.bf16.msra.mxu0 %v249
    %754 = vmatprep.subr.bf16.mxu0 %v254
    %755 = vmatpush1.bf16.msra.mxu0 %v253
    %756 = vmatprep.subr.bf16.mxu0 %v258
    %757 = vmatpush1.bf16.msra.mxu0 %v257
    %758 = vmatprep.subr.bf16.mxu0 %v262
    %759 = vmatpush1.bf16.msra.mxu0 %v261
    %760 = vmatprep.subr.bf16.mxu0 %v266
    %761 = vmatpush1.bf16.msra.mxu0 %v265
    %762 = vmatprep.subr.bf16.mxu0 %v270
    %763 = vmatpush1.bf16.msra.mxu0 %v269
    %764 = vmatprep.subr.bf16.mxu0 %v274
    %765 = vmatpush1.bf16.msra.mxu0 %v273
    %766 = vmatprep.subr.bf16.mxu0 0
    %767 = vmatpush1.bf16.msra.mxu0 0
    %768 = vmatprep.subr.bf16.mxu0 0
    %769 = vmatpush1.bf16.msra.mxu0 0
    %770 = vmatprep.subr.bf16.mxu0 0
    %771 = vmatpush1.bf16.msra.mxu0 0
    %772 = vmatprep.subr.bf16.mxu0 0
    %773 = vmatpush1.bf16.msra.mxu0 0
    %774 = vmatprep.subr.bf16.mxu0 0
    %775 = vmatpush1.bf16.msra.mxu0 0
    %776 = vmatprep.subr.bf16.mxu0 0
    %777 = vmatpush1.bf16.msra.mxu0 0
    %778 = vmatprep.subr.bf16.mxu0 0
    %779 = vmatpush1.bf16.msra.mxu0 0
    %780 = vmatprep.subr.bf16.mxu0 0
    %781 = vmatpush1.bf16.msra.mxu0 0
    %782 = vmatprep.mubr.bf16.mxu0 0
    %783 = vmatmul.mubr.bf16.gmra.mrb[0].mxu0 %v748
    %v784 = vpop.f32.mrb[0].mxu0
    %v785 = vadd.f32 0.0, %v784
    %v786 = vpop.f32.mrb[0].mxu0
    %v787 = vadd.f32 0.0, %v786
    %v788 = vpop.f32.mrb[0].mxu0
    %v789 = vpop.f32.mrb[0].mxu0
    %790 = vdwg.mxu0
    %791 = vmatprep.subr.bf16.mxu0 %v248
    %792 = vmatpush1.bf16.msra.mxu0 %v247
    %793 = vmatprep.subr.bf16.mxu0 %v252
    %794 = vmatpush1.bf16.msra.mxu0 %v251
    %795 = vmatprep.subr.bf16.mxu0 %v256
    %796 = vmatpush1.bf16.msra.mxu0 %v255
    %797 = vmatprep.subr.bf16.mxu0 %v260
    %798 = vmatpush1.bf16.msra.mxu0 %v259
    %799 = vmatprep.subr.bf16.mxu0 %v264
    %800 = vmatpush1.bf16.msra.mxu0 %v263
    %801 = vmatprep.subr.bf16.mxu0 %v268
    %802 = vmatpush1.bf16.msra.mxu0 %v267
    %803 = vmatprep.subr.bf16.mxu0 %v272
    %804 = vmatpush1.bf16.msra.mxu0 %v271
    %805 = vmatprep.subr.bf16.mxu0 %v276
    %806 = vmatpush1.bf16.msra.mxu0 %v275
    %807 = vmatprep.subr.bf16.mxu0 0
    %808 = vmatpush1.bf16.msra.mxu0 0
    %809 = vmatprep.subr.bf16.mxu0 0
    %810 = vmatpush1.bf16.msra.mxu0 0
    %811 = vmatprep.subr.bf16.mxu0 0
    %812 = vmatpush1.bf16.msra.mxu0 0
    %813 = vmatprep.subr.bf16.mxu0 0
    %814 = vmatpush1.bf16.msra.mxu0 0
    %815 = vmatprep.subr.bf16.mxu0 0
    %816 = vmatpush1.bf16.msra.mxu0 0
    %817 = vmatprep.subr.bf16.mxu0 0
    %818 = vmatpush1.bf16.msra.mxu0 0
    %819 = vmatprep.subr.bf16.mxu0 0
    %820 = vmatpush1.bf16.msra.mxu0 0
    %821 = vmatprep.subr.bf16.mxu0 0
    %822 = vmatpush1.bf16.msra.mxu0 0
    %823 = vmatprep.mubr.bf16.mxu0 0
    %824 = vmatmul.mubr.bf16.gmra.mrb[0].mxu0 %v748
    %v825 = vpop.f32.mrb[0].mxu0
    %v826 = vadd.f32 0.0, %v825
    %v827 = vpop.f32.mrb[0].mxu0
    %v828 = vadd.f32 0.0, %v827
    %v829 = vpop.f32.mrb[0].mxu0
    %v830 = vpop.f32.mrb[0].mxu0
    %831 = vdwg.mxu0
    %v836 = vrot.slane %v785, 7
    %v837 = vrot.slane %v787, 7
    %v838 = vrot.slane %v826, 7
    %v839 = vrot.slane %v828, 7
    %v840 = vrot.slane %v785, 1
    %v841 = vrot.slane %v787, 1
    %v842 = vrot.slane %v826, 1
    %v843 = vrot.slane %v828, 1
    %v844 = vrot.slane %v785, 2
    %v845 = vrot.slane %v787, 2
    %v846 = vrot.slane %v826, 2
    %v847 = vrot.slane %v828, 2
    %v848 = vrot.slane %v785, 3
    %v849 = vrot.slane %v787, 3
    %v850 = vrot.slane %v826, 3
    %v851 = vrot.slane %v828, 3
    %v852 = vrot.slane %v785, 4
    %v853 = vrot.slane %v787, 4
    %v854 = vrot.slane %v826, 4
    %v855 = vrot.slane %v828, 4
    %v856 = vrot.slane %v785, 5
    %v857 = vrot.slane %v787, 5
    %v858 = vrot.slane %v826, 5
    %v859 = vrot.slane %v828, 5
    %v860 = vrot.slane %v785, 6
    %v861 = vrot.slane %v787, 6
    %v862 = vrot.slane %v826, 6
    %v863 = vrot.slane %v828, 6
    %v896 = vadd.f32 %v671, %v836
    %v897 = vadd.f32 %v672, %v837
    %v898 = vadd.f32 %v673, %v838
    %v899 = vadd.f32 %v674, %v839
    %v900 = vadd.f32 %v675, %v785
    %v901 = vadd.f32 %v676, %v787
    %v902 = vadd.f32 %v677, %v826
    %v903 = vadd.f32 %v678, %v828
    %v904 = vadd.f32 %v679, %v840
    %v905 = vadd.f32 %v680, %v841
    %v906 = vadd.f32 %v681, %v842
    %v907 = vadd.f32 %v682, %v843
    %v908 = vadd.f32 %v683, %v844
    %v909 = vadd.f32 %v684, %v845
    %v910 = vadd.f32 %v685, %v846
    %v911 = vadd.f32 %v686, %v847
    %v912 = vadd.f32 %v687, %v848
    %v913 = vadd.f32 %v688, %v849
    %v914 = vadd.f32 %v689, %v850
    %v915 = vadd.f32 %v690, %v851
    %v916 = vadd.f32 %v691, %v852
    %v917 = vadd.f32 %v692, %v853
    %v918 = vadd.f32 %v693, %v854
    %v919 = vadd.f32 %v694, %v855
    %v920 = vadd.f32 %v695, %v856
    %v921 = vadd.f32 %v696, %v857
    %v922 = vadd.f32 %v697, %v858
    %v923 = vadd.f32 %v698, %v859
    %v924 = vadd.f32 %v699, %v860
    %v925 = vadd.f32 %v700, %v861
    %v926 = vadd.f32 %v701, %v862
    %v927 = vadd.f32 %v702, %v863
    %v928 = vmul.f32 %v896, 0.5
    %v929 = vmul.f32 %v900, 0.5
    %v930 = vmul.f32 %v904, 0.5
    %v931 = vmul.f32 %v908, 0.5
    %v932 = vmul.f32 %v912, 0.5
    %v933 = vmul.f32 %v916, 0.5
    %v934 = vmul.f32 %v920, 0.5
    %v935 = vmul.f32 %v924, 0.5
    %v936 = vtanh.pop %v928
    %v937 = vtanh.pop %v929
    %v938 = vtanh.pop %v930
    %v939 = vtanh.pop %v931
    %v940 = vtanh.pop %v932
    %v941 = vtanh.pop %v933
    %v942 = vtanh.pop %v934
    %v943 = vtanh.pop %v935
    %v944 = vadd.f32 %v936, 1.0
    %v945 = vadd.f32 %v937, 1.0
    %v946 = vadd.f32 %v938, 1.0
    %v947 = vadd.f32 %v939, 1.0
    %v948 = vadd.f32 %v940, 1.0
    %v949 = vadd.f32 %v941, 1.0
    %v950 = vadd.f32 %v942, 1.0
    %v951 = vadd.f32 %v943, 1.0
    %v952 = vmul.f32 %v944, 0.5
    %v953 = vmul.f32 %v945, 0.5
    %v954 = vmul.f32 %v946, 0.5
    %v955 = vmul.f32 %v947, 0.5
    %v956 = vmul.f32 %v948, 0.5
    %v957 = vmul.f32 %v949, 0.5
    %v958 = vmul.f32 %v950, 0.5
    %v959 = vmul.f32 %v951, 0.5
    %v960 = vmul.f32 %v897, 0.5
    %v961 = vmul.f32 %v901, 0.5
    %v962 = vmul.f32 %v905, 0.5
    %v963 = vmul.f32 %v909, 0.5
    %v964 = vmul.f32 %v913, 0.5
    %v965 = vmul.f32 %v917, 0.5
    %v966 = vmul.f32 %v921, 0.5
    %v967 = vmul.f32 %v925, 0.5
    %v968 = vtanh.pop %v960
    %v969 = vtanh.pop %v961
    %v970 = vtanh.pop %v962
    %v971 = vtanh.pop %v963
    %v972 = vtanh.pop %v964
    %v973 = vtanh.pop %v965
    %v974 = vtanh.pop %v966
    %v975 = vtanh.pop %v967
    %v976 = vadd.f32 %v968, 1.0
    %v977 = vadd.f32 %v969, 1.0
    %v978 = vadd.f32 %v970, 1.0
    %v979 = vadd.f32 %v971, 1.0
    %v980 = vadd.f32 %v972, 1.0
    %v981 = vadd.f32 %v973, 1.0
    %v982 = vadd.f32 %v974, 1.0
    %v983 = vadd.f32 %v975, 1.0
    %v984 = vmul.f32 %v976, 0.5
    %v985 = vmul.f32 %v977, 0.5
    %v986 = vmul.f32 %v978, 0.5
    %v987 = vmul.f32 %v979, 0.5
    %v988 = vmul.f32 %v980, 0.5
    %v989 = vmul.f32 %v981, 0.5
    %v990 = vmul.f32 %v982, 0.5
    %v991 = vmul.f32 %v983, 0.5
    %v992 = vtanh.pop %v898
    %v993 = vtanh.pop %v902
    %v994 = vtanh.pop %v906
    %v995 = vtanh.pop %v910
    %v996 = vtanh.pop %v914
    %v997 = vtanh.pop %v918
    %v998 = vtanh.pop %v922
    %v999 = vtanh.pop %v926
    %v1000 = vmul.f32 %v899, 0.5
    %v1001 = vmul.f32 %v903, 0.5
    %v1002 = vmul.f32 %v907, 0.5
    %v1003 = vmul.f32 %v911, 0.5
    %v1004 = vmul.f32 %v915, 0.5
    %v1005 = vmul.f32 %v919, 0.5
    %v1006 = vmul.f32 %v923, 0.5
    %v1007 = vmul.f32 %v927, 0.5
    %v1008 = vtanh.pop %v1000
    %v1009 = vtanh.pop %v1001
    %v1010 = vtanh.pop %v1002
    %v1011 = vtanh.pop %v1003
    %v1012 = vtanh.pop %v1004
    %v1013 = vtanh.pop %v1005
    %v1014 = vtanh.pop %v1006
    %v1015 = vtanh.pop %v1007
    %v1016 = vadd.f32 %v1008, 1.0
    %v1017 = vadd.f32 %v1009, 1.0
    %v1018 = vadd.f32 %v1010, 1.0
    %v1019 = vadd.f32 %v1011, 1.0
    %v1020 = vadd.f32 %v1012, 1.0
    %v1021 = vadd.f32 %v1013, 1.0
    %v1022 = vadd.f32 %v1014, 1.0
    %v1023 = vadd.f32 %v1015, 1.0
    %v1024 = vmul.f32 %v1016, 0.5
    %v1025 = vmul.f32 %v1017, 0.5
    %v1026 = vmul.f32 %v1018, 0.5
    %v1027 = vmul.f32 %v1019, 0.5
    %v1028 = vmul.f32 %v1020, 0.5
    %v1029 = vmul.f32 %v1021, 0.5
    %v1030 = vmul.f32 %v1022, 0.5
    %v1031 = vmul.f32 %v1023, 0.5
    %v1040 = vrot.slane %v623, 7
    %v1041 = vrot.slane %v624, 7
    %v1042 = vrot.slane %v625, 7
    %v1043 = vrot.slane %v626, 7
    %v1044 = vrot.slane %v627, 7
    %v1045 = vrot.slane %v628, 7
    %v1046 = vrot.slane %v629, 7
    %v1047 = vrot.slane %v630, 7
    %v1056 = vmul.f32 %v984, %v1040
    %v1057 = vmul.f32 %v985, %v1041
    %v1058 = vmul.f32 %v986, %v1042
    %v1059 = vmul.f32 %v987, %v1043
    %v1060 = vmul.f32 %v988, %v1044
    %v1061 = vmul.f32 %v989, %v1045
    %v1062 = vmul.f32 %v990, %v1046
    %v1063 = vmul.f32 %v991, %v1047
    %v1064 = vmul.f32 %v952, %v992
    %v1065 = vmul.f32 %v953, %v993
    %v1066 = vmul.f32 %v954, %v994
    %v1067 = vmul.f32 %v955, %v995
    %v1068 = vmul.f32 %v956, %v996
    %v1069 = vmul.f32 %v957, %v997
    %v1070 = vmul.f32 %v958, %v998
    %v1071 = vmul.f32 %v959, %v999
    %v1072 = vadd.f32 %v1056, %v1064
    %v1073 = vadd.f32 %v1057, %v1065
    %v1074 = vadd.f32 %v1058, %v1066
    %v1075 = vadd.f32 %v1059, %v1067
    %v1076 = vadd.f32 %v1060, %v1068
    %v1077 = vadd.f32 %v1061, %v1069
    %v1078 = vadd.f32 %v1062, %v1070
    %v1079 = vadd.f32 %v1063, %v1071
    %v1080 = vtanh.pop %v1072
    %v1081 = vtanh.pop %v1073
    %v1082 = vtanh.pop %v1074
    %v1083 = vtanh.pop %v1075
    %v1084 = vtanh.pop %v1076
    %v1085 = vtanh.pop %v1077
    %v1086 = vtanh.pop %v1078
    %v1087 = vtanh.pop %v1079
    %v1088 = vmul.f32 %v1024, %v1080
    %v1089 = vmul.f32 %v1025, %v1081
    %v1090 = vmul.f32 %v1026, %v1082
    %v1091 = vmul.f32 %v1027, %v1083
    %v1092 = vmul.f32 %v1028, %v1084
    %v1093 = vmul.f32 %v1029, %v1085
    %v1094 = vmul.f32 %v1030, %v1086
    %v1095 = vmul.f32 %v1031, %v1087
    %1096 = vst [vmem:[#allocation10] sm:$0x2] %v1088
    %1097 = vst [vmem:[#allocation10 + $0x8] sm:$0x2] %v1089
    %1098 = vst [vmem:[#allocation10 + $0x10] sm:$0x2] %v1090
    %1099 = vst [vmem:[#allocation10 + $0x18] sm:$0x2] %v1091
    %1100 = vst [vmem:[#allocation10 + $0x20] sm:$0x2] %v1092
    %1101 = vst [vmem:[#allocation10 + $0x28] sm:$0x2] %v1093
    %1102 = vst [vmem:[#allocation10 + $0x30] sm:$0x2] %v1094
    %1103 = vst [vmem:[#allocation10 + $0x38] sm:$0x2] %v1095
    %v1104 = vld [vmem:[#allocation4] sm:$0x22]
    %v1105 = vld [vmem:[#allocation4 + $0x8] sm:$0x22]
    %v1106 = vld [vmem:[#allocation4 + $0x10] sm:$0x22]
    %v1107 = vld [vmem:[#allocation4 + $0x18] sm:$0x22]
    %v1108 = vld [vmem:[#allocation4 + $0x20] sm:$0x22]
    %v1109 = vld [vmem:[#allocation4 + $0x28] sm:$0x22]
    %v1110 = vld [vmem:[#allocation4 + $0x30] sm:$0x22]
    %v1111 = vld [vmem:[#allocation4 + $0x38] sm:$0x22]
    %v1112 = vld [vmem:[#allocation4 + $0x40] sm:$0x22]
    %v1113 = vld [vmem:[#allocation4 + $0x48] sm:$0x22]
    %v1114 = vld [vmem:[#allocation4 + $0x50] sm:$0x22]
    %v1115 = vld [vmem:[#allocation4 + $0x58] sm:$0x22]
    %v1116 = vld [vmem:[#allocation4 + $0x60] sm:$0x22]
    %v1117 = vld [vmem:[#allocation4 + $0x68] sm:$0x22]
    %v1118 = vld [vmem:[#allocation4 + $0x70] sm:$0x22]
    %v1119 = vld [vmem:[#allocation4 + $0x78] sm:$0x22]
    %v1120 = vunpack.c.l.bf16 %v1104
    %v1121 = vunpack.c.h.bf16 %v1104
    %v1122 = vunpack.c.l.bf16 %v1105
    %v1123 = vunpack.c.h.bf16 %v1105
    %v1124 = vunpack.c.l.bf16 %v1106
    %v1125 = vunpack.c.h.bf16 %v1106
    %v1126 = vunpack.c.l.bf16 %v1107
    %v1127 = vunpack.c.h.bf16 %v1107
    %v1128 = vunpack.c.l.bf16 %v1108
    %v1129 = vunpack.c.h.bf16 %v1108
    %v1130 = vunpack.c.l.bf16 %v1109
    %v1131 = vunpack.c.h.bf16 %v1109
    %v1132 = vunpack.c.l.bf16 %v1110
    %v1133 = vunpack.c.h.bf16 %v1110
    %v1134 = vunpack.c.l.bf16 %v1111
    %v1135 = vunpack.c.h.bf16 %v1111
    %v1136 = vunpack.c.l.bf16 %v1112
    %v1137 = vunpack.c.h.bf16 %v1112
    %v1138 = vunpack.c.l.bf16 %v1113
    %v1139 = vunpack.c.h.bf16 %v1113
    %v1140 = vunpack.c.l.bf16 %v1114
    %v1141 = vunpack.c.h.bf16 %v1114
    %v1142 = vunpack.c.l.bf16 %v1115
    %v1143 = vunpack.c.h.bf16 %v1115
    %v1144 = vunpack.c.l.bf16 %v1116
    %v1145 = vunpack.c.h.bf16 %v1116
    %v1146 = vunpack.c.l.bf16 %v1117
    %v1147 = vunpack.c.h.bf16 %v1117
    %v1148 = vunpack.c.l.bf16 %v1118
    %v1149 = vunpack.c.h.bf16 %v1118
    %v1150 = vunpack.c.l.bf16 %v1119
    %v1151 = vunpack.c.h.bf16 %v1119
    %v1152 = vpack.c.bf16 %v1088, %v1088
    %v1153 = vpack.c.bf16 %v1089, %v1089
    %v1154 = vpack.c.bf16 %v1090, %v1090
    %v1155 = vpack.c.bf16 %v1091, %v1091
    %v1156 = vpack.c.bf16 %v1092, %v1092
    %v1157 = vpack.c.bf16 %v1093, %v1093
    %v1158 = vpack.c.bf16 %v1094, %v1094
    %v1159 = vpack.c.bf16 %v1095, %v1095
    %v1168 = vunpack.c.l.b16 %v1152
    %v1169 = vunpack.c.l.b16 %v1153
    %v1170 = vunpack.c.l.b16 %v1154
    %v1171 = vunpack.c.l.b16 %v1155
    %v1172 = vunpack.c.l.b16 %v1156
    %v1173 = vunpack.c.l.b16 %v1157
    %v1174 = vunpack.c.l.b16 %v1158
    %v1175 = vunpack.c.l.b16 %v1159
    %v1176 = vrot.slane %v1168, 1
    %v1177 = vsel %vm728, %v1169, %v1176
    %v1178 = vrot.slane %v1170, 7
    %v1179 = vsel %vm731, %v1178, %v1177
    %v1180 = vrot.slane %v1171, 6
    %v1181 = vsel %vm734, %v1180, %v1179
    %v1182 = vrot.slane %v1172, 5
    %v1183 = vsel %vm737, %v1182, %v1181
    %v1184 = vrot.slane %v1173, 4
    %v1185 = vsel %vm740, %v1184, %v1183
    %v1186 = vrot.slane %v1174, 3
    %v1187 = vsel %vm743, %v1186, %v1185
    %v1188 = vrot.slane %v1175, 2
    %v1189 = vsel %vm746, %v1188, %v1187
    %v1190 = vpack.c.b16 %v1189, %v1189
    %1192 = vmatprep.subr.bf16.mxu0 %v246
    %1193 = vmatpush1.bf16.msra.mxu0 %v245
    %1194 = vmatprep.subr.bf16.mxu0 %v250
    %1195 = vmatpush1.bf16.msra.mxu0 %v249
    %1196 = vmatprep.subr.bf16.mxu0 %v254
    %1197 = vmatpush1.bf16.msra.mxu0 %v253
    %1198 = vmatprep.subr.bf16.mxu0 %v258
    %1199 = vmatpush1.bf16.msra.mxu0 %v257
    %1200 = vmatprep.subr.bf16.mxu0 %v262
    %1201 = vmatpush1.bf16.msra.mxu0 %v261
    %1202 = vmatprep.subr.bf16.mxu0 %v266
    %1203 = vmatpush1.bf16.msra.mxu0 %v265
    %1204 = vmatprep.subr.bf16.mxu0 %v270
    %1205 = vmatpush1.bf16.msra.mxu0 %v269
    %1206 = vmatprep.subr.bf16.mxu0 %v274
    %1207 = vmatpush1.bf16.msra.mxu0 %v273
    %1208 = vmatprep.subr.bf16.mxu0 0
    %1209 = vmatpush1.bf16.msra.mxu0 0
    %1210 = vmatprep.subr.bf16.mxu0 0
    %1211 = vmatpush1.bf16.msra.mxu0 0
    %1212 = vmatprep.subr.bf16.mxu0 0
    %1213 = vmatpush1.bf16.msra.mxu0 0
    %1214 = vmatprep.subr.bf16.mxu0 0
    %1215 = vmatpush1.bf16.msra.mxu0 0
    %1216 = vmatprep.subr.bf16.mxu0 0
    %1217 = vmatpush1.bf16.msra.mxu0 0
    %1218 = vmatprep.subr.bf16.mxu0 0
    %1219 = vmatpush1.bf16.msra.mxu0 0
    %1220 = vmatprep.subr.bf16.mxu0 0
    %1221 = vmatpush1.bf16.msra.mxu0 0
    %1222 = vmatprep.subr.bf16.mxu0 0
    %1223 = vmatpush1.bf16.msra.mxu0 0
    %1224 = vmatprep.mubr.bf16.mxu0 0
    %1225 = vmatmul.mubr.bf16.gmra.mrb[0].mxu0 %v1190
    %v1226 = vpop.f32.mrb[0].mxu0
    %v1227 = vadd.f32 0.0, %v1226
    %v1228 = vpop.f32.mrb[0].mxu0
    %v1229 = vadd.f32 0.0, %v1228
    %v1230 = vpop.f32.mrb[0].mxu0
    %v1231 = vpop.f32.mrb[0].mxu0
    %1232 = vdwg.mxu0
    %1233 = vmatprep.subr.bf16.mxu0 %v248
    %1234 = vmatpush1.bf16.msra.mxu0 %v247
    %1235 = vmatprep.subr.bf16.mxu0 %v252
    %1236 = vmatpush1.bf16.msra.mxu0 %v251
    %1237 = vmatprep.subr.bf16.mxu0 %v256
    %1238 = vmatpush1.bf16.msra.mxu0 %v255
    %1239 = vmatprep.subr.bf16.mxu0 %v260
    %1240 = vmatpush1.bf16.msra.mxu0 %v259
    %1241 = vmatprep.subr.bf16.mxu0 %v264
    %1242 = vmatpush1.bf16.msra.mxu0 %v263
    %1243 = vmatprep.subr.bf16.mxu0 %v268
    %1244 = vmatpush1.bf16.msra.mxu0 %v267
    %1245 = vmatprep.subr.bf16.mxu0 %v272
    %1246 = vmatpush1.bf16.msra.mxu0 %v271
    %1247 = vmatprep.subr.bf16.mxu0 %v276
    %1248 = vmatpush1.bf16.msra.mxu0 %v275
    %1249 = vmatprep.subr.bf16.mxu0 0
    %1250 = vmatpush1.bf16.msra.mxu0 0
    %1251 = vmatprep.subr.bf16.mxu0 0
    %1252 = vmatpush1.bf16.msra.mxu0 0
    %1253 = vmatprep.subr.bf16.mxu0 0
    %1254 = vmatpush1.bf16.msra.mxu0 0
    %1255 = vmatprep.subr.bf16.mxu0 0
    %1256 = vmatpush1.bf16.msra.mxu0 0
    %1257 = vmatprep.subr.bf16.mxu0 0
    %1258 = vmatpush1.bf16.msra.mxu0 0
    %1259 = vmatprep.subr.bf16.mxu0 0
    %1260 = vmatpush1.bf16.msra.mxu0 0
    %1261 = vmatprep.subr.bf16.mxu0 0
    %1262 = vmatpush1.bf16.msra.mxu0 0
    %1263 = vmatprep.subr.bf16.mxu0 0
    %1264 = vmatpush1.bf16.msra.mxu0 0
    %1265 = vmatprep.mubr.bf16.mxu0 0
    %1266 = vmatmul.mubr.bf16.gmra.mrb[0].mxu0 %v1190
    %v1267 = vpop.f32.mrb[0].mxu0
    %v1268 = vadd.f32 0.0, %v1267
    %v1269 = vpop.f32.mrb[0].mxu0
    %v1270 = vadd.f32 0.0, %v1269
    %v1271 = vpop.f32.mrb[0].mxu0
    %v1272 = vpop.f32.mrb[0].mxu0
    %1273 = vdwg.mxu0
    %v1278 = vrot.slane %v1227, 6
    %v1279 = vrot.slane %v1229, 6
    %v1280 = vrot.slane %v1268, 6
    %v1281 = vrot.slane %v1270, 6
    %v1282 = vrot.slane %v1227, 7
    %v1283 = vrot.slane %v1229, 7
    %v1284 = vrot.slane %v1268, 7
    %v1285 = vrot.slane %v1270, 7
    %v1286 = vrot.slane %v1227, 1
    %v1287 = vrot.slane %v1229, 1
    %v1288 = vrot.slane %v1268, 1
    %v1289 = vrot.slane %v1270, 1
    %v1290 = vrot.slane %v1227, 2
    %v1291 = vrot.slane %v1229, 2
    %v1292 = vrot.slane %v1268, 2
    %v1293 = vrot.slane %v1270, 2
    %v1294 = vrot.slane %v1227, 3
    %v1295 = vrot.slane %v1229, 3
    %v1296 = vrot.slane %v1268, 3
    %v1297 = vrot.slane %v1270, 3
    %v1298 = vrot.slane %v1227, 4
    %v1299 = vrot.slane %v1229, 4
    %v1300 = vrot.slane %v1268, 4
    %v1301 = vrot.slane %v1270, 4
    %v1302 = vrot.slane %v1227, 5
    %v1303 = vrot.slane %v1229, 5
    %v1304 = vrot.slane %v1268, 5
    %v1305 = vrot.slane %v1270, 5
    %v1338 = vadd.f32 %v1120, %v1278
    %v1339 = vadd.f32 %v1121, %v1279
    %v1340 = vadd.f32 %v1122, %v1280
    %v1341 = vadd.f32 %v1123, %v1281
    %v1342 = vadd.f32 %v1124, %v1282
    %v1343 = vadd.f32 %v1125, %v1283
    %v1344 = vadd.f32 %v1126, %v1284
    %v1345 = vadd.f32 %v1127, %v1285
    %v1346 = vadd.f32 %v1128, %v1227
    %v1347 = vadd.f32 %v1129, %v1229
    %v1348 = vadd.f32 %v1130, %v1268
    %v1349 = vadd.f32 %v1131, %v1270
    %v1350 = vadd.f32 %v1132, %v1286
    %v1351 = vadd.f32 %v1133, %v1287
    %v1352 = vadd.f32 %v1134, %v1288
    %v1353 = vadd.f32 %v1135, %v1289
    %v1354 = vadd.f32 %v1136, %v1290
    %v1355 = vadd.f32 %v1137, %v1291
    %v1356 = vadd.f32 %v1138, %v1292
    %v1357 = vadd.f32 %v1139, %v1293
    %v1358 = vadd.f32 %v1140, %v1294
    %v1359 = vadd.f32 %v1141, %v1295
    %v1360 = vadd.f32 %v1142, %v1296
    %v1361 = vadd.f32 %v1143, %v1297
    %v1362 = vadd.f32 %v1144, %v1298
    %v1363 = vadd.f32 %v1145, %v1299
    %v1364 = vadd.f32 %v1146, %v1300
    %v1365 = vadd.f32 %v1147, %v1301
    %v1366 = vadd.f32 %v1148, %v1302
    %v1367 = vadd.f32 %v1149, %v1303
    %v1368 = vadd.f32 %v1150, %v1304
    %v1369 = vadd.f32 %v1151, %v1305
    %v1370 = vmul.f32 %v1338, 0.5
    %v1371 = vmul.f32 %v1342, 0.5
    %v1372 = vmul.f32 %v1346, 0.5
    %v1373 = vmul.f32 %v1350, 0.5
    %v1374 = vmul.f32 %v1354, 0.5
    %v1375 = vmul.f32 %v1358, 0.5
    %v1376 = vmul.f32 %v1362, 0.5
    %v1377 = vmul.f32 %v1366, 0.5
    %v1378 = vtanh.pop %v1370
    %v1379 = vtanh.pop %v1371
    %v1380 = vtanh.pop %v1372
    %v1381 = vtanh.pop %v1373
    %v1382 = vtanh.pop %v1374
    %v1383 = vtanh.pop %v1375
    %v1384 = vtanh.pop %v1376
    %v1385 = vtanh.pop %v1377
    %v1386 = vadd.f32 %v1378, 1.0
    %v1387 = vadd.f32 %v1379, 1.0
    %v1388 = vadd.f32 %v1380, 1.0
    %v1389 = vadd.f32 %v1381, 1.0
    %v1390 = vadd.f32 %v1382, 1.0
    %v1391 = vadd.f32 %v1383, 1.0
    %v1392 = vadd.f32 %v1384, 1.0
    %v1393 = vadd.f32 %v1385, 1.0
    %v1394 = vmul.f32 %v1386, 0.5
    %v1395 = vmul.f32 %v1387, 0.5
    %v1396 = vmul.f32 %v1388, 0.5
    %v1397 = vmul.f32 %v1389, 0.5
    %v1398 = vmul.f32 %v1390, 0.5
    %v1399 = vmul.f32 %v1391, 0.5
    %v1400 = vmul.f32 %v1392, 0.5
    %v1401 = vmul.f32 %v1393, 0.5
    %v1402 = vmul.f32 %v1339, 0.5
    %v1403 = vmul.f32 %v1343, 0.5
    %v1404 = vmul.f32 %v1347, 0.5
    %v1405 = vmul.f32 %v1351, 0.5
    %v1406 = vmul.f32 %v1355, 0.5
    %v1407 = vmul.f32 %v1359, 0.5
    %v1408 = vmul.f32 %v1363, 0.5
    %v1409 = vmul.f32 %v1367, 0.5
    %v1410 = vtanh.pop %v1402
    %v1411 = vtanh.pop %v1403
    %v1412 = vtanh.pop %v1404
    %v1413 = vtanh.pop %v1405
    %v1414 = vtanh.pop %v1406
    %v1415 = vtanh.pop %v1407
    %v1416 = vtanh.pop %v1408
    %v1417 = vtanh.pop %v1409
    %v1418 = vadd.f32 %v1410, 1.0
    %v1419 = vadd.f32 %v1411, 1.0
    %v1420 = vadd.f32 %v1412, 1.0
    %v1421 = vadd.f32 %v1413, 1.0
    %v1422 = vadd.f32 %v1414, 1.0
    %v1423 = vadd.f32 %v1415, 1.0
    %v1424 = vadd.f32 %v1416, 1.0
    %v1425 = vadd.f32 %v1417, 1.0
    %v1426 = vmul.f32 %v1418, 0.5
    %v1427 = vmul.f32 %v1419, 0.5
    %v1428 = vmul.f32 %v1420, 0.5
    %v1429 = vmul.f32 %v1421, 0.5
    %v1430 = vmul.f32 %v1422, 0.5
    %v1431 = vmul.f32 %v1423, 0.5
    %v1432 = vmul.f32 %v1424, 0.5
    %v1433 = vmul.f32 %v1425, 0.5
    %v1434 = vtanh.pop %v1340
    %v1435 = vtanh.pop %v1344
    %v1436 = vtanh.pop %v1348
    %v1437 = vtanh.pop %v1352
    %v1438 = vtanh.pop %v1356
    %v1439 = vtanh.pop %v1360
    %v1440 = vtanh.pop %v1364
    %v1441 = vtanh.pop %v1368
    %v1442 = vmul.f32 %v1341, 0.5
    %v1443 = vmul.f32 %v1345, 0.5
    %v1444 = vmul.f32 %v1349, 0.5
    %v1445 = vmul.f32 %v1353, 0.5
    %v1446 = vmul.f32 %v1357, 0.5
    %v1447 = vmul.f32 %v1361, 0.5
    %v1448 = vmul.f32 %v1365, 0.5
    %v1449 = vmul.f32 %v1369, 0.5
    %v1450 = vtanh.pop %v1442
    %v1451 = vtanh.pop %v1443
    %v1452 = vtanh.pop %v1444
    %v1453 = vtanh.pop %v1445
    %v1454 = vtanh.pop %v1446
    %v1455 = vtanh.pop %v1447
    %v1456 = vtanh.pop %v1448
    %v1457 = vtanh.pop %v1449
    %v1458 = vadd.f32 %v1450, 1.0
    %v1459 = vadd.f32 %v1451, 1.0
    %v1460 = vadd.f32 %v1452, 1.0
    %v1461 = vadd.f32 %v1453, 1.0
    %v1462 = vadd.f32 %v1454, 1.0
    %v1463 = vadd.f32 %v1455, 1.0
    %v1464 = vadd.f32 %v1456, 1.0
    %v1465 = vadd.f32 %v1457, 1.0
    %v1466 = vmul.f32 %v1458, 0.5
    %v1467 = vmul.f32 %v1459, 0.5
    %v1468 = vmul.f32 %v1460, 0.5
    %v1469 = vmul.f32 %v1461, 0.5
    %v1470 = vmul.f32 %v1462, 0.5
    %v1471 = vmul.f32 %v1463, 0.5
    %v1472 = vmul.f32 %v1464, 0.5
    %v1473 = vmul.f32 %v1465, 0.5
    %v1482 = vrot.slane %v1072, 7
    %v1483 = vrot.slane %v1073, 7
    %v1484 = vrot.slane %v1074, 7
    %v1485 = vrot.slane %v1075, 7
    %v1486 = vrot.slane %v1076, 7
    %v1487 = vrot.slane %v1077, 7
    %v1488 = vrot.slane %v1078, 7
    %v1489 = vrot.slane %v1079, 7
    %v1498 = vmul.f32 %v1426, %v1482
    %v1499 = vmul.f32 %v1427, %v1483
    %v1500 = vmul.f32 %v1428, %v1484
    %v1501 = vmul.f32 %v1429, %v1485
    %v1502 = vmul.f32 %v1430, %v1486
    %v1503 = vmul.f32 %v1431, %v1487
    %v1504 = vmul.f32 %v1432, %v1488
    %v1505 = vmul.f32 %v1433, %v1489
    %v1506 = vmul.f32 %v1394, %v1434
    %v1507 = vmul.f32 %v1395, %v1435
    %v1508 = vmul.f32 %v1396, %v1436
    %v1509 = vmul.f32 %v1397, %v1437
    %v1510 = vmul.f32 %v1398, %v1438
    %v1511 = vmul.f32 %v1399, %v1439
    %v1512 = vmul.f32 %v1400, %v1440
    %v1513 = vmul.f32 %v1401, %v1441
    %v1514 = vadd.f32 %v1498, %v1506
    %v1515 = vadd.f32 %v1499, %v1507
    %v1516 = vadd.f32 %v1500, %v1508
    %v1517 = vadd.f32 %v1501, %v1509
    %v1518 = vadd.f32 %v1502, %v1510
    %v1519 = vadd.f32 %v1503, %v1511
    %v1520 = vadd.f32 %v1504, %v1512
    %v1521 = vadd.f32 %v1505, %v1513
    %v1522 = vtanh.pop %v1514
    %v1523 = vtanh.pop %v1515
    %v1524 = vtanh.pop %v1516
    %v1525 = vtanh.pop %v1517
    %v1526 = vtanh.pop %v1518
    %v1527 = vtanh.pop %v1519
    %v1528 = vtanh.pop %v1520
    %v1529 = vtanh.pop %v1521
    %v1530 = vmul.f32 %v1466, %v1522
    %v1531 = vmul.f32 %v1467, %v1523
    %v1532 = vmul.f32 %v1468, %v1524
    %v1533 = vmul.f32 %v1469, %v1525
    %v1534 = vmul.f32 %v1470, %v1526
    %v1535 = vmul.f32 %v1471, %v1527
    %v1536 = vmul.f32 %v1472, %v1528
    %v1537 = vmul.f32 %v1473, %v1529
    %1538 = vst [vmem:[#allocation10] sm:$0x4] %v1530
    %1539 = vst [vmem:[#allocation10 + $0x8] sm:$0x4] %v1531
    %1540 = vst [vmem:[#allocation10 + $0x10] sm:$0x4] %v1532
    %1541 = vst [vmem:[#allocation10 + $0x18] sm:$0x4] %v1533
    %1542 = vst [vmem:[#allocation10 + $0x20] sm:$0x4] %v1534
    %1543 = vst [vmem:[#allocation10 + $0x28] sm:$0x4] %v1535
    %1544 = vst [vmem:[#allocation10 + $0x30] sm:$0x4] %v1536
    %1545 = vst [vmem:[#allocation10 + $0x38] sm:$0x4] %v1537
    %v1546 = vld [vmem:[#allocation4] sm:$0x22]
    %v1547 = vld [vmem:[#allocation4 + $0x8] sm:$0x22]
    %v1548 = vld [vmem:[#allocation4 + $0x10] sm:$0x22]
    %v1549 = vld [vmem:[#allocation4 + $0x18] sm:$0x22]
    %v1550 = vld [vmem:[#allocation4 + $0x20] sm:$0x22]
    %v1551 = vld [vmem:[#allocation4 + $0x28] sm:$0x22]
    %v1552 = vld [vmem:[#allocation4 + $0x30] sm:$0x22]
    %v1553 = vld [vmem:[#allocation4 + $0x38] sm:$0x22]
    %v1554 = vld [vmem:[#allocation4 + $0x40] sm:$0x22]
    %v1555 = vld [vmem:[#allocation4 + $0x48] sm:$0x22]
    %v1556 = vld [vmem:[#allocation4 + $0x50] sm:$0x22]
    %v1557 = vld [vmem:[#allocation4 + $0x58] sm:$0x22]
    %v1558 = vld [vmem:[#allocation4 + $0x60] sm:$0x22]
    %v1559 = vld [vmem:[#allocation4 + $0x68] sm:$0x22]
    %v1560 = vld [vmem:[#allocation4 + $0x70] sm:$0x22]
    %v1561 = vld [vmem:[#allocation4 + $0x78] sm:$0x22]
    %v1562 = vunpack.c.l.bf16 %v1546
    %v1563 = vunpack.c.h.bf16 %v1546
    %v1564 = vunpack.c.l.bf16 %v1547
    %v1565 = vunpack.c.h.bf16 %v1547
    %v1566 = vunpack.c.l.bf16 %v1548
    %v1567 = vunpack.c.h.bf16 %v1548
    %v1568 = vunpack.c.l.bf16 %v1549
    %v1569 = vunpack.c.h.bf16 %v1549
    %v1570 = vunpack.c.l.bf16 %v1550
    %v1571 = vunpack.c.h.bf16 %v1550
    %v1572 = vunpack.c.l.bf16 %v1551
    %v1573 = vunpack.c.h.bf16 %v1551
    %v1574 = vunpack.c.l.bf16 %v1552
    %v1575 = vunpack.c.h.bf16 %v1552
    %v1576 = vunpack.c.l.bf16 %v1553
    %v1577 = vunpack.c.h.bf16 %v1553
    %v1578 = vunpack.c.l.bf16 %v1554
    %v1579 = vunpack.c.h.bf16 %v1554
    %v1580 = vunpack.c.l.bf16 %v1555
    %v1581 = vunpack.c.h.bf16 %v1555
    %v1582 = vunpack.c.l.bf16 %v1556
    %v1583 = vunpack.c.h.bf16 %v1556
    %v1584 = vunpack.c.l.bf16 %v1557
    %v1585 = vunpack.c.h.bf16 %v1557
    %v1586 = vunpack.c.l.bf16 %v1558
    %v1587 = vunpack.c.h.bf16 %v1558
    %v1588 = vunpack.c.l.bf16 %v1559
    %v1589 = vunpack.c.h.bf16 %v1559
    %v1590 = vunpack.c.l.bf16 %v1560
    %v1591 = vunpack.c.h.bf16 %v1560
    %v1592 = vunpack.c.l.bf16 %v1561
    %v1593 = vunpack.c.h.bf16 %v1561
    %v1594 = vpack.c.bf16 %v1530, %v1530
    %v1595 = vpack.c.bf16 %v1531, %v1531
    %v1596 = vpack.c.bf16 %v1532, %v1532
    %v1597 = vpack.c.bf16 %v1533, %v1533
    %v1598 = vpack.c.bf16 %v1534, %v1534
    %v1599 = vpack.c.bf16 %v1535, %v1535
    %v1600 = vpack.c.bf16 %v1536, %v1536
    %v1601 = vpack.c.bf16 %v1537, %v1537
    %v1610 = vunpack.c.l.b16 %v1594
    %v1611 = vunpack.c.l.b16 %v1595
    %v1612 = vunpack.c.l.b16 %v1596
    %v1613 = vunpack.c.l.b16 %v1597
    %v1614 = vunpack.c.l.b16 %v1598
    %v1615 = vunpack.c.l.b16 %v1599
    %v1616 = vunpack.c.l.b16 %v1600
    %v1617 = vunpack.c.l.b16 %v1601
    %v1618 = vrot.slane %v1610, 2
    %v1619 = vrot.slane %v1611, 1
    %v1620 = vsel %vm728, %v1619, %v1618
    %v1621 = vsel %vm731, %v1612, %v1620
    %v1622 = vrot.slane %v1613, 7
    %v1623 = vsel %vm734, %v1622, %v1621
    %v1624 = vrot.slane %v1614, 6
    %v1625 = vsel %vm737, %v1624, %v1623
    %v1626 = vrot.slane %v1615, 5
    %v1627 = vsel %vm740, %v1626, %v1625
    %v1628 = vrot.slane %v1616, 4
    %v1629 = vsel %vm743, %v1628, %v1627
    %v1630 = vrot.slane %v1617, 3
    %v1631 = vsel %vm746, %v1630, %v1629
    %v1632 = vpack.c.b16 %v1631, %v1631
    %1634 = vmatprep.subr.bf16.mxu0 %v246
    %1635 = vmatpush1.bf16.msra.mxu0 %v245
    %1636 = vmatprep.subr.bf16.mxu0 %v250
    %1637 = vmatpush1.bf16.msra.mxu0 %v249
    %1638 = vmatprep.subr.bf16.mxu0 %v254
    %1639 = vmatpush1.bf16.msra.mxu0 %v253
    %1640 = vmatprep.subr.bf16.mxu0 %v258
    %1641 = vmatpush1.bf16.msra.mxu0 %v257
    %1642 = vmatprep.subr.bf16.mxu0 %v262
    %1643 = vmatpush1.bf16.msra.mxu0 %v261
    %1644 = vmatprep.subr.bf16.mxu0 %v266
    %1645 = vmatpush1.bf16.msra.mxu0 %v265
    %1646 = vmatprep.subr.bf16.mxu0 %v270
    %1647 = vmatpush1.bf16.msra.mxu0 %v269
    %1648 = vmatprep.subr.bf16.mxu0 %v274
    %1649 = vmatpush1.bf16.msra.mxu0 %v273
    %1650 = vmatprep.subr.bf16.mxu0 0
    %1651 = vmatpush1.bf16.msra.mxu0 0
    %1652 = vmatprep.subr.bf16.mxu0 0
    %1653 = vmatpush1.bf16.msra.mxu0 0
    %1654 = vmatprep.subr.bf16.mxu0 0
    %1655 = vmatpush1.bf16.msra.mxu0 0
    %1656 = vmatprep.subr.bf16.mxu0 0
    %1657 = vmatpush1.bf16.msra.mxu0 0
    %1658 = vmatprep.subr.bf16.mxu0 0
    %1659 = vmatpush1.bf16.msra.mxu0 0
    %1660 = vmatprep.subr.bf16.mxu0 0
    %1661 = vmatpush1.bf16.msra.mxu0 0
    %1662 = vmatprep.subr.bf16.mxu0 0
    %1663 = vmatpush1.bf16.msra.mxu0 0
    %1664 = vmatprep.subr.bf16.mxu0 0
    %1665 = vmatpush1.bf16.msra.mxu0 0
    %1666 = vmatprep.mubr.bf16.mxu0 0
    %1667 = vmatmul.mubr.bf16.gmra.mrb[0].mxu0 %v1632
    %v1668 = vpop.f32.mrb[0].mxu0
    %v1669 = vadd.f32 0.0, %v1668
    %v1670 = vpop.f32.mrb[0].mxu0
    %v1671 = vadd.f32 0.0, %v1670
    %v1672 = vpop.f32.mrb[0].mxu0
    %v1673 = vpop.f32.mrb[0].mxu0
    %1674 = vdwg.mxu0
    %1675 = vmatprep.subr.bf16.mxu0 %v248
    %1676 = vmatpush1.bf16.msra.mxu0 %v247
    %1677 = vmatprep.subr.bf16.mxu0 %v252
    %1678 = vmatpush1.bf16.msra.mxu0 %v251
    %1679 = vmatprep.subr.bf16.mxu0 %v256
    %1680 = vmatpush1.bf16.msra.mxu0 %v255
    %1681 = vmatprep.subr.bf16.mxu0 %v260
    %1682 = vmatpush1.bf16.msra.mxu0 %v259
    %1683 = vmatprep.subr.bf16.mxu0 %v264
    %1684 = vmatpush1.bf16.msra.mxu0 %v263
    %1685 = vmatprep.subr.bf16.mxu0 %v268
    %1686 = vmatpush1.bf16.msra.mxu0 %v267
    %1687 = vmatprep.subr.bf16.mxu0 %v272
    %1688 = vmatpush1.bf16.msra.mxu0 %v271
    %1689 = vmatprep.subr.bf16.mxu0 %v276
    %1690 = vmatpush1.bf16.msra.mxu0 %v275
    %1691 = vmatprep.subr.bf16.mxu0 0
    %1692 = vmatpush1.bf16.msra.mxu0 0
    %1693 = vmatprep.subr.bf16.mxu0 0
    %1694 = vmatpush1.bf16.msra.mxu0 0
    %1695 = vmatprep.subr.bf16.mxu0 0
    %1696 = vmatpush1.bf16.msra.mxu0 0
    %1697 = vmatprep.subr.bf16.mxu0 0
    %1698 = vmatpush1.bf16.msra.mxu0 0
    %1699 = vmatprep.subr.bf16.mxu0 0
    %1700 = vmatpush1.bf16.msra.mxu0 0
    %1701 = vmatprep.subr.bf16.mxu0 0
    %1702 = vmatpush1.bf16.msra.mxu0 0
    %1703 = vmatprep.subr.bf16.mxu0 0
    %1704 = vmatpush1.bf16.msra.mxu0 0
    %1705 = vmatprep.subr.bf16.mxu0 0
    %1706 = vmatpush1.bf16.msra.mxu0 0
    %1707 = vmatprep.mubr.bf16.mxu0 0
    %1708 = vmatmul.mubr.bf16.gmra.mrb[0].mxu0 %v1632
    %v1709 = vpop.f32.mrb[0].mxu0
    %v1710 = vadd.f32 0.0, %v1709
    %v1711 = vpop.f32.mrb[0].mxu0
    %v1712 = vadd.f32 0.0, %v1711
    %v1713 = vpop.f32.mrb[0].mxu0
    %v1714 = vpop.f32.mrb[0].mxu0
    %1715 = vdwg.mxu0
    %v1720 = vrot.slane %v1669, 5
    %v1721 = vrot.slane %v1671, 5
    %v1722 = vrot.slane %v1710, 5
    %v1723 = vrot.slane %v1712, 5
    %v1724 = vrot.slane %v1669, 6
    %v1725 = vrot.slane %v1671, 6
    %v1726 = vrot.slane %v1710, 6
    %v1727 = vrot.slane %v1712, 6
    %v1728 = vrot.slane %v1669, 7
    %v1729 = vrot.slane %v1671, 7
    %v1730 = vrot.slane %v1710, 7
    %v1731 = vrot.slane %v1712, 7
    %v1732 = vrot.slane %v1669, 1
    %v1733 = vrot.slane %v1671, 1
    %v1734 = vrot.slane %v1710, 1
    %v1735 = vrot.slane %v1712, 1
    %v1736 = vrot.slane %v1669, 2
    %v1737 = vrot.slane %v1671, 2
    %v1738 = vrot.slane %v1710, 2
    %v1739 = vrot.slane %v1712, 2
    %v1740 = vrot.slane %v1669, 3
    %v1741 = vrot.slane %v1671, 3
    %v1742 = vrot.slane %v1710, 3
    %v1743 = vrot.slane %v1712, 3
    %v1744 = vrot.slane %v1669, 4
    %v1745 = vrot.slane %v1671, 4
    %v1746 = vrot.slane %v1710, 4
    %v1747 = vrot.slane %v1712, 4
    %v1780 = vadd.f32 %v1562, %v1720
    %v1781 = vadd.f32 %v1563, %v1721
    %v1782 = vadd.f32 %v1564, %v1722
    %v1783 = vadd.f32 %v1565, %v1723
    %v1784 = vadd.f32 %v1566, %v1724
    %v1785 = vadd.f32 %v1567, %v1725
    %v1786 = vadd.f32 %v1568, %v1726
    %v1787 = vadd.f32 %v1569, %v1727
    %v1788 = vadd.f32 %v1570, %v1728
    %v1789 = vadd.f32 %v1571, %v1729
    %v1790 = vadd.f32 %v1572, %v1730
    %v1791 = vadd.f32 %v1573, %v1731
    %v1792 = vadd.f32 %v1574, %v1669
    %v1793 = vadd.f32 %v1575, %v1671
    %v1794 = vadd.f32 %v1576, %v1710
    %v1795 = vadd.f32 %v1577, %v1712
    %v1796 = vadd.f32 %v1578, %v1732
    %v1797 = vadd.f32 %v1579, %v1733
    %v1798 = vadd.f32 %v1580, %v1734
    %v1799 = vadd.f32 %v1581, %v1735
    %v1800 = vadd.f32 %v1582, %v1736
    %v1801 = vadd.f32 %v1583, %v1737
    %v1802 = vadd.f32 %v1584, %v1738
    %v1803 = vadd.f32 %v1585, %v1739
    %v1804 = vadd.f32 %v1586, %v1740
    %v1805 = vadd.f32 %v1587, %v1741
    %v1806 = vadd.f32 %v1588, %v1742
    %v1807 = vadd.f32 %v1589, %v1743
    %v1808 = vadd.f32 %v1590, %v1744
    %v1809 = vadd.f32 %v1591, %v1745
    %v1810 = vadd.f32 %v1592, %v1746
    %v1811 = vadd.f32 %v1593, %v1747
    %v1812 = vmul.f32 %v1780, 0.5
    %v1813 = vmul.f32 %v1784, 0.5
    %v1814 = vmul.f32 %v1788, 0.5
    %v1815 = vmul.f32 %v1792, 0.5
    %v1816 = vmul.f32 %v1796, 0.5
    %v1817 = vmul.f32 %v1800, 0.5
    %v1818 = vmul.f32 %v1804, 0.5
    %v1819 = vmul.f32 %v1808, 0.5
    %v1820 = vtanh.pop %v1812
    %v1821 = vtanh.pop %v1813
    %v1822 = vtanh.pop %v1814
    %v1823 = vtanh.pop %v1815
    %v1824 = vtanh.pop %v1816
    %v1825 = vtanh.pop %v1817
    %v1826 = vtanh.pop %v1818
    %v1827 = vtanh.pop %v1819
    %v1828 = vadd.f32 %v1820, 1.0
    %v1829 = vadd.f32 %v1821, 1.0
    %v1830 = vadd.f32 %v1822, 1.0
    %v1831 = vadd.f32 %v1823, 1.0
    %v1832 = vadd.f32 %v1824, 1.0
    %v1833 = vadd.f32 %v1825, 1.0
    %v1834 = vadd.f32 %v1826, 1.0
    %v1835 = vadd.f32 %v1827, 1.0
    %v1836 = vmul.f32 %v1828, 0.5
    %v1837 = vmul.f32 %v1829, 0.5
    %v1838 = vmul.f32 %v1830, 0.5
    %v1839 = vmul.f32 %v1831, 0.5
    %v1840 = vmul.f32 %v1832, 0.5
    %v1841 = vmul.f32 %v1833, 0.5
    %v1842 = vmul.f32 %v1834, 0.5
    %v1843 = vmul.f32 %v1835, 0.5
    %v1844 = vmul.f32 %v1781, 0.5
    %v1845 = vmul.f32 %v1785, 0.5
    %v1846 = vmul.f32 %v1789, 0.5
    %v1847 = vmul.f32 %v1793, 0.5
    %v1848 = vmul.f32 %v1797, 0.5
    %v1849 = vmul.f32 %v1801, 0.5
    %v1850 = vmul.f32 %v1805, 0.5
    %v1851 = vmul.f32 %v1809, 0.5
    %v1852 = vtanh.pop %v1844
    %v1853 = vtanh.pop %v1845
    %v1854 = vtanh.pop %v1846
    %v1855 = vtanh.pop %v1847
    %v1856 = vtanh.pop %v1848
    %v1857 = vtanh.pop %v1849
    %v1858 = vtanh.pop %v1850
    %v1859 = vtanh.pop %v1851
    %v1860 = vadd.f32 %v1852, 1.0
    %v1861 = vadd.f32 %v1853, 1.0
    %v1862 = vadd.f32 %v1854, 1.0
    %v1863 = vadd.f32 %v1855, 1.0
    %v1864 = vadd.f32 %v1856, 1.0
    %v1865 = vadd.f32 %v1857, 1.0
    %v1866 = vadd.f32 %v1858, 1.0
    %v1867 = vadd.f32 %v1859, 1.0
    %v1868 = vmul.f32 %v1860, 0.5
    %v1869 = vmul.f32 %v1861, 0.5
    %v1870 = vmul.f32 %v1862, 0.5
    %v1871 = vmul.f32 %v1863, 0.5
    %v1872 = vmul.f32 %v1864, 0.5
    %v1873 = vmul.f32 %v1865, 0.5
    %v1874 = vmul.f32 %v1866, 0.5
    %v1875 = vmul.f32 %v1867, 0.5
    %v1876 = vtanh.pop %v1782
    %v1877 = vtanh.pop %v1786
    %v1878 = vtanh.pop %v1790
    %v1879 = vtanh.pop %v1794
    %v1880 = vtanh.pop %v1798
    %v1881 = vtanh.pop %v1802
    %v1882 = vtanh.pop %v1806
    %v1883 = vtanh.pop %v1810
    %v1884 = vmul.f32 %v1783, 0.5
    %v1885 = vmul.f32 %v1787, 0.5
    %v1886 = vmul.f32 %v1791, 0.5
    %v1887 = vmul.f32 %v1795, 0.5
    %v1888 = vmul.f32 %v1799, 0.5
    %v1889 = vmul.f32 %v1803, 0.5
    %v1890 = vmul.f32 %v1807, 0.5
    %v1891 = vmul.f32 %v1811, 0.5
    %v1892 = vtanh.pop %v1884
    %v1893 = vtanh.pop %v1885
    %v1894 = vtanh.pop %v1886
    %v1895 = vtanh.pop %v1887
    %v1896 = vtanh.pop %v1888
    %v1897 = vtanh.pop %v1889
    %v1898 = vtanh.pop %v1890
    %v1899 = vtanh.pop %v1891
    %v1900 = vadd.f32 %v1892, 1.0
    %v1901 = vadd.f32 %v1893, 1.0
    %v1902 = vadd.f32 %v1894, 1.0
    %v1903 = vadd.f32 %v1895, 1.0
    %v1904 = vadd.f32 %v1896, 1.0
    %v1905 = vadd.f32 %v1897, 1.0
    %v1906 = vadd.f32 %v1898, 1.0
    %v1907 = vadd.f32 %v1899, 1.0
    %v1908 = vmul.f32 %v1900, 0.5
    %v1909 = vmul.f32 %v1901, 0.5
    %v1910 = vmul.f32 %v1902, 0.5
    %v1911 = vmul.f32 %v1903, 0.5
    %v1912 = vmul.f32 %v1904, 0.5
    %v1913 = vmul.f32 %v1905, 0.5
    %v1914 = vmul.f32 %v1906, 0.5
    %v1915 = vmul.f32 %v1907, 0.5
    %v1924 = vrot.slane %v1514, 7
    %v1925 = vrot.slane %v1515, 7
    %v1926 = vrot.slane %v1516, 7
    %v1927 = vrot.slane %v1517, 7
    %v1928 = vrot.slane %v1518, 7
    %v1929 = vrot.slane %v1519, 7
    %v1930 = vrot.slane %v1520, 7
    %v1931 = vrot.slane %v1521, 7
    %v1940 = vmul.f32 %v1868, %v1924
    %v1941 = vmul.f32 %v1869, %v1925
    %v1942 = vmul.f32 %v1870, %v1926
    %v1943 = vmul.f32 %v1871, %v1927
    %v1944 = vmul.f32 %v1872, %v1928
    %v1945 = vmul.f32 %v1873, %v1929
    %v1946 = vmul.f32 %v1874, %v1930
    %v1947 = vmul.f32 %v1875, %v1931
    %v1948 = vmul.f32 %v1836, %v1876
    %v1949 = vmul.f32 %v1837, %v1877
    %v1950 = vmul.f32 %v1838, %v1878
    %v1951 = vmul.f32 %v1839, %v1879
    %v1952 = vmul.f32 %v1840, %v1880
    %v1953 = vmul.f32 %v1841, %v1881
    %v1954 = vmul.f32 %v1842, %v1882
    %v1955 = vmul.f32 %v1843, %v1883
    %v1956 = vadd.f32 %v1940, %v1948
    %v1957 = vadd.f32 %v1941, %v1949
    %v1958 = vadd.f32 %v1942, %v1950
    %v1959 = vadd.f32 %v1943, %v1951
    %v1960 = vadd.f32 %v1944, %v1952
    %v1961 = vadd.f32 %v1945, %v1953
    %v1962 = vadd.f32 %v1946, %v1954
    %v1963 = vadd.f32 %v1947, %v1955
    %v1964 = vtanh.pop %v1956
    %v1965 = vtanh.pop %v1957
    %v1966 = vtanh.pop %v1958
    %v1967 = vtanh.pop %v1959
    %v1968 = vtanh.pop %v1960
    %v1969 = vtanh.pop %v1961
    %v1970 = vtanh.pop %v1962
    %v1971 = vtanh.pop %v1963
    %v1972 = vmul.f32 %v1908, %v1964
    %v1973 = vmul.f32 %v1909, %v1965
    %v1974 = vmul.f32 %v1910, %v1966
    %v1975 = vmul.f32 %v1911, %v1967
    %v1976 = vmul.f32 %v1912, %v1968
    %v1977 = vmul.f32 %v1913, %v1969
    %v1978 = vmul.f32 %v1914, %v1970
    %v1979 = vmul.f32 %v1915, %v1971
    %1980 = vst [vmem:[#allocation10] sm:$0x8] %v1972
    %1981 = vst [vmem:[#allocation10 + $0x8] sm:$0x8] %v1973
    %1982 = vst [vmem:[#allocation10 + $0x10] sm:$0x8] %v1974
    %1983 = vst [vmem:[#allocation10 + $0x18] sm:$0x8] %v1975
    %1984 = vst [vmem:[#allocation10 + $0x20] sm:$0x8] %v1976
    %1985 = vst [vmem:[#allocation10 + $0x28] sm:$0x8] %v1977
    %1986 = vst [vmem:[#allocation10 + $0x30] sm:$0x8] %v1978
    %1987 = vst [vmem:[#allocation10 + $0x38] sm:$0x8] %v1979
    %v1988 = vld [vmem:[#allocation4] sm:$0x44]
    %v1989 = vld [vmem:[#allocation4 + $0x8] sm:$0x44]
    %v1990 = vld [vmem:[#allocation4 + $0x10] sm:$0x44]
    %v1991 = vld [vmem:[#allocation4 + $0x18] sm:$0x44]
    %v1992 = vld [vmem:[#allocation4 + $0x20] sm:$0x44]
    %v1993 = vld [vmem:[#allocation4 + $0x28] sm:$0x44]
    %v1994 = vld [vmem:[#allocation4 + $0x30] sm:$0x44]
    %v1995 = vld [vmem:[#allocation4 + $0x38] sm:$0x44]
    %v1996 = vld [vmem:[#allocation4 + $0x40] sm:$0x44]
    %v1997 = vld [vmem:[#allocation4 + $0x48] sm:$0x44]
    %v1998 = vld [vmem:[#allocation4 + $0x50] sm:$0x44]
    %v1999 = vld [vmem:[#allocation4 + $0x58] sm:$0x44]
    %v2000 = vld [vmem:[#allocation4 + $0x60] sm:$0x44]
    %v2001 = vld [vmem:[#allocation4 + $0x68] sm:$0x44]
    %v2002 = vld [vmem:[#allocation4 + $0x70] sm:$0x44]
    %v2003 = vld [vmem:[#allocation4 + $0x78] sm:$0x44]
    %v2004 = vunpack.c.l.bf16 %v1988
    %v2005 = vunpack.c.h.bf16 %v1988
    %v2006 = vunpack.c.l.bf16 %v1989
    %v2007 = vunpack.c.h.bf16 %v1989
    %v2008 = vunpack.c.l.bf16 %v1990
    %v2009 = vunpack.c.h.bf16 %v1990
    %v2010 = vunpack.c.l.bf16 %v1991
    %v2011 = vunpack.c.h.bf16 %v1991
    %v2012 = vunpack.c.l.bf16 %v1992
    %v2013 = vunpack.c.h.bf16 %v1992
    %v2014 = vunpack.c.l.bf16 %v1993
    %v2015 = vunpack.c.h.bf16 %v1993
    %v2016 = vunpack.c.l.bf16 %v1994
    %v2017 = vunpack.c.h.bf16 %v1994
    %v2018 = vunpack.c.l.bf16 %v1995
    %v2019 = vunpack.c.h.bf16 %v1995
    %v2020 = vunpack.c.l.bf16 %v1996
    %v2021 = vunpack.c.h.bf16 %v1996
    %v2022 = vunpack.c.l.bf16 %v1997
    %v2023 = vunpack.c.h.bf16 %v1997
    %v2024 = vunpack.c.l.bf16 %v1998
    %v2025 = vunpack.c.h.bf16 %v1998
    %v2026 = vunpack.c.l.bf16 %v1999
    %v2027 = vunpack.c.h.bf16 %v1999
    %v2028 = vunpack.c.l.bf16 %v2000
    %v2029 = vunpack.c.h.bf16 %v2000
    %v2030 = vunpack.c.l.bf16 %v2001
    %v2031 = vunpack.c.h.bf16 %v2001
    %v2032 = vunpack.c.l.bf16 %v2002
    %v2033 = vunpack.c.h.bf16 %v2002
    %v2034 = vunpack.c.l.bf16 %v2003
    %v2035 = vunpack.c.h.bf16 %v2003
    %v2036 = vpack.c.bf16 %v1972, %v1972
    %v2037 = vpack.c.bf16 %v1973, %v1973
    %v2038 = vpack.c.bf16 %v1974, %v1974
    %v2039 = vpack.c.bf16 %v1975, %v1975
    %v2040 = vpack.c.bf16 %v1976, %v1976
    %v2041 = vpack.c.bf16 %v1977, %v1977
    %v2042 = vpack.c.bf16 %v1978, %v1978
    %v2043 = vpack.c.bf16 %v1979, %v1979
    %v2052 = vunpack.c.l.b16 %v2036
    %v2053 = vunpack.c.l.b16 %v2037
    %v2054 = vunpack.c.l.b16 %v2038
    %v2055 = vunpack.c.l.b16 %v2039
    %v2056 = vunpack.c.l.b16 %v2040
    %v2057 = vunpack.c.l.b16 %v2041
    %v2058 = vunpack.c.l.b16 %v2042
    %v2059 = vunpack.c.l.b16 %v2043
    %v2060 = vrot.slane %v2052, 3
    %v2061 = vrot.slane %v2053, 2
    %v2062 = vsel %vm728, %v2061, %v2060
    %v2063 = vrot.slane %v2054, 1
    %v2064 = vsel %vm731, %v2063, %v2062
    %v2065 = vsel %vm734, %v2055, %v2064
    %v2066 = vrot.slane %v2056, 7
    %v2067 = vsel %vm737, %v2066, %v2065
    %v2068 = vrot.slane %v2057, 6
    %v2069 = vsel %vm740, %v2068, %v2067
    %v2070 = vrot.slane %v2058, 5
    %v2071 = vsel %vm743, %v2070, %v2069
    %v2072 = vrot.slane %v2059, 4
    %v2073 = vsel %vm746, %v2072, %v2071
    %v2074 = vpack.c.b16 %v2073, %v2073
    %2076 = vmatprep.subr.bf16.mxu0 %v246
    %2077 = vmatpush1.bf16.msra.mxu0 %v245
    %2078 = vmatprep.subr.bf16.mxu0 %v250
    %2079 = vmatpush1.bf16.msra.mxu0 %v249
    %2080 = vmatprep.subr.bf16.mxu0 %v254
    %2081 = vmatpush1.bf16.msra.mxu0 %v253
    %2082 = vmatprep.subr.bf16.mxu0 %v258
    %2083 = vmatpush1.bf16.msra.mxu0 %v257
    %2084 = vmatprep.subr.bf16.mxu0 %v262
    %2085 = vmatpush1.bf16.msra.mxu0 %v261
    %2086 = vmatprep.subr.bf16.mxu0 %v266
    %2087 = vmatpush1.bf16.msra.mxu0 %v265
    %2088 = vmatprep.subr.bf16.mxu0 %v270
    %2089 = vmatpush1.bf16.msra.mxu0 %v269
    %2090 = vmatprep.subr.bf16.mxu0 %v274
    %2091 = vmatpush1.bf16.msra.mxu0 %v273
    %2092 = vmatprep.subr.bf16.mxu0 0
    %2093 = vmatpush1.bf16.msra.mxu0 0
    %2094 = vmatprep.subr.bf16.mxu0 0
    %2095 = vmatpush1.bf16.msra.mxu0 0
    %2096 = vmatprep.subr.bf16.mxu0 0
    %2097 = vmatpush1.bf16.msra.mxu0 0
    %2098 = vmatprep.subr.bf16.mxu0 0
    %2099 = vmatpush1.bf16.msra.mxu0 0
    %2100 = vmatprep.subr.bf16.mxu0 0
    %2101 = vmatpush1.bf16.msra.mxu0 0
    %2102 = vmatprep.subr.bf16.mxu0 0
    %2103 = vmatpush1.bf16.msra.mxu0 0
    %2104 = vmatprep.subr.bf16.mxu0 0
    %2105 = vmatpush1.bf16.msra.mxu0 0
    %2106 = vmatprep.subr.bf16.mxu0 0
    %2107 = vmatpush1.bf16.msra.mxu0 0
    %2108 = vmatprep.mubr.bf16.mxu0 0
    %2109 = vmatmul.mubr.bf16.gmra.mrb[0].mxu0 %v2074
    %v2110 = vpop.f32.mrb[0].mxu0
    %v2111 = vadd.f32 0.0, %v2110
    %v2112 = vpop.f32.mrb[0].mxu0
    %v2113 = vadd.f32 0.0, %v2112
    %v2114 = vpop.f32.mrb[0].mxu0
    %v2115 = vpop.f32.mrb[0].mxu0
    %2116 = vdwg.mxu0
    %2117 = vmatprep.subr.bf16.mxu0 %v248
    %2118 = vmatpush1.bf16.msra.mxu0 %v247
    %2119 = vmatprep.subr.bf16.mxu0 %v252
    %2120 = vmatpush1.bf16.msra.mxu0 %v251
    %2121 = vmatprep.subr.bf16.mxu0 %v256
    %2122 = vmatpush1.bf16.msra.mxu0 %v255
    %2123 = vmatprep.subr.bf16.mxu0 %v260
    %2124 = vmatpush1.bf16.msra.mxu0 %v259
    %2125 = vmatprep.subr.bf16.mxu0 %v264
    %2126 = vmatpush1.bf16.msra.mxu0 %v263
    %2127 = vmatprep.subr.bf16.mxu0 %v268
    %2128 = vmatpush1.bf16.msra.mxu0 %v267
    %2129 = vmatprep.subr.bf16.mxu0 %v272
    %2130 = vmatpush1.bf16.msra.mxu0 %v271
    %2131 = vmatprep.subr.bf16.mxu0 %v276
    %2132 = vmatpush1.bf16.msra.mxu0 %v275
    %2133 = vmatprep.subr.bf16.mxu0 0
    %2134 = vmatpush1.bf16.msra.mxu0 0
    %2135 = vmatprep.subr.bf16.mxu0 0
    %2136 = vmatpush1.bf16.msra.mxu0 0
    %2137 = vmatprep.subr.bf16.mxu0 0
    %2138 = vmatpush1.bf16.msra.mxu0 0
    %2139 = vmatprep.subr.bf16.mxu0 0
    %2140 = vmatpush1.bf16.msra.mxu0 0
    %2141 = vmatprep.subr.bf16.mxu0 0
    %2142 = vmatpush1.bf16.msra.mxu0 0
    %2143 = vmatprep.subr.bf16.mxu0 0
    %2144 = vmatpush1.bf16.msra.mxu0 0
    %2145 = vmatprep.subr.bf16.mxu0 0
    %2146 = vmatpush1.bf16.msra.mxu0 0
    %2147 = vmatprep.subr.bf16.mxu0 0
    %2148 = vmatpush1.bf16.msra.mxu0 0
    %2149 = vmatprep.mubr.bf16.mxu0 0
    %2150 = vmatmul.mubr.bf16.gmra.mrb[0].mxu0 %v2074
    %v2151 = vpop.f32.mrb[0].mxu0
    %v2152 = vadd.f32 0.0, %v2151
    %v2153 = vpop.f32.mrb[0].mxu0
    %v2154 = vadd.f32 0.0, %v2153
    %v2155 = vpop.f32.mrb[0].mxu0
    %v2156 = vpop.f32.mrb[0].mxu0
    %2157 = vdwg.mxu0
    %v2162 = vrot.slane %v2111, 4
    %v2163 = vrot.slane %v2113, 4
    %v2164 = vrot.slane %v2152, 4
    %v2165 = vrot.slane %v2154, 4
    %v2166 = vrot.slane %v2111, 5
    %v2167 = vrot.slane %v2113, 5
    %v2168 = vrot.slane %v2152, 5
    %v2169 = vrot.slane %v2154, 5
    %v2170 = vrot.slane %v2111, 6
    %v2171 = vrot.slane %v2113, 6
    %v2172 = vrot.slane %v2152, 6
    %v2173 = vrot.slane %v2154, 6
    %v2174 = vrot.slane %v2111, 7
    %v2175 = vrot.slane %v2113, 7
    %v2176 = vrot.slane %v2152, 7
    %v2177 = vrot.slane %v2154, 7
    %v2178 = vrot.slane %v2111, 1
    %v2179 = vrot.slane %v2113, 1
    %v2180 = vrot.slane %v2152, 1
    %v2181 = vrot.slane %v2154, 1
    %v2182 = vrot.slane %v2111, 2
    %v2183 = vrot.slane %v2113, 2
    %v2184 = vrot.slane %v2152, 2
    %v2185 = vrot.slane %v2154, 2
    %v2186 = vrot.slane %v2111, 3
    %v2187 = vrot.slane %v2113, 3
    %v2188 = vrot.slane %v2152, 3
    %v2189 = vrot.slane %v2154, 3
    %v2222 = vadd.f32 %v2004, %v2162
    %v2223 = vadd.f32 %v2005, %v2163
    %v2224 = vadd.f32 %v2006, %v2164
    %v2225 = vadd.f32 %v2007, %v2165
    %v2226 = vadd.f32 %v2008, %v2166
    %v2227 = vadd.f32 %v2009, %v2167
    %v2228 = vadd.f32 %v2010, %v2168
    %v2229 = vadd.f32 %v2011, %v2169
    %v2230 = vadd.f32 %v2012, %v2170
    %v2231 = vadd.f32 %v2013, %v2171
    %v2232 = vadd.f32 %v2014, %v2172
    %v2233 = vadd.f32 %v2015, %v2173
    %v2234 = vadd.f32 %v2016, %v2174
    %v2235 = vadd.f32 %v2017, %v2175
    %v2236 = vadd.f32 %v2018, %v2176
    %v2237 = vadd.f32 %v2019, %v2177
    %v2238 = vadd.f32 %v2020, %v2111
    %v2239 = vadd.f32 %v2021, %v2113
    %v2240 = vadd.f32 %v2022, %v2152
    %v2241 = vadd.f32 %v2023, %v2154
    %v2242 = vadd.f32 %v2024, %v2178
    %v2243 = vadd.f32 %v2025, %v2179
    %v2244 = vadd.f32 %v2026, %v2180
    %v2245 = vadd.f32 %v2027, %v2181
    %v2246 = vadd.f32 %v2028, %v2182
    %v2247 = vadd.f32 %v2029, %v2183
    %v2248 = vadd.f32 %v2030, %v2184
    %v2249 = vadd.f32 %v2031, %v2185
    %v2250 = vadd.f32 %v2032, %v2186
    %v2251 = vadd.f32 %v2033, %v2187
    %v2252 = vadd.f32 %v2034, %v2188
    %v2253 = vadd.f32 %v2035, %v2189
    %v2254 = vmul.f32 %v2222, 0.5
    %v2255 = vmul.f32 %v2226, 0.5
    %v2256 = vmul.f32 %v2230, 0.5
    %v2257 = vmul.f32 %v2234, 0.5
    %v2258 = vmul.f32 %v2238, 0.5
    %v2259 = vmul.f32 %v2242, 0.5
    %v2260 = vmul.f32 %v2246, 0.5
    %v2261 = vmul.f32 %v2250, 0.5
    %v2262 = vtanh.pop %v2254
    %v2263 = vtanh.pop %v2255
    %v2264 = vtanh.pop %v2256
    %v2265 = vtanh.pop %v2257
    %v2266 = vtanh.pop %v2258
    %v2267 = vtanh.pop %v2259
    %v2268 = vtanh.pop %v2260
    %v2269 = vtanh.pop %v2261
    %v2270 = vadd.f32 %v2262, 1.0
    %v2271 = vadd.f32 %v2263, 1.0
    %v2272 = vadd.f32 %v2264, 1.0
    %v2273 = vadd.f32 %v2265, 1.0
    %v2274 = vadd.f32 %v2266, 1.0
    %v2275 = vadd.f32 %v2267, 1.0
    %v2276 = vadd.f32 %v2268, 1.0
    %v2277 = vadd.f32 %v2269, 1.0
    %v2278 = vmul.f32 %v2270, 0.5
    %v2279 = vmul.f32 %v2271, 0.5
    %v2280 = vmul.f32 %v2272, 0.5
    %v2281 = vmul.f32 %v2273, 0.5
    %v2282 = vmul.f32 %v2274, 0.5
    %v2283 = vmul.f32 %v2275, 0.5
    %v2284 = vmul.f32 %v2276, 0.5
    %v2285 = vmul.f32 %v2277, 0.5
    %v2286 = vmul.f32 %v2223, 0.5
    %v2287 = vmul.f32 %v2227, 0.5
    %v2288 = vmul.f32 %v2231, 0.5
    %v2289 = vmul.f32 %v2235, 0.5
    %v2290 = vmul.f32 %v2239, 0.5
    %v2291 = vmul.f32 %v2243, 0.5
    %v2292 = vmul.f32 %v2247, 0.5
    %v2293 = vmul.f32 %v2251, 0.5
    %v2294 = vtanh.pop %v2286
    %v2295 = vtanh.pop %v2287
    %v2296 = vtanh.pop %v2288
    %v2297 = vtanh.pop %v2289
    %v2298 = vtanh.pop %v2290
    %v2299 = vtanh.pop %v2291
    %v2300 = vtanh.pop %v2292
    %v2301 = vtanh.pop %v2293
    %v2302 = vadd.f32 %v2294, 1.0
    %v2303 = vadd.f32 %v2295, 1.0
    %v2304 = vadd.f32 %v2296, 1.0
    %v2305 = vadd.f32 %v2297, 1.0
    %v2306 = vadd.f32 %v2298, 1.0
    %v2307 = vadd.f32 %v2299, 1.0
    %v2308 = vadd.f32 %v2300, 1.0
    %v2309 = vadd.f32 %v2301, 1.0
    %v2310 = vmul.f32 %v2302, 0.5
    %v2311 = vmul.f32 %v2303, 0.5
    %v2312 = vmul.f32 %v2304, 0.5
    %v2313 = vmul.f32 %v2305, 0.5
    %v2314 = vmul.f32 %v2306, 0.5
    %v2315 = vmul.f32 %v2307, 0.5
    %v2316 = vmul.f32 %v2308, 0.5
    %v2317 = vmul.f32 %v2309, 0.5
    %v2318 = vtanh.pop %v2224
    %v2319 = vtanh.pop %v2228
    %v2320 = vtanh.pop %v2232
    %v2321 = vtanh.pop %v2236
    %v2322 = vtanh.pop %v2240
    %v2323 = vtanh.pop %v2244
    %v2324 = vtanh.pop %v2248
    %v2325 = vtanh.pop %v2252
    %v2326 = vmul.f32 %v2225, 0.5
    %v2327 = vmul.f32 %v2229, 0.5
    %v2328 = vmul.f32 %v2233, 0.5
    %v2329 = vmul.f32 %v2237, 0.5
    %v2330 = vmul.f32 %v2241, 0.5
    %v2331 = vmul.f32 %v2245, 0.5
    %v2332 = vmul.f32 %v2249, 0.5
    %v2333 = vmul.f32 %v2253, 0.5
    %v2334 = vtanh.pop %v2326
    %v2335 = vtanh.pop %v2327
    %v2336 = vtanh.pop %v2328
    %v2337 = vtanh.pop %v2329
    %v2338 = vtanh.pop %v2330
    %v2339 = vtanh.pop %v2331
    %v2340 = vtanh.pop %v2332
    %v2341 = vtanh.pop %v2333
    %v2342 = vadd.f32 %v2334, 1.0
    %v2343 = vadd.f32 %v2335, 1.0
    %v2344 = vadd.f32 %v2336, 1.0
    %v2345 = vadd.f32 %v2337, 1.0
    %v2346 = vadd.f32 %v2338, 1.0
    %v2347 = vadd.f32 %v2339, 1.0
    %v2348 = vadd.f32 %v2340, 1.0
    %v2349 = vadd.f32 %v2341, 1.0
    %v2350 = vmul.f32 %v2342, 0.5
    %v2351 = vmul.f32 %v2343, 0.5
    %v2352 = vmul.f32 %v2344, 0.5
    %v2353 = vmul.f32 %v2345, 0.5
    %v2354 = vmul.f32 %v2346, 0.5
    %v2355 = vmul.f32 %v2347, 0.5
    %v2356 = vmul.f32 %v2348, 0.5
    %v2357 = vmul.f32 %v2349, 0.5
    %v2366 = vrot.slane %v1956, 7
    %v2367 = vrot.slane %v1957, 7
    %v2368 = vrot.slane %v1958, 7
    %v2369 = vrot.slane %v1959, 7
    %v2370 = vrot.slane %v1960, 7
    %v2371 = vrot.slane %v1961, 7
    %v2372 = vrot.slane %v1962, 7
    %v2373 = vrot.slane %v1963, 7
    %v2382 = vmul.f32 %v2310, %v2366
    %v2383 = vmul.f32 %v2311, %v2367
    %v2384 = vmul.f32 %v2312, %v2368
    %v2385 = vmul.f32 %v2313, %v2369
    %v2386 = vmul.f32 %v2314, %v2370
    %v2387 = vmul.f32 %v2315, %v2371
    %v2388 = vmul.f32 %v2316, %v2372
    %v2389 = vmul.f32 %v2317, %v2373
    %v2390 = vmul.f32 %v2278, %v2318
    %v2391 = vmul.f32 %v2279, %v2319
    %v2392 = vmul.f32 %v2280, %v2320
    %v2393 = vmul.f32 %v2281, %v2321
    %v2394 = vmul.f32 %v2282, %v2322
    %v2395 = vmul.f32 %v2283, %v2323
    %v2396 = vmul.f32 %v2284, %v2324
    %v2397 = vmul.f32 %v2285, %v2325
    %v2398 = vadd.f32 %v2382, %v2390
    %v2399 = vadd.f32 %v2383, %v2391
    %v2400 = vadd.f32 %v2384, %v2392
    %v2401 = vadd.f32 %v2385, %v2393
    %v2402 = vadd.f32 %v2386, %v2394
    %v2403 = vadd.f32 %v2387, %v2395
    %v2404 = vadd.f32 %v2388, %v2396
    %v2405 = vadd.f32 %v2389, %v2397
    %v2406 = vtanh.pop %v2398
    %v2407 = vtanh.pop %v2399
    %v2408 = vtanh.pop %v2400
    %v2409 = vtanh.pop %v2401
    %v2410 = vtanh.pop %v2402
    %v2411 = vtanh.pop %v2403
    %v2412 = vtanh.pop %v2404
    %v2413 = vtanh.pop %v2405
    %v2414 = vmul.f32 %v2350, %v2406
    %v2415 = vmul.f32 %v2351, %v2407
    %v2416 = vmul.f32 %v2352, %v2408
    %v2417 = vmul.f32 %v2353, %v2409
    %v2418 = vmul.f32 %v2354, %v2410
    %v2419 = vmul.f32 %v2355, %v2411
    %v2420 = vmul.f32 %v2356, %v2412
    %v2421 = vmul.f32 %v2357, %v2413
    %2422 = vst [vmem:[#allocation10] sm:$0x10] %v2414
    %2423 = vst [vmem:[#allocation10 + $0x8] sm:$0x10] %v2415
    %2424 = vst [vmem:[#allocation10 + $0x10] sm:$0x10] %v2416
    %2425 = vst [vmem:[#allocation10 + $0x18] sm:$0x10] %v2417
    %2426 = vst [vmem:[#allocation10 + $0x20] sm:$0x10] %v2418
    %2427 = vst [vmem:[#allocation10 + $0x28] sm:$0x10] %v2419
    %2428 = vst [vmem:[#allocation10 + $0x30] sm:$0x10] %v2420
    %2429 = vst [vmem:[#allocation10 + $0x38] sm:$0x10] %v2421
    %v2430 = vld [vmem:[#allocation4] sm:$0x44]
    %v2431 = vld [vmem:[#allocation4 + $0x8] sm:$0x44]
    %v2432 = vld [vmem:[#allocation4 + $0x10] sm:$0x44]
    %v2433 = vld [vmem:[#allocation4 + $0x18] sm:$0x44]
    %v2434 = vld [vmem:[#allocation4 + $0x20] sm:$0x44]
    %v2435 = vld [vmem:[#allocation4 + $0x28] sm:$0x44]
    %v2436 = vld [vmem:[#allocation4 + $0x30] sm:$0x44]
    %v2437 = vld [vmem:[#allocation4 + $0x38] sm:$0x44]
    %v2438 = vld [vmem:[#allocation4 + $0x40] sm:$0x44]
    %v2439 = vld [vmem:[#allocation4 + $0x48] sm:$0x44]
    %v2440 = vld [vmem:[#allocation4 + $0x50] sm:$0x44]
    %v2441 = vld [vmem:[#allocation4 + $0x58] sm:$0x44]
    %v2442 = vld [vmem:[#allocation4 + $0x60] sm:$0x44]
    %v2443 = vld [vmem:[#allocation4 + $0x68] sm:$0x44]
    %v2444 = vld [vmem:[#allocation4 + $0x70] sm:$0x44]
    %v2445 = vld [vmem:[#allocation4 + $0x78] sm:$0x44]
    %v2446 = vunpack.c.l.bf16 %v2430
    %v2447 = vunpack.c.h.bf16 %v2430
    %v2448 = vunpack.c.l.bf16 %v2431
    %v2449 = vunpack.c.h.bf16 %v2431
    %v2450 = vunpack.c.l.bf16 %v2432
    %v2451 = vunpack.c.h.bf16 %v2432
    %v2452 = vunpack.c.l.bf16 %v2433
    %v2453 = vunpack.c.h.bf16 %v2433
    %v2454 = vunpack.c.l.bf16 %v2434
    %v2455 = vunpack.c.h.bf16 %v2434
    %v2456 = vunpack.c.l.bf16 %v2435
    %v2457 = vunpack.c.h.bf16 %v2435
    %v2458 = vunpack.c.l.bf16 %v2436
    %v2459 = vunpack.c.h.bf16 %v2436
    %v2460 = vunpack.c.l.bf16 %v2437
    %v2461 = vunpack.c.h.bf16 %v2437
    %v2462 = vunpack.c.l.bf16 %v2438
    %v2463 = vunpack.c.h.bf16 %v2438
    %v2464 = vunpack.c.l.bf16 %v2439
    %v2465 = vunpack.c.h.bf16 %v2439
    %v2466 = vunpack.c.l.bf16 %v2440
    %v2467 = vunpack.c.h.bf16 %v2440
    %v2468 = vunpack.c.l.bf16 %v2441
    %v2469 = vunpack.c.h.bf16 %v2441
    %v2470 = vunpack.c.l.bf16 %v2442
    %v2471 = vunpack.c.h.bf16 %v2442
    %v2472 = vunpack.c.l.bf16 %v2443
    %v2473 = vunpack.c.h.bf16 %v2443
    %v2474 = vunpack.c.l.bf16 %v2444
    %v2475 = vunpack.c.h.bf16 %v2444
    %v2476 = vunpack.c.l.bf16 %v2445
    %v2477 = vunpack.c.h.bf16 %v2445
    %v2478 = vpack.c.bf16 %v2414, %v2414
    %v2479 = vpack.c.bf16 %v2415, %v2415
    %v2480 = vpack.c.bf16 %v2416, %v2416
    %v2481 = vpack.c.bf16 %v2417, %v2417
    %v2482 = vpack.c.bf16 %v2418, %v2418
    %v2483 = vpack.c.bf16 %v2419, %v2419
    %v2484 = vpack.c.bf16 %v2420, %v2420
    %v2485 = vpack.c.bf16 %v2421, %v2421
    %v2494 = vunpack.c.l.b16 %v2478
    %v2495 = vunpack.c.l.b16 %v2479
    %v2496 = vunpack.c.l.b16 %v2480
    %v2497 = vunpack.c.l.b16 %v2481
    %v2498 = vunpack.c.l.b16 %v2482
    %v2499 = vunpack.c.l.b16 %v2483
    %v2500 = vunpack.c.l.b16 %v2484
    %v2501 = vunpack.c.l.b16 %v2485
    %v2502 = vrot.slane %v2494, 4
    %v2503 = vrot.slane %v2495, 3
    %v2504 = vsel %vm728, %v2503, %v2502
    %v2505 = vrot.slane %v2496, 2
    %v2506 = vsel %vm731, %v2505, %v2504
    %v2507 = vrot.slane %v2497, 1
    %v2508 = vsel %vm734, %v2507, %v2506
    %v2509 = vsel %vm737, %v2498, %v2508
    %v2510 = vrot.slane %v2499, 7
    %v2511 = vsel %vm740, %v2510, %v2509
    %v2512 = vrot.slane %v2500, 6
    %v2513 = vsel %vm743, %v2512, %v2511
    %v2514 = vrot.slane %v2501, 5
    %v2515 = vsel %vm746, %v2514, %v2513
    %v2516 = vpack.c.b16 %v2515, %v2515
    %2518 = vmatprep.subr.bf16.mxu0 %v246
    %2519 = vmatpush1.bf16.msra.mxu0 %v245
    %2520 = vmatprep.subr.bf16.mxu0 %v250
    %2521 = vmatpush1.bf16.msra.mxu0 %v249
    %2522 = vmatprep.subr.bf16.mxu0 %v254
    %2523 = vmatpush1.bf16.msra.mxu0 %v253
    %2524 = vmatprep.subr.bf16.mxu0 %v258
    %2525 = vmatpush1.bf16.msra.mxu0 %v257
    %2526 = vmatprep.subr.bf16.mxu0 %v262
    %2527 = vmatpush1.bf16.msra.mxu0 %v261
    %2528 = vmatprep.subr.bf16.mxu0 %v266
    %2529 = vmatpush1.bf16.msra.mxu0 %v265
    %2530 = vmatprep.subr.bf16.mxu0 %v270
    %2531 = vmatpush1.bf16.msra.mxu0 %v269
    %2532 = vmatprep.subr.bf16.mxu0 %v274
    %2533 = vmatpush1.bf16.msra.mxu0 %v273
    %2534 = vmatprep.subr.bf16.mxu0 0
    %2535 = vmatpush1.bf16.msra.mxu0 0
    %2536 = vmatprep.subr.bf16.mxu0 0
    %2537 = vmatpush1.bf16.msra.mxu0 0
    %2538 = vmatprep.subr.bf16.mxu0 0
    %2539 = vmatpush1.bf16.msra.mxu0 0
    %2540 = vmatprep.subr.bf16.mxu0 0
    %2541 = vmatpush1.bf16.msra.mxu0 0
    %2542 = vmatprep.subr.bf16.mxu0 0
    %2543 = vmatpush1.bf16.msra.mxu0 0
    %2544 = vmatprep.subr.bf16.mxu0 0
    %2545 = vmatpush1.bf16.msra.mxu0 0
    %2546 = vmatprep.subr.bf16.mxu0 0
    %2547 = vmatpush1.bf16.msra.mxu0 0
    %2548 = vmatprep.subr.bf16.mxu0 0
    %2549 = vmatpush1.bf16.msra.mxu0 0
    %2550 = vmatprep.mubr.bf16.mxu0 0
    %2551 = vmatmul.mubr.bf16.gmra.mrb[0].mxu0 %v2516
    %v2552 = vpop.f32.mrb[0].mxu0
    %v2553 = vadd.f32 0.0, %v2552
    %v2554 = vpop.f32.mrb[0].mxu0
    %v2555 = vadd.f32 0.0, %v2554
    %v2556 = vpop.f32.mrb[0].mxu0
    %v2557 = vpop.f32.mrb[0].mxu0
    %2558 = vdwg.mxu0
    %2559 = vmatprep.subr.bf16.mxu0 %v248
    %2560 = vmatpush1.bf16.msra.mxu0 %v247
    %2561 = vmatprep.subr.bf16.mxu0 %v252
    %2562 = vmatpush1.bf16.msra.mxu0 %v251
    %2563 = vmatprep.subr.bf16.mxu0 %v256
    %2564 = vmatpush1.bf16.msra.mxu0 %v255
    %2565 = vmatprep.subr.bf16.mxu0 %v260
    %2566 = vmatpush1.bf16.msra.mxu0 %v259
    %2567 = vmatprep.subr.bf16.mxu0 %v264
    %2568 = vmatpush1.bf16.msra.mxu0 %v263
    %2569 = vmatprep.subr.bf16.mxu0 %v268
    %2570 = vmatpush1.bf16.msra.mxu0 %v267
    %2571 = vmatprep.subr.bf16.mxu0 %v272
    %2572 = vmatpush1.bf16.msra.mxu0 %v271
    %2573 = vmatprep.subr.bf16.mxu0 %v276
    %2574 = vmatpush1.bf16.msra.mxu0 %v275
    %2575 = vmatprep.subr.bf16.mxu0 0
    %2576 = vmatpush1.bf16.msra.mxu0 0
    %2577 = vmatprep.subr.bf16.mxu0 0
    %2578 = vmatpush1.bf16.msra.mxu0 0
    %2579 = vmatprep.subr.bf16.mxu0 0
    %2580 = vmatpush1.bf16.msra.mxu0 0
    %2581 = vmatprep.subr.bf16.mxu0 0
    %2582 = vmatpush1.bf16.msra.mxu0 0
    %2583 = vmatprep.subr.bf16.mxu0 0
    %2584 = vmatpush1.bf16.msra.mxu0 0
    %2585 = vmatprep.subr.bf16.mxu0 0
    %2586 = vmatpush1.bf16.msra.mxu0 0
    %2587 = vmatprep.subr.bf16.mxu0 0
    %2588 = vmatpush1.bf16.msra.mxu0 0
    %2589 = vmatprep.subr.bf16.mxu0 0
    %2590 = vmatpush1.bf16.msra.mxu0 0
    %2591 = vmatprep.mubr.bf16.mxu0 0
    %2592 = vmatmul.mubr.bf16.gmra.mrb[0].mxu0 %v2516
    %v2593 = vpop.f32.mrb[0].mxu0
    %v2594 = vadd.f32 0.0, %v2593
    %v2595 = vpop.f32.mrb[0].mxu0
    %v2596 = vadd.f32 0.0, %v2595
    %v2597 = vpop.f32.mrb[0].mxu0
    %v2598 = vpop.f32.mrb[0].mxu0
    %2599 = vdwg.mxu0
    %v2604 = vrot.slane %v2553, 3
    %v2605 = vrot.slane %v2555, 3
    %v2606 = vrot.slane %v2594, 3
    %v2607 = vrot.slane %v2596, 3
    %v2608 = vrot.slane %v2553, 4
    %v2609 = vrot.slane %v2555, 4
    %v2610 = vrot.slane %v2594, 4
    %v2611 = vrot.slane %v2596, 4
    %v2612 = vrot.slane %v2553, 5
    %v2613 = vrot.slane %v2555, 5
    %v2614 = vrot.slane %v2594, 5
    %v2615 = vrot.slane %v2596, 5
    %v2616 = vrot.slane %v2553, 6
    %v2617 = vrot.slane %v2555, 6
    %v2618 = vrot.slane %v2594, 6
    %v2619 = vrot.slane %v2596, 6
    %v2620 = vrot.slane %v2553, 7
    %v2621 = vrot.slane %v2555, 7
    %v2622 = vrot.slane %v2594, 7
    %v2623 = vrot.slane %v2596, 7
    %v2624 = vrot.slane %v2553, 1
    %v2625 = vrot.slane %v2555, 1
    %v2626 = vrot.slane %v2594, 1
    %v2627 = vrot.slane %v2596, 1
    %v2628 = vrot.slane %v2553, 2
    %v2629 = vrot.slane %v2555, 2
    %v2630 = vrot.slane %v2594, 2
    %v2631 = vrot.slane %v2596, 2
    %v2664 = vadd.f32 %v2446, %v2604
    %v2665 = vadd.f32 %v2447, %v2605
    %v2666 = vadd.f32 %v2448, %v2606
    %v2667 = vadd.f32 %v2449, %v2607
    %v2668 = vadd.f32 %v2450, %v2608
    %v2669 = vadd.f32 %v2451, %v2609
    %v2670 = vadd.f32 %v2452, %v2610
    %v2671 = vadd.f32 %v2453, %v2611
    %v2672 = vadd.f32 %v2454, %v2612
    %v2673 = vadd.f32 %v2455, %v2613
    %v2674 = vadd.f32 %v2456, %v2614
    %v2675 = vadd.f32 %v2457, %v2615
    %v2676 = vadd.f32 %v2458, %v2616
    %v2677 = vadd.f32 %v2459, %v2617
    %v2678 = vadd.f32 %v2460, %v2618
    %v2679 = vadd.f32 %v2461, %v2619
    %v2680 = vadd.f32 %v2462, %v2620
    %v2681 = vadd.f32 %v2463, %v2621
    %v2682 = vadd.f32 %v2464, %v2622
    %v2683 = vadd.f32 %v2465, %v2623
    %v2684 = vadd.f32 %v2466, %v2553
    %v2685 = vadd.f32 %v2467, %v2555
    %v2686 = vadd.f32 %v2468, %v2594
    %v2687 = vadd.f32 %v2469, %v2596
    %v2688 = vadd.f32 %v2470, %v2624
    %v2689 = vadd.f32 %v2471, %v2625
    %v2690 = vadd.f32 %v2472, %v2626
    %v2691 = vadd.f32 %v2473, %v2627
    %v2692 = vadd.f32 %v2474, %v2628
    %v2693 = vadd.f32 %v2475, %v2629
    %v2694 = vadd.f32 %v2476, %v2630
    %v2695 = vadd.f32 %v2477, %v2631
    %v2696 = vmul.f32 %v2664, 0.5
    %v2697 = vmul.f32 %v2668, 0.5
    %v2698 = vmul.f32 %v2672, 0.5
    %v2699 = vmul.f32 %v2676, 0.5
    %v2700 = vmul.f32 %v2680, 0.5
    %v2701 = vmul.f32 %v2684, 0.5
    %v2702 = vmul.f32 %v2688, 0.5
    %v2703 = vmul.f32 %v2692, 0.5
    %v2704 = vtanh.pop %v2696
    %v2705 = vtanh.pop %v2697
    %v2706 = vtanh.pop %v2698
    %v2707 = vtanh.pop %v2699
    %v2708 = vtanh.pop %v2700
    %v2709 = vtanh.pop %v2701
    %v2710 = vtanh.pop %v2702
    %v2711 = vtanh.pop %v2703
    %v2712 = vadd.f32 %v2704, 1.0
    %v2713 = vadd.f32 %v2705, 1.0
    %v2714 = vadd.f32 %v2706, 1.0
    %v2715 = vadd.f32 %v2707, 1.0
    %v2716 = vadd.f32 %v2708, 1.0
    %v2717 = vadd.f32 %v2709, 1.0
    %v2718 = vadd.f32 %v2710, 1.0
    %v2719 = vadd.f32 %v2711, 1.0
    %v2720 = vmul.f32 %v2712, 0.5
    %v2721 = vmul.f32 %v2713, 0.5
    %v2722 = vmul.f32 %v2714, 0.5
    %v2723 = vmul.f32 %v2715, 0.5
    %v2724 = vmul.f32 %v2716, 0.5
    %v2725 = vmul.f32 %v2717, 0.5
    %v2726 = vmul.f32 %v2718, 0.5
    %v2727 = vmul.f32 %v2719, 0.5
    %v2728 = vmul.f32 %v2665, 0.5
    %v2729 = vmul.f32 %v2669, 0.5
    %v2730 = vmul.f32 %v2673, 0.5
    %v2731 = vmul.f32 %v2677, 0.5
    %v2732 = vmul.f32 %v2681, 0.5
    %v2733 = vmul.f32 %v2685, 0.5
    %v2734 = vmul.f32 %v2689, 0.5
    %v2735 = vmul.f32 %v2693, 0.5
    %v2736 = vtanh.pop %v2728
    %v2737 = vtanh.pop %v2729
    %v2738 = vtanh.pop %v2730
    %v2739 = vtanh.pop %v2731
    %v2740 = vtanh.pop %v2732
    %v2741 = vtanh.pop %v2733
    %v2742 = vtanh.pop %v2734
    %v2743 = vtanh.pop %v2735
    %v2744 = vadd.f32 %v2736, 1.0
    %v2745 = vadd.f32 %v2737, 1.0
    %v2746 = vadd.f32 %v2738, 1.0
    %v2747 = vadd.f32 %v2739, 1.0
    %v2748 = vadd.f32 %v2740, 1.0
    %v2749 = vadd.f32 %v2741, 1.0
    %v2750 = vadd.f32 %v2742, 1.0
    %v2751 = vadd.f32 %v2743, 1.0
    %v2752 = vmul.f32 %v2744, 0.5
    %v2753 = vmul.f32 %v2745, 0.5
    %v2754 = vmul.f32 %v2746, 0.5
    %v2755 = vmul.f32 %v2747, 0.5
    %v2756 = vmul.f32 %v2748, 0.5
    %v2757 = vmul.f32 %v2749, 0.5
    %v2758 = vmul.f32 %v2750, 0.5
    %v2759 = vmul.f32 %v2751, 0.5
    %v2760 = vtanh.pop %v2666
    %v2761 = vtanh.pop %v2670
    %v2762 = vtanh.pop %v2674
    %v2763 = vtanh.pop %v2678
    %v2764 = vtanh.pop %v2682
    %v2765 = vtanh.pop %v2686
    %v2766 = vtanh.pop %v2690
    %v2767 = vtanh.pop %v2694
    %v2768 = vmul.f32 %v2667, 0.5
    %v2769 = vmul.f32 %v2671, 0.5
    %v2770 = vmul.f32 %v2675, 0.5
    %v2771 = vmul.f32 %v2679, 0.5
    %v2772 = vmul.f32 %v2683, 0.5
    %v2773 = vmul.f32 %v2687, 0.5
    %v2774 = vmul.f32 %v2691, 0.5
    %v2775 = vmul.f32 %v2695, 0.5
    %v2776 = vtanh.pop %v2768
    %v2777 = vtanh.pop %v2769
    %v2778 = vtanh.pop %v2770
    %v2779 = vtanh.pop %v2771
    %v2780 = vtanh.pop %v2772
    %v2781 = vtanh.pop %v2773
    %v2782 = vtanh.pop %v2774
    %v2783 = vtanh.pop %v2775
    %v2784 = vadd.f32 %v2776, 1.0
    %v2785 = vadd.f32 %v2777, 1.0
    %v2786 = vadd.f32 %v2778, 1.0
    %v2787 = vadd.f32 %v2779, 1.0
    %v2788 = vadd.f32 %v2780, 1.0
    %v2789 = vadd.f32 %v2781, 1.0
    %v2790 = vadd.f32 %v2782, 1.0
    %v2791 = vadd.f32 %v2783, 1.0
    %v2792 = vmul.f32 %v2784, 0.5
    %v2793 = vmul.f32 %v2785, 0.5
    %v2794 = vmul.f32 %v2786, 0.5
    %v2795 = vmul.f32 %v2787, 0.5
    %v2796 = vmul.f32 %v2788, 0.5
    %v2797 = vmul.f32 %v2789, 0.5
    %v2798 = vmul.f32 %v2790, 0.5
    %v2799 = vmul.f32 %v2791, 0.5
    %v2808 = vrot.slane %v2398, 7
    %v2809 = vrot.slane %v2399, 7
    %v2810 = vrot.slane %v2400, 7
    %v2811 = vrot.slane %v2401, 7
    %v2812 = vrot.slane %v2402, 7
    %v2813 = vrot.slane %v2403, 7
    %v2814 = vrot.slane %v2404, 7
    %v2815 = vrot.slane %v2405, 7
    %v2824 = vmul.f32 %v2752, %v2808
    %v2825 = vmul.f32 %v2753, %v2809
    %v2826 = vmul.f32 %v2754, %v2810
    %v2827 = vmul.f32 %v2755, %v2811
    %v2828 = vmul.f32 %v2756, %v2812
    %v2829 = vmul.f32 %v2757, %v2813
    %v2830 = vmul.f32 %v2758, %v2814
    %v2831 = vmul.f32 %v2759, %v2815
    %v2832 = vmul.f32 %v2720, %v2760
    %v2833 = vmul.f32 %v2721, %v2761
    %v2834 = vmul.f32 %v2722, %v2762
    %v2835 = vmul.f32 %v2723, %v2763
    %v2836 = vmul.f32 %v2724, %v2764
    %v2837 = vmul.f32 %v2725, %v2765
    %v2838 = vmul.f32 %v2726, %v2766
    %v2839 = vmul.f32 %v2727, %v2767
    %v2840 = vadd.f32 %v2824, %v2832
    %v2841 = vadd.f32 %v2825, %v2833
    %v2842 = vadd.f32 %v2826, %v2834
    %v2843 = vadd.f32 %v2827, %v2835
    %v2844 = vadd.f32 %v2828, %v2836
    %v2845 = vadd.f32 %v2829, %v2837
    %v2846 = vadd.f32 %v2830, %v2838
    %v2847 = vadd.f32 %v2831, %v2839
    %v2848 = vtanh.pop %v2840
    %v2849 = vtanh.pop %v2841
    %v2850 = vtanh.pop %v2842
    %v2851 = vtanh.pop %v2843
    %v2852 = vtanh.pop %v2844
    %v2853 = vtanh.pop %v2845
    %v2854 = vtanh.pop %v2846
    %v2855 = vtanh.pop %v2847
    %v2856 = vmul.f32 %v2792, %v2848
    %v2857 = vmul.f32 %v2793, %v2849
    %v2858 = vmul.f32 %v2794, %v2850
    %v2859 = vmul.f32 %v2795, %v2851
    %v2860 = vmul.f32 %v2796, %v2852
    %v2861 = vmul.f32 %v2797, %v2853
    %v2862 = vmul.f32 %v2798, %v2854
    %v2863 = vmul.f32 %v2799, %v2855
    %2864 = vst [vmem:[#allocation10] sm:$0x20] %v2856
    %2865 = vst [vmem:[#allocation10 + $0x8] sm:$0x20] %v2857
    %2866 = vst [vmem:[#allocation10 + $0x10] sm:$0x20] %v2858
    %2867 = vst [vmem:[#allocation10 + $0x18] sm:$0x20] %v2859
    %2868 = vst [vmem:[#allocation10 + $0x20] sm:$0x20] %v2860
    %2869 = vst [vmem:[#allocation10 + $0x28] sm:$0x20] %v2861
    %2870 = vst [vmem:[#allocation10 + $0x30] sm:$0x20] %v2862
    %2871 = vst [vmem:[#allocation10 + $0x38] sm:$0x20] %v2863
    %v2872 = vld [vmem:[#allocation4] sm:$0x88]
    %v2873 = vld [vmem:[#allocation4 + $0x8] sm:$0x88]
    %v2874 = vld [vmem:[#allocation4 + $0x10] sm:$0x88]
    %v2875 = vld [vmem:[#allocation4 + $0x18] sm:$0x88]
    %v2876 = vld [vmem:[#allocation4 + $0x20] sm:$0x88]
    %v2877 = vld [vmem:[#allocation4 + $0x28] sm:$0x88]
    %v2878 = vld [vmem:[#allocation4 + $0x30] sm:$0x88]
    %v2879 = vld [vmem:[#allocation4 + $0x38] sm:$0x88]
    %v2880 = vld [vmem:[#allocation4 + $0x40] sm:$0x88]
    %v2881 = vld [vmem:[#allocation4 + $0x48] sm:$0x88]
    %v2882 = vld [vmem:[#allocation4 + $0x50] sm:$0x88]
    %v2883 = vld [vmem:[#allocation4 + $0x58] sm:$0x88]
    %v2884 = vld [vmem:[#allocation4 + $0x60] sm:$0x88]
    %v2885 = vld [vmem:[#allocation4 + $0x68] sm:$0x88]
    %v2886 = vld [vmem:[#allocation4 + $0x70] sm:$0x88]
    %v2887 = vld [vmem:[#allocation4 + $0x78] sm:$0x88]
    %v2888 = vunpack.c.l.bf16 %v2872
    %v2889 = vunpack.c.h.bf16 %v2872
    %v2890 = vunpack.c.l.bf16 %v2873
    %v2891 = vunpack.c.h.bf16 %v2873
    %v2892 = vunpack.c.l.bf16 %v2874
    %v2893 = vunpack.c.h.bf16 %v2874
    %v2894 = vunpack.c.l.bf16 %v2875
    %v2895 = vunpack.c.h.bf16 %v2875
    %v2896 = vunpack.c.l.bf16 %v2876
    %v2897 = vunpack.c.h.bf16 %v2876
    %v2898 = vunpack.c.l.bf16 %v2877
    %v2899 = vunpack.c.h.bf16 %v2877
    %v2900 = vunpack.c.l.bf16 %v2878
    %v2901 = vunpack.c.h.bf16 %v2878
    %v2902 = vunpack.c.l.bf16 %v2879
    %v2903 = vunpack.c.h.bf16 %v2879
    %v2904 = vunpack.c.l.bf16 %v2880
    %v2905 = vunpack.c.h.bf16 %v2880
    %v2906 = vunpack.c.l.bf16 %v2881
    %v2907 = vunpack.c.h.bf16 %v2881
    %v2908 = vunpack.c.l.bf16 %v2882
    %v2909 = vunpack.c.h.bf16 %v2882
    %v2910 = vunpack.c.l.bf16 %v2883
    %v2911 = vunpack.c.h.bf16 %v2883
    %v2912 = vunpack.c.l.bf16 %v2884
    %v2913 = vunpack.c.h.bf16 %v2884
    %v2914 = vunpack.c.l.bf16 %v2885
    %v2915 = vunpack.c.h.bf16 %v2885
    %v2916 = vunpack.c.l.bf16 %v2886
    %v2917 = vunpack.c.h.bf16 %v2886
    %v2918 = vunpack.c.l.bf16 %v2887
    %v2919 = vunpack.c.h.bf16 %v2887
    %v2920 = vpack.c.bf16 %v2856, %v2856
    %v2921 = vpack.c.bf16 %v2857, %v2857
    %v2922 = vpack.c.bf16 %v2858, %v2858
    %v2923 = vpack.c.bf16 %v2859, %v2859
    %v2924 = vpack.c.bf16 %v2860, %v2860
    %v2925 = vpack.c.bf16 %v2861, %v2861
    %v2926 = vpack.c.bf16 %v2862, %v2862
    %v2927 = vpack.c.bf16 %v2863, %v2863
    %v2936 = vunpack.c.l.b16 %v2920
    %v2937 = vunpack.c.l.b16 %v2921
    %v2938 = vunpack.c.l.b16 %v2922
    %v2939 = vunpack.c.l.b16 %v2923
    %v2940 = vunpack.c.l.b16 %v2924
    %v2941 = vunpack.c.l.b16 %v2925
    %v2942 = vunpack.c.l.b16 %v2926
    %v2943 = vunpack.c.l.b16 %v2927
    %v2944 = vrot.slane %v2936, 5
    %v2945 = vrot.slane %v2937, 4
    %v2946 = vsel %vm728, %v2945, %v2944
    %v2947 = vrot.slane %v2938, 3
    %v2948 = vsel %vm731, %v2947, %v2946
    %v2949 = vrot.slane %v2939, 2
    %v2950 = vsel %vm734, %v2949, %v2948
    %v2951 = vrot.slane %v2940, 1
    %v2952 = vsel %vm737, %v2951, %v2950
    %v2953 = vsel %vm740, %v2941, %v2952
    %v2954 = vrot.slane %v2942, 7
    %v2955 = vsel %vm743, %v2954, %v2953
    %v2956 = vrot.slane %v2943, 6
    %v2957 = vsel %vm746, %v2956, %v2955
    %v2958 = vpack.c.b16 %v2957, %v2957
    %2960 = vmatprep.subr.bf16.mxu0 %v246
    %2961 = vmatpush1.bf16.msra.mxu0 %v245
    %2962 = vmatprep.subr.bf16.mxu0 %v250
    %2963 = vmatpush1.bf16.msra.mxu0 %v249
    %2964 = vmatprep.subr.bf16.mxu0 %v254
    %2965 = vmatpush1.bf16.msra.mxu0 %v253
    %2966 = vmatprep.subr.bf16.mxu0 %v258
    %2967 = vmatpush1.bf16.msra.mxu0 %v257
    %2968 = vmatprep.subr.bf16.mxu0 %v262
    %2969 = vmatpush1.bf16.msra.mxu0 %v261
    %2970 = vmatprep.subr.bf16.mxu0 %v266
    %2971 = vmatpush1.bf16.msra.mxu0 %v265
    %2972 = vmatprep.subr.bf16.mxu0 %v270
    %2973 = vmatpush1.bf16.msra.mxu0 %v269
    %2974 = vmatprep.subr.bf16.mxu0 %v274
    %2975 = vmatpush1.bf16.msra.mxu0 %v273
    %2976 = vmatprep.subr.bf16.mxu0 0
    %2977 = vmatpush1.bf16.msra.mxu0 0
    %2978 = vmatprep.subr.bf16.mxu0 0
    %2979 = vmatpush1.bf16.msra.mxu0 0
    %2980 = vmatprep.subr.bf16.mxu0 0
    %2981 = vmatpush1.bf16.msra.mxu0 0
    %2982 = vmatprep.subr.bf16.mxu0 0
    %2983 = vmatpush1.bf16.msra.mxu0 0
    %2984 = vmatprep.subr.bf16.mxu0 0
    %2985 = vmatpush1.bf16.msra.mxu0 0
    %2986 = vmatprep.subr.bf16.mxu0 0
    %2987 = vmatpush1.bf16.msra.mxu0 0
    %2988 = vmatprep.subr.bf16.mxu0 0
    %2989 = vmatpush1.bf16.msra.mxu0 0
    %2990 = vmatprep.subr.bf16.mxu0 0
    %2991 = vmatpush1.bf16.msra.mxu0 0
    %2992 = vmatprep.mubr.bf16.mxu0 0
    %2993 = vmatmul.mubr.bf16.gmra.mrb[0].mxu0 %v2958
    %v2994 = vpop.f32.mrb[0].mxu0
    %v2995 = vadd.f32 0.0, %v2994
    %v2996 = vpop.f32.mrb[0].mxu0
    %v2997 = vadd.f32 0.0, %v2996
    %v2998 = vpop.f32.mrb[0].mxu0
    %v2999 = vpop.f32.mrb[0].mxu0
    %3000 = vdwg.mxu0
    %3001 = vmatprep.subr.bf16.mxu0 %v248
    %3002 = vmatpush1.bf16.msra.mxu0 %v247
    %3003 = vmatprep.subr.bf16.mxu0 %v252
    %3004 = vmatpush1.bf16.msra.mxu0 %v251
    %3005 = vmatprep.subr.bf16.mxu0 %v256
    %3006 = vmatpush1.bf16.msra.mxu0 %v255
    %3007 = vmatprep.subr.bf16.mxu0 %v260
    %3008 = vmatpush1.bf16.msra.mxu0 %v259
    %3009 = vmatprep.subr.bf16.mxu0 %v264
    %3010 = vmatpush1.bf16.msra.mxu0 %v263
    %3011 = vmatprep.subr.bf16.mxu0 %v268
    %3012 = vmatpush1.bf16.msra.mxu0 %v267
    %3013 = vmatprep.subr.bf16.mxu0 %v272
    %3014 = vmatpush1.bf16.msra.mxu0 %v271
    %3015 = vmatprep.subr.bf16.mxu0 %v276
    %3016 = vmatpush1.bf16.msra.mxu0 %v275
    %3017 = vmatprep.subr.bf16.mxu0 0
    %3018 = vmatpush1.bf16.msra.mxu0 0
    %3019 = vmatprep.subr.bf16.mxu0 0
    %3020 = vmatpush1.bf16.msra.mxu0 0
    %3021 = vmatprep.subr.bf16.mxu0 0
    %3022 = vmatpush1.bf16.msra.mxu0 0
    %3023 = vmatprep.subr.bf16.mxu0 0
    %3024 = vmatpush1.bf16.msra.mxu0 0
    %3025 = vmatprep.subr.bf16.mxu0 0
    %3026 = vmatpush1.bf16.msra.mxu0 0
    %3027 = vmatprep.subr.bf16.mxu0 0
    %3028 = vmatpush1.bf16.msra.mxu0 0
    %3029 = vmatprep.subr.bf16.mxu0 0
    %3030 = vmatpush1.bf16.msra.mxu0 0
    %3031 = vmatprep.subr.bf16.mxu0 0
    %3032 = vmatpush1.bf16.msra.mxu0 0
    %3033 = vmatprep.mubr.bf16.mxu0 0
    %3034 = vmatmul.mubr.bf16.gmra.mrb[0].mxu0 %v2958
    %v3035 = vpop.f32.mrb[0].mxu0
    %v3036 = vadd.f32 0.0, %v3035
    %v3037 = vpop.f32.mrb[0].mxu0
    %v3038 = vadd.f32 0.0, %v3037
    %v3039 = vpop.f32.mrb[0].mxu0
    %v3040 = vpop.f32.mrb[0].mxu0
    %3041 = vdwg.mxu0
    %v3046 = vrot.slane %v2995, 2
    %v3047 = vrot.slane %v2997, 2
    %v3048 = vrot.slane %v3036, 2
    %v3049 = vrot.slane %v3038, 2
    %v3050 = vrot.slane %v2995, 3
    %v3051 = vrot.slane %v2997, 3
    %v3052 = vrot.slane %v3036, 3
    %v3053 = vrot.slane %v3038, 3
    %v3054 = vrot.slane %v2995, 4
    %v3055 = vrot.slane %v2997, 4
    %v3056 = vrot.slane %v3036, 4
    %v3057 = vrot.slane %v3038, 4
    %v3058 = vrot.slane %v2995, 5
    %v3059 = vrot.slane %v2997, 5
    %v3060 = vrot.slane %v3036, 5
    %v3061 = vrot.slane %v3038, 5
    %v3062 = vrot.slane %v2995, 6
    %v3063 = vrot.slane %v2997, 6
    %v3064 = vrot.slane %v3036, 6
    %v3065 = vrot.slane %v3038, 6
    %v3066 = vrot.slane %v2995, 7
    %v3067 = vrot.slane %v2997, 7
    %v3068 = vrot.slane %v3036, 7
    %v3069 = vrot.slane %v3038, 7
    %v3070 = vrot.slane %v2995, 1
    %v3071 = vrot.slane %v2997, 1
    %v3072 = vrot.slane %v3036, 1
    %v3073 = vrot.slane %v3038, 1
    %v3106 = vadd.f32 %v2888, %v3046
    %v3107 = vadd.f32 %v2889, %v3047
    %v3108 = vadd.f32 %v2890, %v3048
    %v3109 = vadd.f32 %v2891, %v3049
    %v3110 = vadd.f32 %v2892, %v3050
    %v3111 = vadd.f32 %v2893, %v3051
    %v3112 = vadd.f32 %v2894, %v3052
    %v3113 = vadd.f32 %v2895, %v3053
    %v3114 = vadd.f32 %v2896, %v3054
    %v3115 = vadd.f32 %v2897, %v3055
    %v3116 = vadd.f32 %v2898, %v3056
    %v3117 = vadd.f32 %v2899, %v3057
    %v3118 = vadd.f32 %v2900, %v3058
    %v3119 = vadd.f32 %v2901, %v3059
    %v3120 = vadd.f32 %v2902, %v3060
    %v3121 = vadd.f32 %v2903, %v3061
    %v3122 = vadd.f32 %v2904, %v3062
    %v3123 = vadd.f32 %v2905, %v3063
    %v3124 = vadd.f32 %v2906, %v3064
    %v3125 = vadd.f32 %v2907, %v3065
    %v3126 = vadd.f32 %v2908, %v3066
    %v3127 = vadd.f32 %v2909, %v3067
    %v3128 = vadd.f32 %v2910, %v3068
    %v3129 = vadd.f32 %v2911, %v3069
    %v3130 = vadd.f32 %v2912, %v2995
    %v3131 = vadd.f32 %v2913, %v2997
    %v3132 = vadd.f32 %v2914, %v3036
    %v3133 = vadd.f32 %v2915, %v3038
    %v3134 = vadd.f32 %v2916, %v3070
    %v3135 = vadd.f32 %v2917, %v3071
    %v3136 = vadd.f32 %v2918, %v3072
    %v3137 = vadd.f32 %v2919, %v3073
    %v3138 = vmul.f32 %v3106, 0.5
    %v3139 = vmul.f32 %v3110, 0.5
    %v3140 = vmul.f32 %v3114, 0.5
    %v3141 = vmul.f32 %v3118, 0.5
    %v3142 = vmul.f32 %v3122, 0.5
    %v3143 = vmul.f32 %v3126, 0.5
    %v3144 = vmul.f32 %v3130, 0.5
    %v3145 = vmul.f32 %v3134, 0.5
    %v3146 = vtanh.pop %v3138
    %v3147 = vtanh.pop %v3139
    %v3148 = vtanh.pop %v3140
    %v3149 = vtanh.pop %v3141
    %v3150 = vtanh.pop %v3142
    %v3151 = vtanh.pop %v3143
    %v3152 = vtanh.pop %v3144
    %v3153 = vtanh.pop %v3145
    %v3154 = vadd.f32 %v3146, 1.0
    %v3155 = vadd.f32 %v3147, 1.0
    %v3156 = vadd.f32 %v3148, 1.0
    %v3157 = vadd.f32 %v3149, 1.0
    %v3158 = vadd.f32 %v3150, 1.0
    %v3159 = vadd.f32 %v3151, 1.0
    %v3160 = vadd.f32 %v3152, 1.0
    %v3161 = vadd.f32 %v3153, 1.0
    %v3162 = vmul.f32 %v3154, 0.5
    %v3163 = vmul.f32 %v3155, 0.5
    %v3164 = vmul.f32 %v3156, 0.5
    %v3165 = vmul.f32 %v3157, 0.5
    %v3166 = vmul.f32 %v3158, 0.5
    %v3167 = vmul.f32 %v3159, 0.5
    %v3168 = vmul.f32 %v3160, 0.5
    %v3169 = vmul.f32 %v3161, 0.5
    %v3170 = vmul.f32 %v3107, 0.5
    %v3171 = vmul.f32 %v3111, 0.5
    %v3172 = vmul.f32 %v3115, 0.5
    %v3173 = vmul.f32 %v3119, 0.5
    %v3174 = vmul.f32 %v3123, 0.5
    %v3175 = vmul.f32 %v3127, 0.5
    %v3176 = vmul.f32 %v3131, 0.5
    %v3177 = vmul.f32 %v3135, 0.5
    %v3178 = vtanh.pop %v3170
    %v3179 = vtanh.pop %v3171
    %v3180 = vtanh.pop %v3172
    %v3181 = vtanh.pop %v3173
    %v3182 = vtanh.pop %v3174
    %v3183 = vtanh.pop %v3175
    %v3184 = vtanh.pop %v3176
    %v3185 = vtanh.pop %v3177
    %v3186 = vadd.f32 %v3178, 1.0
    %v3187 = vadd.f32 %v3179, 1.0
    %v3188 = vadd.f32 %v3180, 1.0
    %v3189 = vadd.f32 %v3181, 1.0
    %v3190 = vadd.f32 %v3182, 1.0
    %v3191 = vadd.f32 %v3183, 1.0
    %v3192 = vadd.f32 %v3184, 1.0
    %v3193 = vadd.f32 %v3185, 1.0
    %v3194 = vmul.f32 %v3186, 0.5
    %v3195 = vmul.f32 %v3187, 0.5
    %v3196 = vmul.f32 %v3188, 0.5
    %v3197 = vmul.f32 %v3189, 0.5
    %v3198 = vmul.f32 %v3190, 0.5
    %v3199 = vmul.f32 %v3191, 0.5
    %v3200 = vmul.f32 %v3192, 0.5
    %v3201 = vmul.f32 %v3193, 0.5
    %v3202 = vtanh.pop %v3108
    %v3203 = vtanh.pop %v3112
    %v3204 = vtanh.pop %v3116
    %v3205 = vtanh.pop %v3120
    %v3206 = vtanh.pop %v3124
    %v3207 = vtanh.pop %v3128
    %v3208 = vtanh.pop %v3132
    %v3209 = vtanh.pop %v3136
    %v3210 = vmul.f32 %v3109, 0.5
    %v3211 = vmul.f32 %v3113, 0.5
    %v3212 = vmul.f32 %v3117, 0.5
    %v3213 = vmul.f32 %v3121, 0.5
    %v3214 = vmul.f32 %v3125, 0.5
    %v3215 = vmul.f32 %v3129, 0.5
    %v3216 = vmul.f32 %v3133, 0.5
    %v3217 = vmul.f32 %v3137, 0.5
    %v3218 = vtanh.pop %v3210
    %v3219 = vtanh.pop %v3211
    %v3220 = vtanh.pop %v3212
    %v3221 = vtanh.pop %v3213
    %v3222 = vtanh.pop %v3214
    %v3223 = vtanh.pop %v3215
    %v3224 = vtanh.pop %v3216
    %v3225 = vtanh.pop %v3217
    %v3226 = vadd.f32 %v3218, 1.0
    %v3227 = vadd.f32 %v3219, 1.0
    %v3228 = vadd.f32 %v3220, 1.0
    %v3229 = vadd.f32 %v3221, 1.0
    %v3230 = vadd.f32 %v3222, 1.0
    %v3231 = vadd.f32 %v3223, 1.0
    %v3232 = vadd.f32 %v3224, 1.0
    %v3233 = vadd.f32 %v3225, 1.0
    %v3234 = vmul.f32 %v3226, 0.5
    %v3235 = vmul.f32 %v3227, 0.5
    %v3236 = vmul.f32 %v3228, 0.5
    %v3237 = vmul.f32 %v3229, 0.5
    %v3238 = vmul.f32 %v3230, 0.5
    %v3239 = vmul.f32 %v3231, 0.5
    %v3240 = vmul.f32 %v3232, 0.5
    %v3241 = vmul.f32 %v3233, 0.5
    %v3250 = vrot.slane %v2840, 7
    %v3251 = vrot.slane %v2841, 7
    %v3252 = vrot.slane %v2842, 7
    %v3253 = vrot.slane %v2843, 7
    %v3254 = vrot.slane %v2844, 7
    %v3255 = vrot.slane %v2845, 7
    %v3256 = vrot.slane %v2846, 7
    %v3257 = vrot.slane %v2847, 7
    %v3266 = vmul.f32 %v3194, %v3250
    %v3267 = vmul.f32 %v3195, %v3251
    %v3268 = vmul.f32 %v3196, %v3252
    %v3269 = vmul.f32 %v3197, %v3253
    %v3270 = vmul.f32 %v3198, %v3254
    %v3271 = vmul.f32 %v3199, %v3255
    %v3272 = vmul.f32 %v3200, %v3256
    %v3273 = vmul.f32 %v3201, %v3257
    %v3274 = vmul.f32 %v3162, %v3202
    %v3275 = vmul.f32 %v3163, %v3203
    %v3276 = vmul.f32 %v3164, %v3204
    %v3277 = vmul.f32 %v3165, %v3205
    %v3278 = vmul.f32 %v3166, %v3206
    %v3279 = vmul.f32 %v3167, %v3207
    %v3280 = vmul.f32 %v3168, %v3208
    %v3281 = vmul.f32 %v3169, %v3209
    %v3282 = vadd.f32 %v3266, %v3274
    %v3283 = vadd.f32 %v3267, %v3275
    %v3284 = vadd.f32 %v3268, %v3276
    %v3285 = vadd.f32 %v3269, %v3277
    %v3286 = vadd.f32 %v3270, %v3278
    %v3287 = vadd.f32 %v3271, %v3279
    %v3288 = vadd.f32 %v3272, %v3280
    %v3289 = vadd.f32 %v3273, %v3281
    %v3290 = vtanh.pop %v3282
    %v3291 = vtanh.pop %v3283
    %v3292 = vtanh.pop %v3284
    %v3293 = vtanh.pop %v3285
    %v3294 = vtanh.pop %v3286
    %v3295 = vtanh.pop %v3287
    %v3296 = vtanh.pop %v3288
    %v3297 = vtanh.pop %v3289
    %v3298 = vmul.f32 %v3234, %v3290
    %v3299 = vmul.f32 %v3235, %v3291
    %v3300 = vmul.f32 %v3236, %v3292
    %v3301 = vmul.f32 %v3237, %v3293
    %v3302 = vmul.f32 %v3238, %v3294
    %v3303 = vmul.f32 %v3239, %v3295
    %v3304 = vmul.f32 %v3240, %v3296
    %v3305 = vmul.f32 %v3241, %v3297
    %3306 = vst [vmem:[#allocation10] sm:$0x40] %v3298
    %3307 = vst [vmem:[#allocation10 + $0x8] sm:$0x40] %v3299
    %3308 = vst [vmem:[#allocation10 + $0x10] sm:$0x40] %v3300
    %3309 = vst [vmem:[#allocation10 + $0x18] sm:$0x40] %v3301
    %3310 = vst [vmem:[#allocation10 + $0x20] sm:$0x40] %v3302
    %3311 = vst [vmem:[#allocation10 + $0x28] sm:$0x40] %v3303
    %3312 = vst [vmem:[#allocation10 + $0x30] sm:$0x40] %v3304
    %3313 = vst [vmem:[#allocation10 + $0x38] sm:$0x40] %v3305
    %v3314 = vld [vmem:[#allocation4] sm:$0x88]
    %v3315 = vld [vmem:[#allocation4 + $0x8] sm:$0x88]
    %v3316 = vld [vmem:[#allocation4 + $0x10] sm:$0x88]
    %v3317 = vld [vmem:[#allocation4 + $0x18] sm:$0x88]
    %v3318 = vld [vmem:[#allocation4 + $0x20] sm:$0x88]
    %v3319 = vld [vmem:[#allocation4 + $0x28] sm:$0x88]
    %v3320 = vld [vmem:[#allocation4 + $0x30] sm:$0x88]
    %v3321 = vld [vmem:[#allocation4 + $0x38] sm:$0x88]
    %v3322 = vld [vmem:[#allocation4 + $0x40] sm:$0x88]
    %v3323 = vld [vmem:[#allocation4 + $0x48] sm:$0x88]
    %v3324 = vld [vmem:[#allocation4 + $0x50] sm:$0x88]
    %v3325 = vld [vmem:[#allocation4 + $0x58] sm:$0x88]
    %v3326 = vld [vmem:[#allocation4 + $0x60] sm:$0x88]
    %v3327 = vld [vmem:[#allocation4 + $0x68] sm:$0x88]
    %v3328 = vld [vmem:[#allocation4 + $0x70] sm:$0x88]
    %v3329 = vld [vmem:[#allocation4 + $0x78] sm:$0x88]
    %v3330 = vunpack.c.l.bf16 %v3314
    %v3331 = vunpack.c.h.bf16 %v3314
    %v3332 = vunpack.c.l.bf16 %v3315
    %v3333 = vunpack.c.h.bf16 %v3315
    %v3334 = vunpack.c.l.bf16 %v3316
    %v3335 = vunpack.c.h.bf16 %v3316
    %v3336 = vunpack.c.l.bf16 %v3317
    %v3337 = vunpack.c.h.bf16 %v3317
    %v3338 = vunpack.c.l.bf16 %v3318
    %v3339 = vunpack.c.h.bf16 %v3318
    %v3340 = vunpack.c.l.bf16 %v3319
    %v3341 = vunpack.c.h.bf16 %v3319
    %v3342 = vunpack.c.l.bf16 %v3320
    %v3343 = vunpack.c.h.bf16 %v3320
    %v3344 = vunpack.c.l.bf16 %v3321
    %v3345 = vunpack.c.h.bf16 %v3321
    %v3346 = vunpack.c.l.bf16 %v3322
    %v3347 = vunpack.c.h.bf16 %v3322
    %v3348 = vunpack.c.l.bf16 %v3323
    %v3349 = vunpack.c.h.bf16 %v3323
    %v3350 = vunpack.c.l.bf16 %v3324
    %v3351 = vunpack.c.h.bf16 %v3324
    %v3352 = vunpack.c.l.bf16 %v3325
    %v3353 = vunpack.c.h.bf16 %v3325
    %v3354 = vunpack.c.l.bf16 %v3326
    %v3355 = vunpack.c.h.bf16 %v3326
    %v3356 = vunpack.c.l.bf16 %v3327
    %v3357 = vunpack.c.h.bf16 %v3327
    %v3358 = vunpack.c.l.bf16 %v3328
    %v3359 = vunpack.c.h.bf16 %v3328
    %v3360 = vunpack.c.l.bf16 %v3329
    %v3361 = vunpack.c.h.bf16 %v3329
    %v3362 = vpack.c.bf16 %v3298, %v3298
    %v3363 = vpack.c.bf16 %v3299, %v3299
    %v3364 = vpack.c.bf16 %v3300, %v3300
    %v3365 = vpack.c.bf16 %v3301, %v3301
    %v3366 = vpack.c.bf16 %v3302, %v3302
    %v3367 = vpack.c.bf16 %v3303, %v3303
    %v3368 = vpack.c.bf16 %v3304, %v3304
    %v3369 = vpack.c.bf16 %v3305, %v3305
    %v3378 = vunpack.c.l.b16 %v3362
    %v3379 = vunpack.c.l.b16 %v3363
    %v3380 = vunpack.c.l.b16 %v3364
    %v3381 = vunpack.c.l.b16 %v3365
    %v3382 = vunpack.c.l.b16 %v3366
    %v3383 = vunpack.c.l.b16 %v3367
    %v3384 = vunpack.c.l.b16 %v3368
    %v3385 = vunpack.c.l.b16 %v3369
    %v3386 = vrot.slane %v3378, 6
    %v3387 = vrot.slane %v3379, 5
    %v3388 = vsel %vm728, %v3387, %v3386
    %v3389 = vrot.slane %v3380, 4
    %v3390 = vsel %vm731, %v3389, %v3388
    %v3391 = vrot.slane %v3381, 3
    %v3392 = vsel %vm734, %v3391, %v3390
    %v3393 = vrot.slane %v3382, 2
    %v3394 = vsel %vm737, %v3393, %v3392
    %v3395 = vrot.slane %v3383, 1
    %v3396 = vsel %vm740, %v3395, %v3394
    %v3397 = vsel %vm743, %v3384, %v3396
    %v3398 = vrot.slane %v3385, 7
    %v3399 = vsel %vm746, %v3398, %v3397
    %v3400 = vpack.c.b16 %v3399, %v3399
    %3402 = vmatprep.subr.bf16.mxu0 %v246
    %3403 = vmatpush1.bf16.msra.mxu0 %v245
    %3404 = vmatprep.subr.bf16.mxu0 %v250
    %3405 = vmatpush1.bf16.msra.mxu0 %v249
    %3406 = vmatprep.subr.bf16.mxu0 %v254
    %3407 = vmatpush1.bf16.msra.mxu0 %v253
    %3408 = vmatprep.subr.bf16.mxu0 %v258
    %3409 = vmatpush1.bf16.msra.mxu0 %v257
    %3410 = vmatprep.subr.bf16.mxu0 %v262
    %3411 = vmatpush1.bf16.msra.mxu0 %v261
    %3412 = vmatprep.subr.bf16.mxu0 %v266
    %3413 = vmatpush1.bf16.msra.mxu0 %v265
    %3414 = vmatprep.subr.bf16.mxu0 %v270
    %3415 = vmatpush1.bf16.msra.mxu0 %v269
    %3416 = vmatprep.subr.bf16.mxu0 %v274
    %3417 = vmatpush1.bf16.msra.mxu0 %v273
    %3418 = vmatprep.subr.bf16.mxu0 0
    %3419 = vmatpush1.bf16.msra.mxu0 0
    %3420 = vmatprep.subr.bf16.mxu0 0
    %3421 = vmatpush1.bf16.msra.mxu0 0
    %3422 = vmatprep.subr.bf16.mxu0 0
    %3423 = vmatpush1.bf16.msra.mxu0 0
    %3424 = vmatprep.subr.bf16.mxu0 0
    %3425 = vmatpush1.bf16.msra.mxu0 0
    %3426 = vmatprep.subr.bf16.mxu0 0
    %3427 = vmatpush1.bf16.msra.mxu0 0
    %3428 = vmatprep.subr.bf16.mxu0 0
    %3429 = vmatpush1.bf16.msra.mxu0 0
    %3430 = vmatprep.subr.bf16.mxu0 0
    %3431 = vmatpush1.bf16.msra.mxu0 0
    %3432 = vmatprep.subr.bf16.mxu0 0
    %3433 = vmatpush1.bf16.msra.mxu0 0
    %3434 = vmatprep.mubr.bf16.mxu0 0
    %3435 = vmatmul.mubr.bf16.gmra.mrb[0].mxu0 %v3400
    %v3436 = vpop.f32.mrb[0].mxu0
    %v3437 = vadd.f32 0.0, %v3436
    %v3438 = vpop.f32.mrb[0].mxu0
    %v3439 = vadd.f32 0.0, %v3438
    %v3440 = vpop.f32.mrb[0].mxu0
    %v3441 = vpop.f32.mrb[0].mxu0
    %3442 = vdwg.mxu0
    %3443 = vmatprep.subr.bf16.mxu0 %v248
    %3444 = vmatpush1.bf16.msra.mxu0 %v247
    %3445 = vmatprep.subr.bf16.mxu0 %v252
    %3446 = vmatpush1.bf16.msra.mxu0 %v251
    %3447 = vmatprep.subr.bf16.mxu0 %v256
    %3448 = vmatpush1.bf16.msra.mxu0 %v255
    %3449 = vmatprep.subr.bf16.mxu0 %v260
    %3450 = vmatpush1.bf16.msra.mxu0 %v259
    %3451 = vmatprep.subr.bf16.mxu0 %v264
    %3452 = vmatpush1.bf16.msra.mxu0 %v263
    %3453 = vmatprep.subr.bf16.mxu0 %v268
    %3454 = vmatpush1.bf16.msra.mxu0 %v267
    %3455 = vmatprep.subr.bf16.mxu0 %v272
    %3456 = vmatpush1.bf16.msra.mxu0 %v271
    %3457 = vmatprep.subr.bf16.mxu0 %v276
    %3458 = vmatpush1.bf16.msra.mxu0 %v275
    %3459 = vmatprep.subr.bf16.mxu0 0
    %3460 = vmatpush1.bf16.msra.mxu0 0
    %3461 = vmatprep.subr.bf16.mxu0 0
    %3462 = vmatpush1.bf16.msra.mxu0 0
    %3463 = vmatprep.subr.bf16.mxu0 0
    %3464 = vmatpush1.bf16.msra.mxu0 0
    %3465 = vmatprep.subr.bf16.mxu0 0
    %3466 = vmatpush1.bf16.msra.mxu0 0
    %3467 = vmatprep.subr.bf16.mxu0 0
    %3468 = vmatpush1.bf16.msra.mxu0 0
    %3469 = vmatprep.subr.bf16.mxu0 0
    %3470 = vmatpush1.bf16.msra.mxu0 0
    %3471 = vmatprep.subr.bf16.mxu0 0
    %3472 = vmatpush1.bf16.msra.mxu0 0
    %3473 = vmatprep.subr.bf16.mxu0 0
    %3474 = vmatpush1.bf16.msra.mxu0 0
    %3475 = vmatprep.mubr.bf16.mxu0 0
    %3476 = vmatmul.mubr.bf16.gmra.mrb[0].mxu0 %v3400
    %v3477 = vpop.f32.mrb[0].mxu0
    %v3478 = vadd.f32 0.0, %v3477
    %v3479 = vpop.f32.mrb[0].mxu0
    %v3480 = vadd.f32 0.0, %v3479
    %v3481 = vpop.f32.mrb[0].mxu0
    %v3482 = vpop.f32.mrb[0].mxu0
    %3483 = vdwg.mxu0
    %v3488 = vrot.slane %v3437, 1
    %v3489 = vrot.slane %v3439, 1
    %v3490 = vrot.slane %v3478, 1
    %v3491 = vrot.slane %v3480, 1
    %v3492 = vrot.slane %v3437, 2
    %v3493 = vrot.slane %v3439, 2
    %v3494 = vrot.slane %v3478, 2
    %v3495 = vrot.slane %v3480, 2
    %v3496 = vrot.slane %v3437, 3
    %v3497 = vrot.slane %v3439, 3
    %v3498 = vrot.slane %v3478, 3
    %v3499 = vrot.slane %v3480, 3
    %v3500 = vrot.slane %v3437, 4
    %v3501 = vrot.slane %v3439, 4
    %v3502 = vrot.slane %v3478, 4
    %v3503 = vrot.slane %v3480, 4
    %v3504 = vrot.slane %v3437, 5
    %v3505 = vrot.slane %v3439, 5
    %v3506 = vrot.slane %v3478, 5
    %v3507 = vrot.slane %v3480, 5
    %v3508 = vrot.slane %v3437, 6
    %v3509 = vrot.slane %v3439, 6
    %v3510 = vrot.slane %v3478, 6
    %v3511 = vrot.slane %v3480, 6
    %v3512 = vrot.slane %v3437, 7
    %v3513 = vrot.slane %v3439, 7
    %v3514 = vrot.slane %v3478, 7
    %v3515 = vrot.slane %v3480, 7
    %v3548 = vadd.f32 %v3330, %v3488
    %v3549 = vadd.f32 %v3331, %v3489
    %v3550 = vadd.f32 %v3332, %v3490
    %v3551 = vadd.f32 %v3333, %v3491
    %v3552 = vadd.f32 %v3334, %v3492
    %v3553 = vadd.f32 %v3335, %v3493
    %v3554 = vadd.f32 %v3336, %v3494
    %v3555 = vadd.f32 %v3337, %v3495
    %v3556 = vadd.f32 %v3338, %v3496
    %v3557 = vadd.f32 %v3339, %v3497
    %v3558 = vadd.f32 %v3340, %v3498
    %v3559 = vadd.f32 %v3341, %v3499
    %v3560 = vadd.f32 %v3342, %v3500
    %v3561 = vadd.f32 %v3343, %v3501
    %v3562 = vadd.f32 %v3344, %v3502
    %v3563 = vadd.f32 %v3345, %v3503
    %v3564 = vadd.f32 %v3346, %v3504
    %v3565 = vadd.f32 %v3347, %v3505
    %v3566 = vadd.f32 %v3348, %v3506
    %v3567 = vadd.f32 %v3349, %v3507
    %v3568 = vadd.f32 %v3350, %v3508
    %v3569 = vadd.f32 %v3351, %v3509
    %v3570 = vadd.f32 %v3352, %v3510
    %v3571 = vadd.f32 %v3353, %v3511
    %v3572 = vadd.f32 %v3354, %v3512
    %v3573 = vadd.f32 %v3355, %v3513
    %v3574 = vadd.f32 %v3356, %v3514
    %v3575 = vadd.f32 %v3357, %v3515
    %v3576 = vadd.f32 %v3358, %v3437
    %v3577 = vadd.f32 %v3359, %v3439
    %v3578 = vadd.f32 %v3360, %v3478
    %v3579 = vadd.f32 %v3361, %v3480
    %v3580 = vmul.f32 %v3548, 0.5
    %v3581 = vmul.f32 %v3552, 0.5
    %v3582 = vmul.f32 %v3556, 0.5
    %v3583 = vmul.f32 %v3560, 0.5
    %v3584 = vmul.f32 %v3564, 0.5
    %v3585 = vmul.f32 %v3568, 0.5
    %v3586 = vmul.f32 %v3572, 0.5
    %v3587 = vmul.f32 %v3576, 0.5
    %v3588 = vtanh.pop %v3580
    %v3589 = vtanh.pop %v3581
    %v3590 = vtanh.pop %v3582
    %v3591 = vtanh.pop %v3583
    %v3592 = vtanh.pop %v3584
    %v3593 = vtanh.pop %v3585
    %v3594 = vtanh.pop %v3586
    %v3595 = vtanh.pop %v3587
    %v3596 = vadd.f32 %v3588, 1.0
    %v3597 = vadd.f32 %v3589, 1.0
    %v3598 = vadd.f32 %v3590, 1.0
    %v3599 = vadd.f32 %v3591, 1.0
    %v3600 = vadd.f32 %v3592, 1.0
    %v3601 = vadd.f32 %v3593, 1.0
    %v3602 = vadd.f32 %v3594, 1.0
    %v3603 = vadd.f32 %v3595, 1.0
    %v3604 = vmul.f32 %v3596, 0.5
    %v3605 = vmul.f32 %v3597, 0.5
    %v3606 = vmul.f32 %v3598, 0.5
    %v3607 = vmul.f32 %v3599, 0.5
    %v3608 = vmul.f32 %v3600, 0.5
    %v3609 = vmul.f32 %v3601, 0.5
    %v3610 = vmul.f32 %v3602, 0.5
    %v3611 = vmul.f32 %v3603, 0.5
    %v3612 = vmul.f32 %v3549, 0.5
    %v3613 = vmul.f32 %v3553, 0.5
    %v3614 = vmul.f32 %v3557, 0.5
    %v3615 = vmul.f32 %v3561, 0.5
    %v3616 = vmul.f32 %v3565, 0.5
    %v3617 = vmul.f32 %v3569, 0.5
    %v3618 = vmul.f32 %v3573, 0.5
    %v3619 = vmul.f32 %v3577, 0.5
    %v3620 = vtanh.pop %v3612
    %v3621 = vtanh.pop %v3613
    %v3622 = vtanh.pop %v3614
    %v3623 = vtanh.pop %v3615
    %v3624 = vtanh.pop %v3616
    %v3625 = vtanh.pop %v3617
    %v3626 = vtanh.pop %v3618
    %v3627 = vtanh.pop %v3619
    %v3628 = vadd.f32 %v3620, 1.0
    %v3629 = vadd.f32 %v3621, 1.0
    %v3630 = vadd.f32 %v3622, 1.0
    %v3631 = vadd.f32 %v3623, 1.0
    %v3632 = vadd.f32 %v3624, 1.0
    %v3633 = vadd.f32 %v3625, 1.0
    %v3634 = vadd.f32 %v3626, 1.0
    %v3635 = vadd.f32 %v3627, 1.0
    %v3636 = vmul.f32 %v3628, 0.5
    %v3637 = vmul.f32 %v3629, 0.5
    %v3638 = vmul.f32 %v3630, 0.5
    %v3639 = vmul.f32 %v3631, 0.5
    %v3640 = vmul.f32 %v3632, 0.5
    %v3641 = vmul.f32 %v3633, 0.5
    %v3642 = vmul.f32 %v3634, 0.5
    %v3643 = vmul.f32 %v3635, 0.5
    %v3644 = vtanh.pop %v3550
    %v3645 = vtanh.pop %v3554
    %v3646 = vtanh.pop %v3558
    %v3647 = vtanh.pop %v3562
    %v3648 = vtanh.pop %v3566
    %v3649 = vtanh.pop %v3570
    %v3650 = vtanh.pop %v3574
    %v3651 = vtanh.pop %v3578
    %v3652 = vmul.f32 %v3551, 0.5
    %v3653 = vmul.f32 %v3555, 0.5
    %v3654 = vmul.f32 %v3559, 0.5
    %v3655 = vmul.f32 %v3563, 0.5
    %v3656 = vmul.f32 %v3567, 0.5
    %v3657 = vmul.f32 %v3571, 0.5
    %v3658 = vmul.f32 %v3575, 0.5
    %v3659 = vmul.f32 %v3579, 0.5
    %v3660 = vtanh.pop %v3652
    %v3661 = vtanh.pop %v3653
    %v3662 = vtanh.pop %v3654
    %v3663 = vtanh.pop %v3655
    %v3664 = vtanh.pop %v3656
    %v3665 = vtanh.pop %v3657
    %v3666 = vtanh.pop %v3658
    %v3667 = vtanh.pop %v3659
    %v3668 = vadd.f32 %v3660, 1.0
    %v3669 = vadd.f32 %v3661, 1.0
    %v3670 = vadd.f32 %v3662, 1.0
    %v3671 = vadd.f32 %v3663, 1.0
    %v3672 = vadd.f32 %v3664, 1.0
    %v3673 = vadd.f32 %v3665, 1.0
    %v3674 = vadd.f32 %v3666, 1.0
    %v3675 = vadd.f32 %v3667, 1.0
    %v3676 = vmul.f32 %v3668, 0.5
    %v3677 = vmul.f32 %v3669, 0.5
    %v3678 = vmul.f32 %v3670, 0.5
    %v3679 = vmul.f32 %v3671, 0.5
    %v3680 = vmul.f32 %v3672, 0.5
    %v3681 = vmul.f32 %v3673, 0.5
    %v3682 = vmul.f32 %v3674, 0.5
    %v3683 = vmul.f32 %v3675, 0.5
    %v3692 = vrot.slane %v3282, 7
    %v3693 = vrot.slane %v3283, 7
    %v3694 = vrot.slane %v3284, 7
    %v3695 = vrot.slane %v3285, 7
    %v3696 = vrot.slane %v3286, 7
    %v3697 = vrot.slane %v3287, 7
    %v3698 = vrot.slane %v3288, 7
    %v3699 = vrot.slane %v3289, 7
    %v3708 = vmul.f32 %v3636, %v3692
    %v3709 = vmul.f32 %v3637, %v3693
    %v3710 = vmul.f32 %v3638, %v3694
    %v3711 = vmul.f32 %v3639, %v3695
    %v3712 = vmul.f32 %v3640, %v3696
    %v3713 = vmul.f32 %v3641, %v3697
    %v3714 = vmul.f32 %v3642, %v3698
    %v3715 = vmul.f32 %v3643, %v3699
    %v3716 = vmul.f32 %v3604, %v3644
    %v3717 = vmul.f32 %v3605, %v3645
    %v3718 = vmul.f32 %v3606, %v3646
    %v3719 = vmul.f32 %v3607, %v3647
    %v3720 = vmul.f32 %v3608, %v3648
    %v3721 = vmul.f32 %v3609, %v3649
    %v3722 = vmul.f32 %v3610, %v3650
    %v3723 = vmul.f32 %v3611, %v3651
    %v3724 = vadd.f32 %v3708, %v3716
    %v3725 = vadd.f32 %v3709, %v3717
    %v3726 = vadd.f32 %v3710, %v3718
    %v3727 = vadd.f32 %v3711, %v3719
    %v3728 = vadd.f32 %v3712, %v3720
    %v3729 = vadd.f32 %v3713, %v3721
    %v3730 = vadd.f32 %v3714, %v3722
    %v3731 = vadd.f32 %v3715, %v3723
    %v3732 = vtanh.pop %v3724
    %v3733 = vtanh.pop %v3725
    %v3734 = vtanh.pop %v3726
    %v3735 = vtanh.pop %v3727
    %v3736 = vtanh.pop %v3728
    %v3737 = vtanh.pop %v3729
    %v3738 = vtanh.pop %v3730
    %v3739 = vtanh.pop %v3731
    %v3740 = vmul.f32 %v3676, %v3732
    %v3741 = vmul.f32 %v3677, %v3733
    %v3742 = vmul.f32 %v3678, %v3734
    %v3743 = vmul.f32 %v3679, %v3735
    %v3744 = vmul.f32 %v3680, %v3736
    %v3745 = vmul.f32 %v3681, %v3737
    %v3746 = vmul.f32 %v3682, %v3738
    %v3747 = vmul.f32 %v3683, %v3739
    %3748 = vst [vmem:[#allocation10] sm:$0x80] %v3740
    %3749 = vst [vmem:[#allocation10 + $0x8] sm:$0x80] %v3741
    %3750 = vst [vmem:[#allocation10 + $0x10] sm:$0x80] %v3742
    %3751 = vst [vmem:[#allocation10 + $0x18] sm:$0x80] %v3743
    %3752 = vst [vmem:[#allocation10 + $0x20] sm:$0x80] %v3744
    %3753 = vst [vmem:[#allocation10 + $0x28] sm:$0x80] %v3745
    %3754 = vst [vmem:[#allocation10 + $0x30] sm:$0x80] %v3746
    %3755 = vst [vmem:[#allocation10 + $0x38] sm:$0x80] %v3747
    %v3764 = vrot.slane %v3741, 7
    %v3765 = vrot.slane %v3742, 6
    %v3766 = vsel %vm728, %v3765, %v3764
    %v3767 = vrot.slane %v3743, 5
    %v3768 = vsel %vm731, %v3767, %v3766
    %v3769 = vrot.slane %v3744, 4
    %v3770 = vsel %vm734, %v3769, %v3768
    %v3771 = vrot.slane %v3745, 3
    %v3772 = vsel %vm737, %v3771, %v3770
    %v3773 = vrot.slane %v3746, 2
    %v3774 = vsel %vm740, %v3773, %v3772
    %v3775 = vrot.slane %v3747, 1
    %v3776 = vsel %vm743, %v3775, %v3774
    %3779 = vst [vmem:[#allocation2 - $0x7] sm:$0x80] %v3740
    %3780 = vst [vmem:[#allocation2 + $0x1] sm:$0x7f] %v3776
    %v3789 = vrot.slane %v3725, 7
    %v3790 = vrot.slane %v3726, 6
    %v3791 = vsel %vm728, %v3790, %v3789
    %v3792 = vrot.slane %v3727, 5
    %v3793 = vsel %vm731, %v3792, %v3791
    %v3794 = vrot.slane %v3728, 4
    %v3795 = vsel %vm734, %v3794, %v3793
    %v3796 = vrot.slane %v3729, 3
    %v3797 = vsel %vm737, %v3796, %v3795
    %v3798 = vrot.slane %v3730, 2
    %v3799 = vsel %vm740, %v3798, %v3797
    %v3800 = vrot.slane %v3731, 1
    %v3801 = vsel %vm743, %v3800, %v3799
    %3804 = vst [vmem:[#allocation3 - $0x7] sm:$0x80] %v3724
    %3805 = vst [vmem:[#allocation3 + $0x1] sm:$0x7f] %v3801
    // Predicated region
    $region34: #{tpu_custom_call.1} parent=1 // pred_check
      _
    $region35: #{tpu_custom_call.1} parent=1 // pred_check_branch
      %3807 = sbr.rel (0) target = $region37
    $region36: #{tpu_custom_call.1} parent=1 // pred_region
      %s3809 = ssub.s32 1024, 1024
      %3810 = vsyncadd [#allocation6], %s3809
      %s3811 = sshll.u32 [#allocation10], 4
      %s3812 = int_to_ptr.vmem [resolvable:$true] %s3811
      %3817 = dma.vmem_to_hbm [thread:$0]  %s3812, 1024, %s4, [#allocation6], 128, 128, 8
    $region37: #{tpu_custom_call.1} parent=1 // pred_fallthru
      _
    // Predicated region
    $region38: #{tpu_custom_call.1} parent=1 // pred_check
      _
    $region39: #{tpu_custom_call.1} parent=1 // pred_check_branch
      %3819 = sbr.rel (0) target = $region41
    $region40: #{tpu_custom_call.1} parent=1 // pred_region
      %3820 = dma.done [#allocation6], 1024
    $region41: #{tpu_custom_call.1} parent=1 // pred_fallthru
      _
    %3821 = vsyncpa [#allocation5], 1
    %3822 = vsyncpa [#allocation8], 1
    %3823 = vsyncpa [#allocation6], 1

</llo_original>
